<compile_context>
chip_gen: v6e
topology: v6e:2x2x1
jax: 0.10.0
libtpu: 0.0.40
codegen_flags: <defaults>
</compile_context>

<pallas_src>
import functools

import jax
import jax.numpy as jnp
from jax.experimental import pallas as pl
from jax.experimental.pallas import tpu as pltpu


def _encoder_kernel(hs_ref, ks_ref,
                    ln1_g_ref, ln1_b_ref,
                    wq_ref, bq_ref, wk_ref, bk_ref, wv_ref, bv_ref,
                    wo_ref, bo_ref,
                    ln2_g_ref, ln2_b_ref,
                    w1_ref, b1_ref, w2_ref, b2_ref,
                    out_ref, *, num_heads, ln_eps):
    layer = pl.program_id(1)

    # Layer 0: seed the VMEM-resident hidden-state carry from the input tokens.
    @pl.when(layer == 0)
    def _():
        out_ref[...] = hs_ref[...]

    L = out_ref.shape[1]
    D = out_ref.shape[2]
    hd = D // num_heads
    scale = 1.0 / float(hd) ** 0.5
    # Contract the activation's dim 1 with the weight's second axis (its "in"
    # channels) -> weights stay in PyTorch (out, in) layout, MXU does NT matmul.
    dn = (((1,), (1,)), ((), ()))

    def layernorm(v, g, b):
        mu = jnp.mean(v, axis=-1, keepdims=True)
        var = jnp.mean(jnp.square(v - mu), axis=-1, keepdims=True)
        return (v - mu) * jax.lax.rsqrt(var + ln_eps) * g + b

    def linear(v, w_ref, b_ref):
        return jax.lax.dot_general(
            v, w_ref[0], dn, preferred_element_type=jnp.float32) + b_ref[0]

    # Concat hidden tokens (carried in out_ref) with this layer's knowledge source.
    x = jnp.concatenate([out_ref[0], ks_ref[0, 0]], axis=0)          # (S, D)

    # --- attention block (pre-LN) ---
    xn = layernorm(x, ln1_g_ref[0], ln1_b_ref[0])
    q = linear(xn, wq_ref, bq_ref)
    k = linear(xn, wk_ref, bk_ref)
    v = linear(xn, wv_ref, bv_ref)

    wo = wo_ref[0]                                                   # (D, D) (out, in)
    attn = jnp.zeros_like(x)
    for h in range(num_heads):                                       # static unroll
        sl = slice(h * hd, (h + 1) * hd)
        s = jax.lax.dot_general(q[:, sl], k[:, sl], dn,
                                preferred_element_type=jnp.float32) * scale
        s = s - jnp.max(s, axis=-1, keepdims=True)
        e = jnp.exp(s)
        p = e / jnp.sum(e, axis=-1, keepdims=True)
        ctx = jnp.dot(p, v[:, sl], preferred_element_type=jnp.float32)   # (S, hd)
        # Fold this head's slice of the output projection directly in; summing
        # over heads == full ctx @ Wo.T (avoids a lane-dim concatenate).
        attn = attn + jax.lax.dot_general(ctx, wo[:, sl], dn,
                                          preferred_element_type=jnp.float32)
    x = x + attn + bo_ref[0]                                         # residual 1

    # --- MLP block (pre-LN) ---
    xn2 = layernorm(x, ln2_g_ref[0], ln2_b_ref[0])
    hmid = jax.nn.gelu(linear(xn2, w1_ref, b1_ref), approximate=True)
    y = x + linear(hmid, w2_ref, b2_ref)                             # residual 2

    # Keep only the hidden-state tokens; knowledge-source tokens are dropped.
    out_ref[0] = y[:L, :].astype(out_ref.dtype)


def stack_params(layer_params):
    """Stack per-layer PyTorch-layout params with a leading layer axis.

    Biases / LN vectors get an extra unit row so the kernel sees (1, dim)
    blocks.  No transposes — nn.Linear (out, in) layout is kept.
    """
    def stack(name, as_row=False):
        a = jnp.stack([jnp.asarray(p[name], jnp.float32) for p in layer_params], 0)
        if as_row:
            a = a.reshape(a.shape[0], 1, -1)
        return a

    return (
        stack("ln1_g", True), stack("ln1_b", True),
        stack("wq"), stack("bq", True),
        stack("wk"), stack("bk", True),
        stack("wv"), stack("bv", True),
        stack("wo"), stack("bo", True),
        stack("ln2_g", True), stack("ln2_b", True),
        stack("w1"), stack("b1", True),
        stack("w2"), stack("b2", True),
    )


def dpt_multiview_vit_encoder(hidden_states, knowledge_sources, stacked,
                              *, num_heads, ln_eps=1e-12):
    """hidden_states: (B, L, D); knowledge_sources: (num_layers, B, K, D)."""
    B, L, D = hidden_states.shape
    num_layers, _, K, _ = knowledge_sources.shape
    I = stacked[12].shape[1]          # intermediate size (w1 is (layers, I, D))
    assert D % num_heads == 0

    kernel = functools.partial(_encoder_kernel, num_heads=num_heads, ln_eps=ln_eps)

    def wspec(d0, d1):                # per-layer weight block, streamed along l
        return pl.BlockSpec((1, d0, d1), lambda b, l: (l, 0, 0))

    in_specs = [
        pl.BlockSpec((1, L, D), lambda b, l: (b, 0, 0)),          # hidden_states
        pl.BlockSpec((1, 1, K, D), lambda b, l: (l, b, 0, 0)),    # knowledge_sources
        wspec(1, D), wspec(1, D),                                 # ln1 gamma/beta
        wspec(D, D), wspec(1, D),                                 # Wq, bq
        wspec(D, D), wspec(1, D),                                 # Wk, bk
        wspec(D, D), wspec(1, D),                                 # Wv, bv
        wspec(D, D), wspec(1, D),                                 # Wo, bo
        wspec(1, D), wspec(1, D),                                 # ln2 gamma/beta
        wspec(I, D), wspec(1, I),                                 # W1, b1
        wspec(D, I), wspec(1, D),                                 # W2, b2
    ]

    out = pl.pallas_call(
        kernel,
        out_shape=jax.ShapeDtypeStruct((B, L, D), hidden_states.dtype),
        grid_spec=pltpu.PrefetchScalarGridSpec(
            num_scalar_prefetch=0,
            grid=(B, num_layers),
            in_specs=in_specs,
            # Constant block index across the layer axis -> hidden state stays
            # resident in VMEM across all layers for a given sample.
            out_specs=pl.BlockSpec((1, L, D), lambda b, l: (b, 0, 0)),
        ),
        compiler_params=pltpu.CompilerParams(
            dimension_semantics=("parallel", "arbitrary")),
    )(hidden_states, knowledge_sources, *stacked)

    return {
        "last_hidden_state": out,
        "hidden_states": None,
        "attentions": None,
        "knowledge_sources": knowledge_sources,
    }


def _reference(hidden_states, knowledge_sources, layer_params,
               *, num_heads, ln_eps=1e-12):
    """Pure-JAX reference mirroring the PyTorch forward (default flags)."""
    hs = hidden_states
    L = hs.shape[1]

    def ln(v, g, b):
        mu = v.mean(-1, keepdims=True)
        var = ((v - mu) ** 2).mean(-1, keepdims=True)
        return (v - mu) * jax.lax.rsqrt(var + ln_eps) * g + b

    for i, p in enumerate(layer_params):
        x = jnp.concatenate([hs, knowledge_sources[i]], axis=1)     # (B, S, D)
        B, S, D = x.shape
        hd = D // num_heads

        xn = ln(x, p["ln1_g"], p["ln1_b"])
        q = xn @ p["wq"].T + p["bq"]
        k = xn @ p["wk"].T + p["bk"]
        v = xn @ p["wv"].T + p["bv"]
        q = q.reshape(B, S, num_heads, hd).transpose(0, 2, 1, 3)
        k = k.reshape(B, S, num_heads, hd).transpose(0, 2, 1, 3)
        v = v.reshape(B, S, num_heads, hd).transpose(0, 2, 1, 3)
        s = (q @ k.transpose(0, 1, 3, 2)) / jnp.sqrt(jnp.float32(hd))
        a = jax.nn.softmax(s, axis=-1)
        ctx = (a @ v).transpose(0, 2, 1, 3).reshape(B, S, D)
        x = x + (ctx @ p["wo"].T + p["bo"])

        xn2 = ln(x, p["ln2_g"], p["ln2_b"])
        hmid = jax.nn.gelu(xn2 @ p["w1"].T + p["b1"], approximate=True)
        y = x + (hmid @ p["w2"].T + p["b2"])
        hs = y[:, :L]
    return hs


if __name__ == "__main__":
    # Small config consistent with the module (DPTConfig-like):
    num_layers = 2       # config.num_hidden_layers
    D = 32               # hidden_size
    num_heads = 4        # num_attention_heads
    I = 128              # intermediate_size
    B = 2                # batch
    L = 8                # hidden_states sequence length
    K = 8                # knowledge-source tokens appended per layer

    key = jax.random.PRNGKey(0)
    key, k_hs, k_ks, k_w = jax.random.split(key, 4)
    hidden_states = jax.random.normal(k_hs, (B, L, D), dtype=jnp.float32)
    knowledge_sources = 0.5 * jax.random.normal(
        k_ks, (num_layers, B, K, D), dtype=jnp.float32)

    layer_params = []
    for lk in jax.random.split(k_w, num_layers):
        kk = jax.random.split(lk, 16)
        layer_params.append({
            "ln1_g": 1.0 + 0.1 * jax.random.normal(kk[0], (D,), jnp.float32),
            "ln1_b": 0.1 * jax.random.normal(kk[1], (D,), jnp.float32),
            "wq": 0.1 * jax.random.normal(kk[2], (D, D), jnp.float32),
            "bq": 0.05 * jax.random.normal(kk[3], (D,), jnp.float32),
            "wk": 0.1 * jax.random.normal(kk[4], (D, D), jnp.float32),
            "bk": 0.05 * jax.random.normal(kk[5], (D,), jnp.float32),
            "wv": 0.1 * jax.random.normal(kk[6], (D, D), jnp.float32),
            "bv": 0.05 * jax.random.normal(kk[7], (D,), jnp.float32),
            "wo": 0.1 * jax.random.normal(kk[8], (D, D), jnp.float32),
            "bo": 0.05 * jax.random.normal(kk[9], (D,), jnp.float32),
            "ln2_g": 1.0 + 0.1 * jax.random.normal(kk[10], (D,), jnp.float32),
            "ln2_b": 0.1 * jax.random.normal(kk[11], (D,), jnp.float32),
            "w1": 0.1 * jax.random.normal(kk[12], (I, D), jnp.float32),
            "b1": 0.05 * jax.random.normal(kk[13], (I,), jnp.float32),
            "w2": 0.1 * jax.random.normal(kk[14], (D, I), jnp.float32),
            "b2": 0.05 * jax.random.normal(kk[15], (D,), jnp.float32),
        })

    # One-time weight prep (stack per-layer params; no transposes).
    stacked = stack_params(layer_params)

    fwd = jax.jit(functools.partial(dpt_multiview_vit_encoder, num_heads=num_heads))
    out = fwd(hidden_states, knowledge_sources, stacked)
    out = jax.block_until_ready(out)
    last = out["last_hidden_state"]

    ref = _reference(hidden_states, knowledge_sources, layer_params,
                     num_heads=num_heads)
    assert last.shape == (B, L, D)
    assert jnp.allclose(last, ref, atol=1e-4, rtol=1e-4), "mismatch vs JAX reference"

    print("KERNEL_OK")
</pallas_src>

<mosaic_0001>
module attributes {stable_mosaic.version = 11 : i64} {
  func.func @_encoder_kernel(%arg0: i32, %arg1: i32, %arg2: memref<1x8x32xf32, #tpu.memory_space<vmem>>, %arg3: memref<1x1x8x32xf32, #tpu.memory_space<vmem>>, %arg4: memref<1x1x32xf32, #tpu.memory_space<vmem>>, %arg5: memref<1x1x32xf32, #tpu.memory_space<vmem>>, %arg6: memref<1x32x32xf32, #tpu.memory_space<vmem>>, %arg7: memref<1x1x32xf32, #tpu.memory_space<vmem>>, %arg8: memref<1x32x32xf32, #tpu.memory_space<vmem>>, %arg9: memref<1x1x32xf32, #tpu.memory_space<vmem>>, %arg10: memref<1x32x32xf32, #tpu.memory_space<vmem>>, %arg11: memref<1x1x32xf32, #tpu.memory_space<vmem>>, %arg12: memref<1x32x32xf32, #tpu.memory_space<vmem>>, %arg13: memref<1x1x32xf32, #tpu.memory_space<vmem>>, %arg14: memref<1x1x32xf32, #tpu.memory_space<vmem>>, %arg15: memref<1x1x32xf32, #tpu.memory_space<vmem>>, %arg16: memref<1x128x32xf32, #tpu.memory_space<vmem>>, %arg17: memref<1x1x128xf32, #tpu.memory_space<vmem>>, %arg18: memref<1x32x128xf32, #tpu.memory_space<vmem>>, %arg19: memref<1x1x32xf32, #tpu.memory_space<vmem>>, %arg20: memref<1x8x32xf32, #tpu.memory_space<vmem>>) attributes {dimension_semantics = [#tpu.dimension_semantics<parallel>, #tpu.dimension_semantics<arbitrary>], iteration_bounds = array<i64: 2, 2>, scalar_prefetch = 0 : i64, scratch_operands = 0 : i64, tpu.core_type = #tpu.core_type<tc>, window_params = [{transform_indices = @transform_0, window_bounds = array<i64: 1, 8, 32>}, {transform_indices = @transform_1, window_bounds = array<i64: 1, 1, 8, 32>}, {transform_indices = @transform_2, window_bounds = array<i64: 1, 1, 32>}, {transform_indices = @transform_3, window_bounds = array<i64: 1, 1, 32>}, {transform_indices = @transform_4, window_bounds = array<i64: 1, 32, 32>}, {transform_indices = @transform_5, window_bounds = array<i64: 1, 1, 32>}, {transform_indices = @transform_6, window_bounds = array<i64: 1, 32, 32>}, {transform_indices = @transform_7, window_bounds = array<i64: 1, 1, 32>}, {transform_indices = @transform_8, window_bounds = array<i64: 1, 32, 32>}, {transform_indices = @transform_9, window_bounds = array<i64: 1, 1, 32>}, {transform_indices = @transform_10, window_bounds = array<i64: 1, 32, 32>}, {transform_indices = @transform_11, window_bounds = array<i64: 1, 1, 32>}, {transform_indices = @transform_12, window_bounds = array<i64: 1, 1, 32>}, {transform_indices = @transform_13, window_bounds = array<i64: 1, 1, 32>}, {transform_indices = @transform_14, window_bounds = array<i64: 1, 128, 32>}, {transform_indices = @transform_15, window_bounds = array<i64: 1, 1, 128>}, {transform_indices = @transform_16, window_bounds = array<i64: 1, 32, 128>}, {transform_indices = @transform_17, window_bounds = array<i64: 1, 1, 32>}, {transform_indices = @transform_18, window_bounds = array<i64: 1, 8, 32>}]} {
    %c0_i32 = arith.constant 0 : i32
    %0 = arith.cmpi eq, %arg1, %c0_i32 : i32
    %1 = arith.extui %0 : i1 to i32
    %c0_i32_0 = arith.constant 0 : i32
    %2 = arith.cmpi ne, %1, %c0_i32_0 : i32
    scf.if %2 {
      %c0_101 = arith.constant 0 : index
      %c0_102 = arith.constant 0 : index
      %c0_103 = arith.constant 0 : index
      %197 = vector.load %arg2[%c0_101, %c0_102, %c0_103] : memref<1x8x32xf32, #tpu.memory_space<vmem>>, vector<1x8x32xf32>
      %c0_104 = arith.constant 0 : index
      %c0_105 = arith.constant 0 : index
      %c0_106 = arith.constant 0 : index
      %198 = vector.load %arg20[%c0_104, %c0_105, %c0_106] : memref<1x8x32xf32, #tpu.memory_space<vmem>>, vector<1x8x32xf32>
      tpu.vector_store %arg20[%c0_104, %c0_105, %c0_106], %197 {strides = array<i32>} : memref<1x8x32xf32, #tpu.memory_space<vmem>>, vector<1x8x32xf32>,
    } else {
    }
    %c0 = arith.constant 0 : index
    %c0_1 = arith.constant 0 : index
    %c0_2 = arith.constant 0 : index
    %3 = vector.load %arg20[%c0, %c0_1, %c0_2] : memref<1x8x32xf32, #tpu.memory_space<vmem>>, vector<1x8x32xf32>
    %4 = vector.shape_cast %3 : vector<1x8x32xf32> to vector<8x32xf32>
    %c0_3 = arith.constant 0 : index
    %c0_4 = arith.constant 0 : index
    %c0_5 = arith.constant 0 : index
    %c0_6 = arith.constant 0 : index
    %5 = vector.load %arg3[%c0_3, %c0_4, %c0_5, %c0_6] : memref<1x1x8x32xf32, #tpu.memory_space<vmem>>, vector<1x1x8x32xf32>
    %6 = vector.shape_cast %5 : vector<1x1x8x32xf32> to vector<8x32xf32>
    %7 = tpu.concatenate %4, %6 in 0 : vector<8x32xf32>, vector<8x32xf32> -> vector<16x32xf32>
    %c0_7 = arith.constant 0 : index
    %c0_8 = arith.constant 0 : index
    %c0_9 = arith.constant 0 : index
    %8 = vector.load %arg4[%c0_7, %c0_8, %c0_9] : memref<1x1x32xf32, #tpu.memory_space<vmem>>, vector<1x1x32xf32>
    %9 = vector.shape_cast %8 : vector<1x1x32xf32> to vector<1x32xf32>
    %c0_10 = arith.constant 0 : index
    %c0_11 = arith.constant 0 : index
    %c0_12 = arith.constant 0 : index
    %10 = vector.load %arg5[%c0_10, %c0_11, %c0_12] : memref<1x1x32xf32, #tpu.memory_space<vmem>>, vector<1x1x32xf32>
    %11 = vector.shape_cast %10 : vector<1x1x32xf32> to vector<1x32xf32>
    %cst = arith.constant dense<0.000000e+00> : vector<16xf32>
    %12 = vector.multi_reduction <add>, %7, %cst [1] : vector<16x32xf32> to vector<16xf32>
    %13 = vector.shape_cast %12 : vector<16xf32> to vector<16x1xf32>
    %cst_13 = arith.constant 3.200000e+01 : f32
    %14 = vector.broadcast %cst_13 : f32 to vector<16x1xf32>
    %15 = arith.divf %13, %14 : vector<16x1xf32>
    %16 = vector.broadcast %15 : vector<16x1xf32> to vector<16x32xf32>
    %17 = arith.subf %7, %16 : vector<16x32xf32>
    %18 = arith.mulf %17, %17 : vector<16x32xf32>
    %cst_14 = arith.constant dense<0.000000e+00> : vector<16xf32>
    %19 = vector.multi_reduction <add>, %18, %cst_14 [1] : vector<16x32xf32> to vector<16xf32>
    %20 = vector.shape_cast %19 : vector<16xf32> to vector<16x1xf32>
    %cst_15 = arith.constant 3.200000e+01 : f32
    %21 = vector.broadcast %cst_15 : f32 to vector<16x1xf32>
    %22 = arith.divf %20, %21 : vector<16x1xf32>
    %23 = vector.broadcast %15 : vector<16x1xf32> to vector<16x32xf32>
    %24 = arith.subf %7, %23 : vector<16x32xf32>
    %cst_16 = arith.constant 9.99999996E-13 : f32
    %25 = vector.broadcast %cst_16 : f32 to vector<16x1xf32>
    %26 = arith.addf %22, %25 : vector<16x1xf32>
    %27 = math.rsqrt %26 : vector<16x1xf32>
    %28 = vector.broadcast %27 : vector<16x1xf32> to vector<16x32xf32>
    %29 = arith.mulf %24, %28 : vector<16x32xf32>
    %30 = vector.broadcast %9 : vector<1x32xf32> to vector<16x32xf32>
    %31 = arith.mulf %29, %30 : vector<16x32xf32>
    %32 = vector.broadcast %11 : vector<1x32xf32> to vector<16x32xf32>
    %33 = arith.addf %31, %32 : vector<16x32xf32>
    %c0_17 = arith.constant 0 : index
    %c0_18 = arith.constant 0 : index
    %c0_19 = arith.constant 0 : index
    %34 = vector.load %arg6[%c0_17, %c0_18, %c0_19] : memref<1x32x32xf32, #tpu.memory_space<vmem>>, vector<1x32x32xf32>
    %35 = vector.shape_cast %34 : vector<1x32x32xf32> to vector<32x32xf32>
    %cst_20 = arith.constant dense<0.000000e+00> : vector<16x32xf32>
    %36 = tpu.matmul %33, %35, %cst_20 {dimension_numbers = #tpu.dot_dimension_numbers<[1], [1], [0], [0], [0, 0, 1, 0], [], []>} : vector<16x32xf32>, vector<32x32xf32>, vector<16x32xf32> -> vector<16x32xf32>
    %c0_21 = arith.constant 0 : index
    %c0_22 = arith.constant 0 : index
    %c0_23 = arith.constant 0 : index
    %37 = vector.load %arg7[%c0_21, %c0_22, %c0_23] : memref<1x1x32xf32, #tpu.memory_space<vmem>>, vector<1x1x32xf32>
    %38 = vector.shape_cast %37 : vector<1x1x32xf32> to vector<1x32xf32>
    %39 = vector.broadcast %38 : vector<1x32xf32> to vector<16x32xf32>
    %40 = arith.addf %36, %39 : vector<16x32xf32>
    %c0_24 = arith.constant 0 : index
    %c0_25 = arith.constant 0 : index
    %c0_26 = arith.constant 0 : index
    %41 = vector.load %arg8[%c0_24, %c0_25, %c0_26] : memref<1x32x32xf32, #tpu.memory_space<vmem>>, vector<1x32x32xf32>
    %42 = vector.shape_cast %41 : vector<1x32x32xf32> to vector<32x32xf32>
    %cst_27 = arith.constant dense<0.000000e+00> : vector<16x32xf32>
    %43 = tpu.matmul %33, %42, %cst_27 {dimension_numbers = #tpu.dot_dimension_numbers<[1], [1], [0], [0], [0, 0, 1, 0], [], []>} : vector<16x32xf32>, vector<32x32xf32>, vector<16x32xf32> -> vector<16x32xf32>
    %c0_28 = arith.constant 0 : index
    %c0_29 = arith.constant 0 : index
    %c0_30 = arith.constant 0 : index
    %44 = vector.load %arg9[%c0_28, %c0_29, %c0_30] : memref<1x1x32xf32, #tpu.memory_space<vmem>>, vector<1x1x32xf32>
    %45 = vector.shape_cast %44 : vector<1x1x32xf32> to vector<1x32xf32>
    %46 = vector.broadcast %45 : vector<1x32xf32> to vector<16x32xf32>
    %47 = arith.addf %43, %46 : vector<16x32xf32>
    %c0_31 = arith.constant 0 : index
    %c0_32 = arith.constant 0 : index
    %c0_33 = arith.constant 0 : index
    %48 = vector.load %arg10[%c0_31, %c0_32, %c0_33] : memref<1x32x32xf32, #tpu.memory_space<vmem>>, vector<1x32x32xf32>
    %49 = vector.shape_cast %48 : vector<1x32x32xf32> to vector<32x32xf32>
    %cst_34 = arith.constant dense<0.000000e+00> : vector<16x32xf32>
    %50 = tpu.matmul %33, %49, %cst_34 {dimension_numbers = #tpu.dot_dimension_numbers<[1], [1], [0], [0], [0, 0, 1, 0], [], []>} : vector<16x32xf32>, vector<32x32xf32>, vector<16x32xf32> -> vector<16x32xf32>
    %c0_35 = arith.constant 0 : index
    %c0_36 = arith.constant 0 : index
    %c0_37 = arith.constant 0 : index
    %51 = vector.load %arg11[%c0_35, %c0_36, %c0_37] : memref<1x1x32xf32, #tpu.memory_space<vmem>>, vector<1x1x32xf32>
    %52 = vector.shape_cast %51 : vector<1x1x32xf32> to vector<1x32xf32>
    %53 = vector.broadcast %52 : vector<1x32xf32> to vector<16x32xf32>
    %54 = arith.addf %50, %53 : vector<16x32xf32>
    %c0_38 = arith.constant 0 : index
    %c0_39 = arith.constant 0 : index
    %c0_40 = arith.constant 0 : index
    %55 = vector.load %arg12[%c0_38, %c0_39, %c0_40] : memref<1x32x32xf32, #tpu.memory_space<vmem>>, vector<1x32x32xf32>
    %56 = vector.shape_cast %55 : vector<1x32x32xf32> to vector<32x32xf32>
    %cst_41 = arith.constant 0.000000e+00 : f32
    %57 = vector.broadcast %cst_41 : f32 to vector<16x32xf32>
    %58 = vector.extract_strided_slice %40 {offsets = [0, 0], sizes = [16, 8], strides = [1, 1]} : vector<16x32xf32> to vector<16x8xf32>
    %59 = vector.extract_strided_slice %47 {offsets = [0, 0], sizes = [16, 8], strides = [1, 1]} : vector<16x32xf32> to vector<16x8xf32>
    %cst_42 = arith.constant dense<0.000000e+00> : vector<16x16xf32>
    %60 = tpu.matmul %58, %59, %cst_42 {dimension_numbers = #tpu.dot_dimension_numbers<[1], [1], [0], [0], [0, 0, 1, 0], [], []>} : vector<16x8xf32>, vector<16x8xf32>, vector<16x16xf32> -> vector<16x16xf32>
    %cst_43 = arith.constant 0.353553385 : f32
    %61 = vector.broadcast %cst_43 : f32 to vector<16x16xf32>
    %62 = arith.mulf %60, %61 : vector<16x16xf32>
    %cst_44 = arith.constant dense<0xFF800000> : vector<16xf32>
    %63 = vector.multi_reduction <maximumf>, %62, %cst_44 [1] : vector<16x16xf32> to vector<16xf32>
    %64 = vector.shape_cast %63 : vector<16xf32> to vector<16x1xf32>
    %65 = vector.broadcast %64 : vector<16x1xf32> to vector<16x16xf32>
    %66 = arith.subf %62, %65 : vector<16x16xf32>
    %67 = math.exp %66 : vector<16x16xf32>
    %cst_45 = arith.constant dense<0.000000e+00> : vector<16xf32>
    %68 = vector.multi_reduction <add>, %67, %cst_45 [1] : vector<16x16xf32> to vector<16xf32>
    %69 = vector.shape_cast %68 : vector<16xf32> to vector<16x1xf32>
    %70 = vector.broadcast %69 : vector<16x1xf32> to vector<16x16xf32>
    %71 = arith.divf %67, %70 : vector<16x16xf32>
    %72 = vector.extract_strided_slice %54 {offsets = [0, 0], sizes = [16, 8], strides = [1, 1]} : vector<16x32xf32> to vector<16x8xf32>
    %cst_46 = arith.constant dense<0.000000e+00> : vector<16x8xf32>
    %73 = tpu.matmul %71, %72, %cst_46 {dimension_numbers = #tpu.dot_dimension_numbers<[1], [0], [0], [1], [0, 0, 1, 1], [], []>} : vector<16x16xf32>, vector<16x8xf32>, vector<16x8xf32> -> vector<16x8xf32>
    %74 = vector.extract_strided_slice %56 {offsets = [0, 0], sizes = [32, 8], strides = [1, 1]} : vector<32x32xf32> to vector<32x8xf32>
    %cst_47 = arith.constant dense<0.000000e+00> : vector<16x32xf32>
    %75 = tpu.matmul %73, %74, %cst_47 {dimension_numbers = #tpu.dot_dimension_numbers<[1], [1], [0], [0], [0, 0, 1, 0], [], []>} : vector<16x8xf32>, vector<32x8xf32>, vector<16x32xf32> -> vector<16x32xf32>
    %76 = arith.addf %57, %75 : vector<16x32xf32>
    %77 = vector.extract_strided_slice %40 {offsets = [0, 8], sizes = [16, 8], strides = [1, 1]} : vector<16x32xf32> to vector<16x8xf32>
    %78 = vector.extract_strided_slice %47 {offsets = [0, 8], sizes = [16, 8], strides = [1, 1]} : vector<16x32xf32> to vector<16x8xf32>
    %cst_48 = arith.constant dense<0.000000e+00> : vector<16x16xf32>
    %79 = tpu.matmul %77, %78, %cst_48 {dimension_numbers = #tpu.dot_dimension_numbers<[1], [1], [0], [0], [0, 0, 1, 0], [], []>} : vector<16x8xf32>, vector<16x8xf32>, vector<16x16xf32> -> vector<16x16xf32>
    %cst_49 = arith.constant 0.353553385 : f32
    %80 = vector.broadcast %cst_49 : f32 to vector<16x16xf32>
    %81 = arith.mulf %79, %80 : vector<16x16xf32>
    %cst_50 = arith.constant dense<0xFF800000> : vector<16xf32>
    %82 = vector.multi_reduction <maximumf>, %81, %cst_50 [1] : vector<16x16xf32> to vector<16xf32>
    %83 = vector.shape_cast %82 : vector<16xf32> to vector<16x1xf32>
    %84 = vector.broadcast %83 : vector<16x1xf32> to vector<16x16xf32>
    %85 = arith.subf %81, %84 : vector<16x16xf32>
    %86 = math.exp %85 : vector<16x16xf32>
    %cst_51 = arith.constant dense<0.000000e+00> : vector<16xf32>
    %87 = vector.multi_reduction <add>, %86, %cst_51 [1] : vector<16x16xf32> to vector<16xf32>
    %88 = vector.shape_cast %87 : vector<16xf32> to vector<16x1xf32>
    %89 = vector.broadcast %88 : vector<16x1xf32> to vector<16x16xf32>
    %90 = arith.divf %86, %89 : vector<16x16xf32>
    %91 = vector.extract_strided_slice %54 {offsets = [0, 8], sizes = [16, 8], strides = [1, 1]} : vector<16x32xf32> to vector<16x8xf32>
    %cst_52 = arith.constant dense<0.000000e+00> : vector<16x8xf32>
    %92 = tpu.matmul %90, %91, %cst_52 {dimension_numbers = #tpu.dot_dimension_numbers<[1], [0], [0], [1], [0, 0, 1, 1], [], []>} : vector<16x16xf32>, vector<16x8xf32>, vector<16x8xf32> -> vector<16x8xf32>
    %93 = vector.extract_strided_slice %56 {offsets = [0, 8], sizes = [32, 8], strides = [1, 1]} : vector<32x32xf32> to vector<32x8xf32>
    %cst_53 = arith.constant dense<0.000000e+00> : vector<16x32xf32>
    %94 = tpu.matmul %92, %93, %cst_53 {dimension_numbers = #tpu.dot_dimension_numbers<[1], [1], [0], [0], [0, 0, 1, 0], [], []>} : vector<16x8xf32>, vector<32x8xf32>, vector<16x32xf32> -> vector<16x32xf32>
    %95 = arith.addf %76, %94 : vector<16x32xf32>
    %96 = vector.extract_strided_slice %40 {offsets = [0, 16], sizes = [16, 8], strides = [1, 1]} : vector<16x32xf32> to vector<16x8xf32>
    %97 = vector.extract_strided_slice %47 {offsets = [0, 16], sizes = [16, 8], strides = [1, 1]} : vector<16x32xf32> to vector<16x8xf32>
    %cst_54 = arith.constant dense<0.000000e+00> : vector<16x16xf32>
    %98 = tpu.matmul %96, %97, %cst_54 {dimension_numbers = #tpu.dot_dimension_numbers<[1], [1], [0], [0], [0, 0, 1, 0], [], []>} : vector<16x8xf32>, vector<16x8xf32>, vector<16x16xf32> -> vector<16x16xf32>
    %cst_55 = arith.constant 0.353553385 : f32
    %99 = vector.broadcast %cst_55 : f32 to vector<16x16xf32>
    %100 = arith.mulf %98, %99 : vector<16x16xf32>
    %cst_56 = arith.constant dense<0xFF800000> : vector<16xf32>
    %101 = vector.multi_reduction <maximumf>, %100, %cst_56 [1] : vector<16x16xf32> to vector<16xf32>
    %102 = vector.shape_cast %101 : vector<16xf32> to vector<16x1xf32>
    %103 = vector.broadcast %102 : vector<16x1xf32> to vector<16x16xf32>
    %104 = arith.subf %100, %103 : vector<16x16xf32>
    %105 = math.exp %104 : vector<16x16xf32>
    %cst_57 = arith.constant dense<0.000000e+00> : vector<16xf32>
    %106 = vector.multi_reduction <add>, %105, %cst_57 [1] : vector<16x16xf32> to vector<16xf32>
    %107 = vector.shape_cast %106 : vector<16xf32> to vector<16x1xf32>
    %108 = vector.broadcast %107 : vector<16x1xf32> to vector<16x16xf32>
    %109 = arith.divf %105, %108 : vector<16x16xf32>
    %110 = vector.extract_strided_slice %54 {offsets = [0, 16], sizes = [16, 8], strides = [1, 1]} : vector<16x32xf32> to vector<16x8xf32>
    %cst_58 = arith.constant dense<0.000000e+00> : vector<16x8xf32>
    %111 = tpu.matmul %109, %110, %cst_58 {dimension_numbers = #tpu.dot_dimension_numbers<[1], [0], [0], [1], [0, 0, 1, 1], [], []>} : vector<16x16xf32>, vector<16x8xf32>, vector<16x8xf32> -> vector<16x8xf32>
    %112 = vector.extract_strided_slice %56 {offsets = [0, 16], sizes = [32, 8], strides = [1, 1]} : vector<32x32xf32> to vector<32x8xf32>
    %cst_59 = arith.constant dense<0.000000e+00> : vector<16x32xf32>
    %113 = tpu.matmul %111, %112, %cst_59 {dimension_numbers = #tpu.dot_dimension_numbers<[1], [1], [0], [0], [0, 0, 1, 0], [], []>} : vector<16x8xf32>, vector<32x8xf32>, vector<16x32xf32> -> vector<16x32xf32>
    %114 = arith.addf %95, %113 : vector<16x32xf32>
    %115 = vector.extract_strided_slice %40 {offsets = [0, 24], sizes = [16, 8], strides = [1, 1]} : vector<16x32xf32> to vector<16x8xf32>
    %116 = vector.extract_strided_slice %47 {offsets = [0, 24], sizes = [16, 8], strides = [1, 1]} : vector<16x32xf32> to vector<16x8xf32>
    %cst_60 = arith.constant dense<0.000000e+00> : vector<16x16xf32>
    %117 = tpu.matmul %115, %116, %cst_60 {dimension_numbers = #tpu.dot_dimension_numbers<[1], [1], [0], [0], [0, 0, 1, 0], [], []>} : vector<16x8xf32>, vector<16x8xf32>, vector<16x16xf32> -> vector<16x16xf32>
    %cst_61 = arith.constant 0.353553385 : f32
    %118 = vector.broadcast %cst_61 : f32 to vector<16x16xf32>
    %119 = arith.mulf %117, %118 : vector<16x16xf32>
    %cst_62 = arith.constant dense<0xFF800000> : vector<16xf32>
    %120 = vector.multi_reduction <maximumf>, %119, %cst_62 [1] : vector<16x16xf32> to vector<16xf32>
    %121 = vector.shape_cast %120 : vector<16xf32> to vector<16x1xf32>
    %122 = vector.broadcast %121 : vector<16x1xf32> to vector<16x16xf32>
    %123 = arith.subf %119, %122 : vector<16x16xf32>
    %124 = math.exp %123 : vector<16x16xf32>
    %cst_63 = arith.constant dense<0.000000e+00> : vector<16xf32>
    %125 = vector.multi_reduction <add>, %124, %cst_63 [1] : vector<16x16xf32> to vector<16xf32>
    %126 = vector.shape_cast %125 : vector<16xf32> to vector<16x1xf32>
    %127 = vector.broadcast %126 : vector<16x1xf32> to vector<16x16xf32>
    %128 = arith.divf %124, %127 : vector<16x16xf32>
    %129 = vector.extract_strided_slice %54 {offsets = [0, 24], sizes = [16, 8], strides = [1, 1]} : vector<16x32xf32> to vector<16x8xf32>
    %cst_64 = arith.constant dense<0.000000e+00> : vector<16x8xf32>
    %130 = tpu.matmul %128, %129, %cst_64 {dimension_numbers = #tpu.dot_dimension_numbers<[1], [0], [0], [1], [0, 0, 1, 1], [], []>} : vector<16x16xf32>, vector<16x8xf32>, vector<16x8xf32> -> vector<16x8xf32>
    %131 = vector.extract_strided_slice %56 {offsets = [0, 24], sizes = [32, 8], strides = [1, 1]} : vector<32x32xf32> to vector<32x8xf32>
    %cst_65 = arith.constant dense<0.000000e+00> : vector<16x32xf32>
    %132 = tpu.matmul %130, %131, %cst_65 {dimension_numbers = #tpu.dot_dimension_numbers<[1], [1], [0], [0], [0, 0, 1, 0], [], []>} : vector<16x8xf32>, vector<32x8xf32>, vector<16x32xf32> -> vector<16x32xf32>
    %133 = arith.addf %114, %132 : vector<16x32xf32>
    %134 = arith.addf %7, %133 : vector<16x32xf32>
    %c0_66 = arith.constant 0 : index
    %c0_67 = arith.constant 0 : index
    %c0_68 = arith.constant 0 : index
    %135 = vector.load %arg13[%c0_66, %c0_67, %c0_68] : memref<1x1x32xf32, #tpu.memory_space<vmem>>, vector<1x1x32xf32>
    %136 = vector.shape_cast %135 : vector<1x1x32xf32> to vector<1x32xf32>
    %137 = vector.broadcast %136 : vector<1x32xf32> to vector<16x32xf32>
    %138 = arith.addf %134, %137 : vector<16x32xf32>
    %c0_69 = arith.constant 0 : index
    %c0_70 = arith.constant 0 : index
    %c0_71 = arith.constant 0 : index
    %139 = vector.load %arg14[%c0_69, %c0_70, %c0_71] : memref<1x1x32xf32, #tpu.memory_space<vmem>>, vector<1x1x32xf32>
    %140 = vector.shape_cast %139 : vector<1x1x32xf32> to vector<1x32xf32>
    %c0_72 = arith.constant 0 : index
    %c0_73 = arith.constant 0 : index
    %c0_74 = arith.constant 0 : index
    %141 = vector.load %arg15[%c0_72, %c0_73, %c0_74] : memref<1x1x32xf32, #tpu.memory_space<vmem>>, vector<1x1x32xf32>
    %142 = vector.shape_cast %141 : vector<1x1x32xf32> to vector<1x32xf32>
    %cst_75 = arith.constant dense<0.000000e+00> : vector<16xf32>
    %143 = vector.multi_reduction <add>, %138, %cst_75 [1] : vector<16x32xf32> to vector<16xf32>
    %144 = vector.shape_cast %143 : vector<16xf32> to vector<16x1xf32>
    %cst_76 = arith.constant 3.200000e+01 : f32
    %145 = vector.broadcast %cst_76 : f32 to vector<16x1xf32>
    %146 = arith.divf %144, %145 : vector<16x1xf32>
    %147 = vector.broadcast %146 : vector<16x1xf32> to vector<16x32xf32>
    %148 = arith.subf %138, %147 : vector<16x32xf32>
    %149 = arith.mulf %148, %148 : vector<16x32xf32>
    %cst_77 = arith.constant dense<0.000000e+00> : vector<16xf32>
    %150 = vector.multi_reduction <add>, %149, %cst_77 [1] : vector<16x32xf32> to vector<16xf32>
    %151 = vector.shape_cast %150 : vector<16xf32> to vector<16x1xf32>
    %cst_78 = arith.constant 3.200000e+01 : f32
    %152 = vector.broadcast %cst_78 : f32 to vector<16x1xf32>
    %153 = arith.divf %151, %152 : vector<16x1xf32>
    %154 = vector.broadcast %146 : vector<16x1xf32> to vector<16x32xf32>
    %155 = arith.subf %138, %154 : vector<16x32xf32>
    %cst_79 = arith.constant 9.99999996E-13 : f32
    %156 = vector.broadcast %cst_79 : f32 to vector<16x1xf32>
    %157 = arith.addf %153, %156 : vector<16x1xf32>
    %158 = math.rsqrt %157 : vector<16x1xf32>
    %159 = vector.broadcast %158 : vector<16x1xf32> to vector<16x32xf32>
    %160 = arith.mulf %155, %159 : vector<16x32xf32>
    %161 = vector.broadcast %140 : vector<1x32xf32> to vector<16x32xf32>
    %162 = arith.mulf %160, %161 : vector<16x32xf32>
    %163 = vector.broadcast %142 : vector<1x32xf32> to vector<16x32xf32>
    %164 = arith.addf %162, %163 : vector<16x32xf32>
    %c0_80 = arith.constant 0 : index
    %c0_81 = arith.constant 0 : index
    %c0_82 = arith.constant 0 : index
    %165 = vector.load %arg16[%c0_80, %c0_81, %c0_82] : memref<1x128x32xf32, #tpu.memory_space<vmem>>, vector<1x128x32xf32>
    %166 = vector.shape_cast %165 : vector<1x128x32xf32> to vector<128x32xf32>
    %cst_83 = arith.constant dense<0.000000e+00> : vector<16x128xf32>
    %167 = tpu.matmul %164, %166, %cst_83 {dimension_numbers = #tpu.dot_dimension_numbers<[1], [1], [0], [0], [0, 0, 1, 0], [], []>} : vector<16x32xf32>, vector<128x32xf32>, vector<16x128xf32> -> vector<16x128xf32>
    %c0_84 = arith.constant 0 : index
    %c0_85 = arith.constant 0 : index
    %c0_86 = arith.constant 0 : index
    %168 = vector.load %arg17[%c0_84, %c0_85, %c0_86] : memref<1x1x128xf32, #tpu.memory_space<vmem>>, vector<1x1x128xf32>
    %169 = vector.shape_cast %168 : vector<1x1x128xf32> to vector<1x128xf32>
    %170 = vector.broadcast %169 : vector<1x128xf32> to vector<16x128xf32>
    %171 = arith.addf %167, %170 : vector<16x128xf32>
    %172 = arith.mulf %171, %171 : vector<16x128xf32>
    %173 = arith.mulf %171, %172 : vector<16x128xf32>
    %cst_87 = arith.constant 4.471500e-02 : f32
    %174 = vector.broadcast %cst_87 : f32 to vector<16x128xf32>
    %175 = arith.mulf %174, %173 : vector<16x128xf32>
    %176 = arith.addf %171, %175 : vector<16x128xf32>
    %cst_88 = arith.constant 0.797884583 : f32
    %177 = vector.broadcast %cst_88 : f32 to vector<16x128xf32>
    %178 = arith.mulf %177, %176 : vector<16x128xf32>
    %179 = math.tanh %178 : vector<16x128xf32>
    %cst_89 = arith.constant 1.000000e+00 : f32
    %180 = vector.broadcast %cst_89 : f32 to vector<16x128xf32>
    %181 = arith.addf %180, %179 : vector<16x128xf32>
    %cst_90 = arith.constant 5.000000e-01 : f32
    %182 = vector.broadcast %cst_90 : f32 to vector<16x128xf32>
    %183 = arith.mulf %182, %181 : vector<16x128xf32>
    %184 = arith.mulf %171, %183 : vector<16x128xf32>
    %c0_91 = arith.constant 0 : index
    %c0_92 = arith.constant 0 : index
    %c0_93 = arith.constant 0 : index
    %185 = vector.load %arg18[%c0_91, %c0_92, %c0_93] : memref<1x32x128xf32, #tpu.memory_space<vmem>>, vector<1x32x128xf32>
    %186 = vector.shape_cast %185 : vector<1x32x128xf32> to vector<32x128xf32>
    %cst_94 = arith.constant dense<0.000000e+00> : vector<16x32xf32>
    %187 = tpu.matmul %184, %186, %cst_94 {dimension_numbers = #tpu.dot_dimension_numbers<[1], [1], [0], [0], [0, 0, 1, 0], [], []>} : vector<16x128xf32>, vector<32x128xf32>, vector<16x32xf32> -> vector<16x32xf32>
    %c0_95 = arith.constant 0 : index
    %c0_96 = arith.constant 0 : index
    %c0_97 = arith.constant 0 : index
    %188 = vector.load %arg19[%c0_95, %c0_96, %c0_97] : memref<1x1x32xf32, #tpu.memory_space<vmem>>, vector<1x1x32xf32>
    %189 = vector.shape_cast %188 : vector<1x1x32xf32> to vector<1x32xf32>
    %190 = vector.broadcast %189 : vector<1x32xf32> to vector<16x32xf32>
    %191 = arith.addf %187, %190 : vector<16x32xf32>
    %192 = arith.addf %138, %191 : vector<16x32xf32>
    %193 = vector.extract_strided_slice %192 {offsets = [0, 0], sizes = [8, 32], strides = [1, 1]} : vector<16x32xf32> to vector<8x32xf32>
    %c0_98 = arith.constant 0 : index
    %c0_99 = arith.constant 0 : index
    %c0_100 = arith.constant 0 : index
    %194 = vector.load %arg20[%c0_98, %c0_99, %c0_100] : memref<1x8x32xf32, #tpu.memory_space<vmem>>, vector<1x8x32xf32>
    %195 = vector.shape_cast %194 : vector<1x8x32xf32> to vector<8x32xf32>
    %196 = vector.shape_cast %193 : vector<8x32xf32> to vector<1x8x32xf32>
    tpu.vector_store %arg20[%c0_98, %c0_99, %c0_100], %196 {strides = array<i32>} : memref<1x8x32xf32, #tpu.memory_space<vmem>>, vector<1x8x32xf32>,
    return
  }
  func.func @transform_0(%arg0: i32, %arg1: i32) -> (i32, i32, i32) {
    %c0_i32 = arith.constant 0 : i32
    %c0_i32_0 = arith.constant 0 : i32
    %c0_i32_1 = arith.constant 0 : i32
    return %arg0, %c0_i32, %c0_i32_0 : i32, i32, i32
  }
  func.func @transform_1(%arg0: i32, %arg1: i32) -> (i32, i32, i32, i32) {
    %c0_i32 = arith.constant 0 : i32
    %c0_i32_0 = arith.constant 0 : i32
    %c0_i32_1 = arith.constant 0 : i32
    return %arg1, %arg0, %c0_i32, %c0_i32_0 : i32, i32, i32, i32
  }
  func.func @transform_2(%arg0: i32, %arg1: i32) -> (i32, i32, i32) {
    %c0_i32 = arith.constant 0 : i32
    %c0_i32_0 = arith.constant 0 : i32
    %c0_i32_1 = arith.constant 0 : i32
    return %arg1, %c0_i32, %c0_i32_0 : i32, i32, i32
  }
  func.func @transform_3(%arg0: i32, %arg1: i32) -> (i32, i32, i32) {
    %c0_i32 = arith.constant 0 : i32
    %c0_i32_0 = arith.constant 0 : i32
    %c0_i32_1 = arith.constant 0 : i32
    return %arg1, %c0_i32, %c0_i32_0 : i32, i32, i32
  }
  func.func @transform_4(%arg0: i32, %arg1: i32) -> (i32, i32, i32) {
    %c0_i32 = arith.constant 0 : i32
    %c0_i32_0 = arith.constant 0 : i32
    %c0_i32_1 = arith.constant 0 : i32
    return %arg1, %c0_i32, %c0_i32_0 : i32, i32, i32
  }
  func.func @transform_5(%arg0: i32, %arg1: i32) -> (i32, i32, i32) {
    %c0_i32 = arith.constant 0 : i32
    %c0_i32_0 = arith.constant 0 : i32
    %c0_i32_1 = arith.constant 0 : i32
    return %arg1, %c0_i32, %c0_i32_0 : i32, i32, i32
  }
  func.func @transform_6(%arg0: i32, %arg1: i32) -> (i32, i32, i32) {
    %c0_i32 = arith.constant 0 : i32
    %c0_i32_0 = arith.constant 0 : i32
    %c0_i32_1 = arith.constant 0 : i32
    return %arg1, %c0_i32, %c0_i32_0 : i32, i32, i32
  }
  func.func @transform_7(%arg0: i32, %arg1: i32) -> (i32, i32, i32) {
    %c0_i32 = arith.constant 0 : i32
    %c0_i32_0 = arith.constant 0 : i32
    %c0_i32_1 = arith.constant 0 : i32
    return %arg1, %c0_i32, %c0_i32_0 : i32, i32, i32
  }
  func.func @transform_8(%arg0: i32, %arg1: i32) -> (i32, i32, i32) {
    %c0_i32 = arith.constant 0 : i32
    %c0_i32_0 = arith.constant 0 : i32
    %c0_i32_1 = arith.constant 0 : i32
    return %arg1, %c0_i32, %c0_i32_0 : i32, i32, i32
  }
  func.func @transform_9(%arg0: i32, %arg1: i32) -> (i32, i32, i32) {
    %c0_i32 = arith.constant 0 : i32
    %c0_i32_0 = arith.constant 0 : i32
    %c0_i32_1 = arith.constant 0 : i32
    return %arg1, %c0_i32, %c0_i32_0 : i32, i32, i32
  }
  func.func @transform_10(%arg0: i32, %arg1: i32) -> (i32, i32, i32) {
    %c0_i32 = arith.constant 0 : i32
    %c0_i32_0 = arith.constant 0 : i32
    %c0_i32_1 = arith.constant 0 : i32
    return %arg1, %c0_i32, %c0_i32_0 : i32, i32, i32
  }
  func.func @transform_11(%arg0: i32, %arg1: i32) -> (i32, i32, i32) {
    %c0_i32 = arith.constant 0 : i32
    %c0_i32_0 = arith.constant 0 : i32
    %c0_i32_1 = arith.constant 0 : i32
    return %arg1, %c0_i32, %c0_i32_0 : i32, i32, i32
  }
  func.func @transform_12(%arg0: i32, %arg1: i32) -> (i32, i32, i32) {
    %c0_i32 = arith.constant 0 : i32
    %c0_i32_0 = arith.constant 0 : i32
    %c0_i32_1 = arith.constant 0 : i32
    return %arg1, %c0_i32, %c0_i32_0 : i32, i32, i32
  }
  func.func @transform_13(%arg0: i32, %arg1: i32) -> (i32, i32, i32) {
    %c0_i32 = arith.constant 0 : i32
    %c0_i32_0 = arith.constant 0 : i32
    %c0_i32_1 = arith.constant 0 : i32
    return %arg1, %c0_i32, %c0_i32_0 : i32, i32, i32
  }
  func.func @transform_14(%arg0: i32, %arg1: i32) -> (i32, i32, i32) {
    %c0_i32 = arith.constant 0 : i32
    %c0_i32_0 = arith.constant 0 : i32
    %c0_i32_1 = arith.constant 0 : i32
    return %arg1, %c0_i32, %c0_i32_0 : i32, i32, i32
  }
  func.func @transform_15(%arg0: i32, %arg1: i32) -> (i32, i32, i32) {
    %c0_i32 = arith.constant 0 : i32
    %c0_i32_0 = arith.constant 0 : i32
    %c0_i32_1 = arith.constant 0 : i32
    return %arg1, %c0_i32, %c0_i32_0 : i32, i32, i32
  }
  func.func @transform_16(%arg0: i32, %arg1: i32) -> (i32, i32, i32) {
    %c0_i32 = arith.constant 0 : i32
    %c0_i32_0 = arith.constant 0 : i32
    %c0_i32_1 = arith.constant 0 : i32
    return %arg1, %c0_i32, %c0_i32_0 : i32, i32, i32
  }
  func.func @transform_17(%arg0: i32, %arg1: i32) -> (i32, i32, i32) {
    %c0_i32 = arith.constant 0 : i32
    %c0_i32_0 = arith.constant 0 : i32
    %c0_i32_1 = arith.constant 0 : i32
    return %arg1, %c0_i32, %c0_i32_0 : i32, i32, i32
  }
  func.func @transform_18(%arg0: i32, %arg1: i32) -> (i32, i32, i32) {
    %c0_i32 = arith.constant 0 : i32
    %c0_i32_0 = arith.constant 0 : i32
    %c0_i32_1 = arith.constant 0 : i32
    return %arg0, %c0_i32, %c0_i32_0 : i32, i32, i32
  }
}

</mosaic_0001>

<llo_original>
// kernel: dpt_multiview_vit_encoder.1
$region0: #{dpt_multiview_vit_encoder.1}
  #allocation0 [shape = 'u32[]', space=smem, size = 0x4, offset = 0x4, fixed_abs, tag = 'smem constant byte address 0x4 - core index']
  #allocation1 [shape = 'u32[144,128]{1,0:T(1,128)}', space=vmem, size = 0x12000, scoped, tag = 'internal scratch']
  %s0 = inlined_call_operand.vmem [shape: f32[2,8,32], index: 0, kind: input, shape index: {}]
  %s1 = inlined_call_operand.vmem [shape: f32[2,2,8,32], index: 1, kind: input, shape index: {}]
  %s2 = inlined_call_operand.vmem [shape: f32[2,1,32], index: 2, kind: input, shape index: {}]
  %s3 = inlined_call_operand.vmem [shape: f32[2,1,32], index: 3, kind: input, shape index: {}]
  %s4 = inlined_call_operand.vmem [shape: f32[2,32,32], index: 4, kind: input, shape index: {}]
  %s5 = inlined_call_operand.vmem [shape: f32[2,1,32], index: 5, kind: input, shape index: {}]
  %s6 = inlined_call_operand.vmem [shape: f32[2,32,32], index: 6, kind: input, shape index: {}]
  %s7 = inlined_call_operand.vmem [shape: f32[2,1,32], index: 7, kind: input, shape index: {}]
  %s8 = inlined_call_operand.vmem [shape: f32[2,32,32], index: 8, kind: input, shape index: {}]
  %s9 = inlined_call_operand.vmem [shape: f32[2,1,32], index: 9, kind: input, shape index: {}]
  %s10 = inlined_call_operand.vmem [shape: f32[2,32,32], index: 10, kind: input, shape index: {}]
  %s11 = inlined_call_operand.vmem [shape: f32[2,1,32], index: 11, kind: input, shape index: {}]
  %s12 = inlined_call_operand.vmem [shape: f32[2,1,32], index: 12, kind: input, shape index: {}]
  %s13 = inlined_call_operand.vmem [shape: f32[2,1,32], index: 13, kind: input, shape index: {}]
  %s14 = inlined_call_operand.vmem [shape: f32[2,128,32], index: 14, kind: input, shape index: {}]
  %s15 = inlined_call_operand.vmem [shape: f32[2,1,128], index: 15, kind: input, shape index: {}]
  %s16 = inlined_call_operand.hbm [shape: f32[2,32,128], index: 16, kind: input, shape index: {}]
  %s17 = inlined_call_operand.vmem [shape: f32[2,1,32], index: 17, kind: input, shape index: {}]
  %s18 = inlined_call_operand.hbm [shape: f32[2,8,32], index: 18, kind: output, shape index: {}]
  %s19 = sld [smem:[#allocation0]]
  $region113: #{dpt_multiview_vit_encoder.1} parent=0
    _
  %s21 = ssub.s32 1, %s19
  %s22 = scalar_select 0, %s21, %s19
  $region1: #{dpt_multiview_vit_encoder.1} parent=0
    #allocation2 [shape = 'u8[32768]{0}', space=vmem, size = 0x8000, scoped, tag = 'input window, operand 16']
    #allocation3 [shape = 's32[2]{0}', space=sflag, size = 0x8, scoped, tag = 'scoped memory for dpt_multiview_vit_encoder.1']
    #allocation4 [shape = 's32[2]{0}', space=sflag, size = 0x8, scoped, tag = 'scoped memory for dpt_multiview_vit_encoder.1']
    #allocation5 [shape = 'u8[8192]{0}', space=vmem, size = 0x2000, scoped, tag = 'output window, operand 0']
    %23 = vsyncpa [#allocation3], 0
    %s24 = scalar_lea.sflag [#allocation3], 1
    %25 = vsyncpa %s24, 0
    %26 = vsyncpa [#allocation4], 0
    %s27 = scalar_lea.sflag [#allocation4], 1
    %28 = vsyncpa %s27, 0
    loop: start=0, step=1, limit=6
    $region2: #{dpt_multiview_vit_encoder.1} parent=1 // loop_pre_header
      _
    $region3: #{dpt_multiview_vit_encoder.1} parent=1 // loop_header
      %s30 = sphi 0, %s34
      %p31 = scmp.ge.s32.totalorder %s30, 6
      %s37 = sphi 0, %s49
      %s38 = sphi 0, %s45
      %s39 = sphi 0, %s37
      %s40 = sphi 0, %s38
      %s41 = sphi 0, %s39
      %s42 = sphi 0, %s40
      %s52 = sphi 0, %s54
      %s55 = sphi 0, %s52
      %s56 = sphi 0, %s55
      %s72 = sphi 0, %s56
      %s80 = sphi 0, %s82
      %s83 = sphi 0, %s80
      %s84 = sphi 0, %s83
      %s100 = sphi 0, %s84
      %s106 = sphi 0, %s108
      %s109 = sphi 0, %s106
      %s110 = sphi 0, %s109
      %s126 = sphi 0, %s110
      %s132 = sphi 0, %s134
      %s135 = sphi 0, %s132
      %s136 = sphi 0, %s135
      %s152 = sphi 0, %s136
      %s158 = sphi 0, %s160
      %s161 = sphi 0, %s158
      %s162 = sphi 0, %s161
      %s178 = sphi 0, %s162
      %s184 = sphi 0, %s186
      %s187 = sphi 0, %s184
      %s188 = sphi 0, %s187
      %s204 = sphi 0, %s188
      %s210 = sphi 0, %s212
      %s213 = sphi 0, %s210
      %s214 = sphi 0, %s213
      %s230 = sphi 0, %s214
      %s236 = sphi 0, %s238
      %s239 = sphi 0, %s236
      %s240 = sphi 0, %s239
      %s256 = sphi 0, %s240
      %s262 = sphi 0, %s264
      %s265 = sphi 0, %s262
      %s266 = sphi 0, %s265
      %s282 = sphi 0, %s266
      %s288 = sphi 0, %s290
      %s291 = sphi 0, %s288
      %s292 = sphi 0, %s291
      %s308 = sphi 0, %s292
      %s314 = sphi 0, %s316
      %s317 = sphi 0, %s314
      %s318 = sphi 0, %s317
      %s334 = sphi 0, %s318
      %s340 = sphi 0, %s342
      %s343 = sphi 0, %s340
      %s344 = sphi 0, %s343
      %s360 = sphi 0, %s344
      %s366 = sphi 0, %s368
      %s369 = sphi 0, %s366
      %s370 = sphi 0, %s369
      %s386 = sphi 0, %s370
      %s392 = sphi 0, %s394
      %s395 = sphi 0, %s392
      %s396 = sphi 0, %s395
      %s412 = sphi 0, %s396
      %s418 = sphi 0, %s420
      %s421 = sphi 0, %s418
      %s422 = sphi 0, %s421
      %s438 = sphi 0, %s422
      %s444 = sphi 0, %s446
      %s447 = sphi 0, %s444
      %s448 = sphi 0, %s447
      %s464 = sphi 0, %s448
      %s470 = sphi 0, %s472
      %s473 = sphi 0, %s470
      %s474 = sphi 0, %s473
      %s490 = sphi 0, %s474
      %s496 = sphi 0, %s498
      %s499 = sphi 0, %s496
      %s500 = sphi 0, %s499
      %s516 = sphi 0, %s500
      %s522 = sphi 0, %s524
      %s525 = sphi 0, %s522
      %s526 = sphi 0, %s525
      %s542 = sphi 0, %s526
    $region4: #{dpt_multiview_vit_encoder.1} parent=1 // loop_header_branch
      %33 = sbr.rel (%p31) target = $region8
    $region5: #{dpt_multiview_vit_encoder.1} parent=1 // loop_body
      %s35 = ssub.s32 %s30, 1
      %s36 = ssub.s32 %s30, 2
      %s43 = sadd.s32 1, %s38
      %p44 = scmp.ge.s32.totalorder %s43, 2
      %s45 = scalar_select %p44, 0, %s43
      %s46 = sadd.s32 1, %s37
      %s47 = scalar_select %p44, %s46, %s37
      %p48 = scmp.ge.s32.totalorder %s47, 2
      %s49 = scalar_select %p48, 0, %s47
      %s50 = ssub.s32 %s37, %s49
      %p51 = scmp.eq.s32.totalorder %s50, 0
      %s53 = sadd.s32 %s52, 1
      %s54 = scalar_select %p51, %s52, %s53
      %p57 = pneg %p51
      %p58 = scmp.eq.s32.totalorder %s30, 3
      %p59 = por %p57, %p58
      %p60 = scmp.ne.s32.totalorder %s52, %s55
      %p61 = scmp.eq.s32.totalorder %s30, 0
      %p62 = por %p60, %p61
      %p63 = scmp.ne.s32.totalorder %s52, %s55
      %p64 = scmp.eq.s32.totalorder %s35, 3
      %p65 = por %p63, %p64
      %p66 = scmp.ne.s32.totalorder %s55, %s56
      %p67 = scmp.eq.s32.totalorder %s35, 0
      %p68 = por %p66, %p67
      %p69 = scmp.ne.s32.totalorder %s55, %s56
      %p70 = scmp.eq.s32.totalorder %s36, 3
      %p71 = por %p69, %p70
      %p73 = scmp.ne.s32.totalorder %s56, %s72
      %p74 = scmp.eq.s32.totalorder %s36, 0
      %p75 = por %p73, %p74
      %s76 = ssub.s32 %s38, %s45
      %s77 = ssub.s32 %s37, %s49
      %s78 = sor.u32 %s76, %s77
      %p79 = scmp.eq.s32.totalorder %s78, 0
      %s81 = sadd.s32 %s80, 1
      %s82 = scalar_select %p79, %s80, %s81
      %p85 = pneg %p79
      %p86 = scmp.eq.s32.totalorder %s30, 3
      %p87 = por %p85, %p86
      %p88 = scmp.ne.s32.totalorder %s80, %s83
      %p89 = scmp.eq.s32.totalorder %s30, 0
      %p90 = por %p88, %p89
      %p91 = scmp.ne.s32.totalorder %s80, %s83
      %p92 = scmp.eq.s32.totalorder %s35, 3
      %p93 = por %p91, %p92
      %p94 = scmp.ne.s32.totalorder %s83, %s84
      %p95 = scmp.eq.s32.totalorder %s35, 0
      %p96 = por %p94, %p95
      %p97 = scmp.ne.s32.totalorder %s83, %s84
      %p98 = scmp.eq.s32.totalorder %s36, 3
      %p99 = por %p97, %p98
      %p101 = scmp.ne.s32.totalorder %s84, %s100
      %p102 = scmp.eq.s32.totalorder %s36, 0
      %p103 = por %p101, %p102
      %s104 = ssub.s32 %s38, %s45
      %p105 = scmp.eq.s32.totalorder %s104, 0
      %s107 = sadd.s32 %s106, 1
      %s108 = scalar_select %p105, %s106, %s107
      %p111 = pneg %p105
      %p112 = scmp.eq.s32.totalorder %s30, 3
      %p113 = por %p111, %p112
      %p114 = scmp.ne.s32.totalorder %s106, %s109
      %p115 = scmp.eq.s32.totalorder %s30, 0
      %p116 = por %p114, %p115
      %p117 = scmp.ne.s32.totalorder %s106, %s109
      %p118 = scmp.eq.s32.totalorder %s35, 3
      %p119 = por %p117, %p118
      %p120 = scmp.ne.s32.totalorder %s109, %s110
      %p121 = scmp.eq.s32.totalorder %s35, 0
      %p122 = por %p120, %p121
      %p123 = scmp.ne.s32.totalorder %s109, %s110
      %p124 = scmp.eq.s32.totalorder %s36, 3
      %p125 = por %p123, %p124
      %p127 = scmp.ne.s32.totalorder %s110, %s126
      %p128 = scmp.eq.s32.totalorder %s36, 0
      %p129 = por %p127, %p128
      %s130 = ssub.s32 %s38, %s45
      %p131 = scmp.eq.s32.totalorder %s130, 0
      %s133 = sadd.s32 %s132, 1
      %s134 = scalar_select %p131, %s132, %s133
      %p137 = pneg %p131
      %p138 = scmp.eq.s32.totalorder %s30, 3
      %p139 = por %p137, %p138
      %p140 = scmp.ne.s32.totalorder %s132, %s135
      %p141 = scmp.eq.s32.totalorder %s30, 0
      %p142 = por %p140, %p141
      %p143 = scmp.ne.s32.totalorder %s132, %s135
      %p144 = scmp.eq.s32.totalorder %s35, 3
      %p145 = por %p143, %p144
      %p146 = scmp.ne.s32.totalorder %s135, %s136
      %p147 = scmp.eq.s32.totalorder %s35, 0
      %p148 = por %p146, %p147
      %p149 = scmp.ne.s32.totalorder %s135, %s136
      %p150 = scmp.eq.s32.totalorder %s36, 3
      %p151 = por %p149, %p150
      %p153 = scmp.ne.s32.totalorder %s136, %s152
      %p154 = scmp.eq.s32.totalorder %s36, 0
      %p155 = por %p153, %p154
      %s156 = ssub.s32 %s38, %s45
      %p157 = scmp.eq.s32.totalorder %s156, 0
      %s159 = sadd.s32 %s158, 1
      %s160 = scalar_select %p157, %s158, %s159
      %p163 = pneg %p157
      %p164 = scmp.eq.s32.totalorder %s30, 3
      %p165 = por %p163, %p164
      %p166 = scmp.ne.s32.totalorder %s158, %s161
      %p167 = scmp.eq.s32.totalorder %s30, 0
      %p168 = por %p166, %p167
      %p169 = scmp.ne.s32.totalorder %s158, %s161
      %p170 = scmp.eq.s32.totalorder %s35, 3
      %p171 = por %p169, %p170
      %p172 = scmp.ne.s32.totalorder %s161, %s162
      %p173 = scmp.eq.s32.totalorder %s35, 0
      %p174 = por %p172, %p173
      %p175 = scmp.ne.s32.totalorder %s161, %s162
      %p176 = scmp.eq.s32.totalorder %s36, 3
      %p177 = por %p175, %p176
      %p179 = scmp.ne.s32.totalorder %s162, %s178
      %p180 = scmp.eq.s32.totalorder %s36, 0
      %p181 = por %p179, %p180
      %s182 = ssub.s32 %s38, %s45
      %p183 = scmp.eq.s32.totalorder %s182, 0
      %s185 = sadd.s32 %s184, 1
      %s186 = scalar_select %p183, %s184, %s185
      %p189 = pneg %p183
      %p190 = scmp.eq.s32.totalorder %s30, 3
      %p191 = por %p189, %p190
      %p192 = scmp.ne.s32.totalorder %s184, %s187
      %p193 = scmp.eq.s32.totalorder %s30, 0
      %p194 = por %p192, %p193
      %p195 = scmp.ne.s32.totalorder %s184, %s187
      %p196 = scmp.eq.s32.totalorder %s35, 3
      %p197 = por %p195, %p196
      %p198 = scmp.ne.s32.totalorder %s187, %s188
      %p199 = scmp.eq.s32.totalorder %s35, 0
      %p200 = por %p198, %p199
      %p201 = scmp.ne.s32.totalorder %s187, %s188
      %p202 = scmp.eq.s32.totalorder %s36, 3
      %p203 = por %p201, %p202
      %p205 = scmp.ne.s32.totalorder %s188, %s204
      %p206 = scmp.eq.s32.totalorder %s36, 0
      %p207 = por %p205, %p206
      %s208 = ssub.s32 %s38, %s45
      %p209 = scmp.eq.s32.totalorder %s208, 0
      %s211 = sadd.s32 %s210, 1
      %s212 = scalar_select %p209, %s210, %s211
      %p215 = pneg %p209
      %p216 = scmp.eq.s32.totalorder %s30, 3
      %p217 = por %p215, %p216
      %p218 = scmp.ne.s32.totalorder %s210, %s213
      %p219 = scmp.eq.s32.totalorder %s30, 0
      %p220 = por %p218, %p219
      %p221 = scmp.ne.s32.totalorder %s210, %s213
      %p222 = scmp.eq.s32.totalorder %s35, 3
      %p223 = por %p221, %p222
      %p224 = scmp.ne.s32.totalorder %s213, %s214
      %p225 = scmp.eq.s32.totalorder %s35, 0
      %p226 = por %p224, %p225
      %p227 = scmp.ne.s32.totalorder %s213, %s214
      %p228 = scmp.eq.s32.totalorder %s36, 3
      %p229 = por %p227, %p228
      %p231 = scmp.ne.s32.totalorder %s214, %s230
      %p232 = scmp.eq.s32.totalorder %s36, 0
      %p233 = por %p231, %p232
      %s234 = ssub.s32 %s38, %s45
      %p235 = scmp.eq.s32.totalorder %s234, 0
      %s237 = sadd.s32 %s236, 1
      %s238 = scalar_select %p235, %s236, %s237
      %p241 = pneg %p235
      %p242 = scmp.eq.s32.totalorder %s30, 3
      %p243 = por %p241, %p242
      %p244 = scmp.ne.s32.totalorder %s236, %s239
      %p245 = scmp.eq.s32.totalorder %s30, 0
      %p246 = por %p244, %p245
      %p247 = scmp.ne.s32.totalorder %s236, %s239
      %p248 = scmp.eq.s32.totalorder %s35, 3
      %p249 = por %p247, %p248
      %p250 = scmp.ne.s32.totalorder %s239, %s240
      %p251 = scmp.eq.s32.totalorder %s35, 0
      %p252 = por %p250, %p251
      %p253 = scmp.ne.s32.totalorder %s239, %s240
      %p254 = scmp.eq.s32.totalorder %s36, 3
      %p255 = por %p253, %p254
      %p257 = scmp.ne.s32.totalorder %s240, %s256
      %p258 = scmp.eq.s32.totalorder %s36, 0
      %p259 = por %p257, %p258
      %s260 = ssub.s32 %s38, %s45
      %p261 = scmp.eq.s32.totalorder %s260, 0
      %s263 = sadd.s32 %s262, 1
      %s264 = scalar_select %p261, %s262, %s263
      %p267 = pneg %p261
      %p268 = scmp.eq.s32.totalorder %s30, 3
      %p269 = por %p267, %p268
      %p270 = scmp.ne.s32.totalorder %s262, %s265
      %p271 = scmp.eq.s32.totalorder %s30, 0
      %p272 = por %p270, %p271
      %p273 = scmp.ne.s32.totalorder %s262, %s265
      %p274 = scmp.eq.s32.totalorder %s35, 3
      %p275 = por %p273, %p274
      %p276 = scmp.ne.s32.totalorder %s265, %s266
      %p277 = scmp.eq.s32.totalorder %s35, 0
      %p278 = por %p276, %p277
      %p279 = scmp.ne.s32.totalorder %s265, %s266
      %p280 = scmp.eq.s32.totalorder %s36, 3
      %p281 = por %p279, %p280
      %p283 = scmp.ne.s32.totalorder %s266, %s282
      %p284 = scmp.eq.s32.totalorder %s36, 0
      %p285 = por %p283, %p284
      %s286 = ssub.s32 %s38, %s45
      %p287 = scmp.eq.s32.totalorder %s286, 0
      %s289 = sadd.s32 %s288, 1
      %s290 = scalar_select %p287, %s288, %s289
      %p293 = pneg %p287
      %p294 = scmp.eq.s32.totalorder %s30, 3
      %p295 = por %p293, %p294
      %p296 = scmp.ne.s32.totalorder %s288, %s291
      %p297 = scmp.eq.s32.totalorder %s30, 0
      %p298 = por %p296, %p297
      %p299 = scmp.ne.s32.totalorder %s288, %s291
      %p300 = scmp.eq.s32.totalorder %s35, 3
      %p301 = por %p299, %p300
      %p302 = scmp.ne.s32.totalorder %s291, %s292
      %p303 = scmp.eq.s32.totalorder %s35, 0
      %p304 = por %p302, %p303
      %p305 = scmp.ne.s32.totalorder %s291, %s292
      %p306 = scmp.eq.s32.totalorder %s36, 3
      %p307 = por %p305, %p306
      %p309 = scmp.ne.s32.totalorder %s292, %s308
      %p310 = scmp.eq.s32.totalorder %s36, 0
      %p311 = por %p309, %p310
      %s312 = ssub.s32 %s38, %s45
      %p313 = scmp.eq.s32.totalorder %s312, 0
      %s315 = sadd.s32 %s314, 1
      %s316 = scalar_select %p313, %s314, %s315
      %p319 = pneg %p313
      %p320 = scmp.eq.s32.totalorder %s30, 3
      %p321 = por %p319, %p320
      %p322 = scmp.ne.s32.totalorder %s314, %s317
      %p323 = scmp.eq.s32.totalorder %s30, 0
      %p324 = por %p322, %p323
      %p325 = scmp.ne.s32.totalorder %s314, %s317
      %p326 = scmp.eq.s32.totalorder %s35, 3
      %p327 = por %p325, %p326
      %p328 = scmp.ne.s32.totalorder %s317, %s318
      %p329 = scmp.eq.s32.totalorder %s35, 0
      %p330 = por %p328, %p329
      %p331 = scmp.ne.s32.totalorder %s317, %s318
      %p332 = scmp.eq.s32.totalorder %s36, 3
      %p333 = por %p331, %p332
      %p335 = scmp.ne.s32.totalorder %s318, %s334
      %p336 = scmp.eq.s32.totalorder %s36, 0
      %p337 = por %p335, %p336
      %s338 = ssub.s32 %s38, %s45
      %p339 = scmp.eq.s32.totalorder %s338, 0
      %s341 = sadd.s32 %s340, 1
      %s342 = scalar_select %p339, %s340, %s341
      %p345 = pneg %p339
      %p346 = scmp.eq.s32.totalorder %s30, 3
      %p347 = por %p345, %p346
      %p348 = scmp.ne.s32.totalorder %s340, %s343
      %p349 = scmp.eq.s32.totalorder %s30, 0
      %p350 = por %p348, %p349
      %p351 = scmp.ne.s32.totalorder %s340, %s343
      %p352 = scmp.eq.s32.totalorder %s35, 3
      %p353 = por %p351, %p352
      %p354 = scmp.ne.s32.totalorder %s343, %s344
      %p355 = scmp.eq.s32.totalorder %s35, 0
      %p356 = por %p354, %p355
      %p357 = scmp.ne.s32.totalorder %s343, %s344
      %p358 = scmp.eq.s32.totalorder %s36, 3
      %p359 = por %p357, %p358
      %p361 = scmp.ne.s32.totalorder %s344, %s360
      %p362 = scmp.eq.s32.totalorder %s36, 0
      %p363 = por %p361, %p362
      %s364 = ssub.s32 %s38, %s45
      %p365 = scmp.eq.s32.totalorder %s364, 0
      %s367 = sadd.s32 %s366, 1
      %s368 = scalar_select %p365, %s366, %s367
      %p371 = pneg %p365
      %p372 = scmp.eq.s32.totalorder %s30, 3
      %p373 = por %p371, %p372
      %p374 = scmp.ne.s32.totalorder %s366, %s369
      %p375 = scmp.eq.s32.totalorder %s30, 0
      %p376 = por %p374, %p375
      %p377 = scmp.ne.s32.totalorder %s366, %s369
      %p378 = scmp.eq.s32.totalorder %s35, 3
      %p379 = por %p377, %p378
      %p380 = scmp.ne.s32.totalorder %s369, %s370
      %p381 = scmp.eq.s32.totalorder %s35, 0
      %p382 = por %p380, %p381
      %p383 = scmp.ne.s32.totalorder %s369, %s370
      %p384 = scmp.eq.s32.totalorder %s36, 3
      %p385 = por %p383, %p384
      %p387 = scmp.ne.s32.totalorder %s370, %s386
      %p388 = scmp.eq.s32.totalorder %s36, 0
      %p389 = por %p387, %p388
      %s390 = ssub.s32 %s38, %s45
      %p391 = scmp.eq.s32.totalorder %s390, 0
      %s393 = sadd.s32 %s392, 1
      %s394 = scalar_select %p391, %s392, %s393
      %p397 = pneg %p391
      %p398 = scmp.eq.s32.totalorder %s30, 3
      %p399 = por %p397, %p398
      %p400 = scmp.ne.s32.totalorder %s392, %s395
      %p401 = scmp.eq.s32.totalorder %s30, 0
      %p402 = por %p400, %p401
      %p403 = scmp.ne.s32.totalorder %s392, %s395
      %p404 = scmp.eq.s32.totalorder %s35, 3
      %p405 = por %p403, %p404
      %p406 = scmp.ne.s32.totalorder %s395, %s396
      %p407 = scmp.eq.s32.totalorder %s35, 0
      %p408 = por %p406, %p407
      %p409 = scmp.ne.s32.totalorder %s395, %s396
      %p410 = scmp.eq.s32.totalorder %s36, 3
      %p411 = por %p409, %p410
      %p413 = scmp.ne.s32.totalorder %s396, %s412
      %p414 = scmp.eq.s32.totalorder %s36, 0
      %p415 = por %p413, %p414
      %s416 = ssub.s32 %s38, %s45
      %p417 = scmp.eq.s32.totalorder %s416, 0
      %s419 = sadd.s32 %s418, 1
      %s420 = scalar_select %p417, %s418, %s419
      %p423 = pneg %p417
      %p424 = scmp.eq.s32.totalorder %s30, 3
      %p425 = por %p423, %p424
      %p426 = scmp.ne.s32.totalorder %s418, %s421
      %p427 = scmp.eq.s32.totalorder %s30, 0
      %p428 = por %p426, %p427
      %p429 = scmp.ne.s32.totalorder %s418, %s421
      %p430 = scmp.eq.s32.totalorder %s35, 3
      %p431 = por %p429, %p430
      %p432 = scmp.ne.s32.totalorder %s421, %s422
      %p433 = scmp.eq.s32.totalorder %s35, 0
      %p434 = por %p432, %p433
      %p435 = scmp.ne.s32.totalorder %s421, %s422
      %p436 = scmp.eq.s32.totalorder %s36, 3
      %p437 = por %p435, %p436
      %p439 = scmp.ne.s32.totalorder %s422, %s438
      %p440 = scmp.eq.s32.totalorder %s36, 0
      %p441 = por %p439, %p440
      %s442 = ssub.s32 %s38, %s45
      %p443 = scmp.eq.s32.totalorder %s442, 0
      %s445 = sadd.s32 %s444, 1
      %s446 = scalar_select %p443, %s444, %s445
      %p449 = pneg %p443
      %p450 = scmp.eq.s32.totalorder %s30, 3
      %p451 = por %p449, %p450
      %p452 = scmp.ne.s32.totalorder %s444, %s447
      %p453 = scmp.eq.s32.totalorder %s30, 0
      %p454 = por %p452, %p453
      %p455 = scmp.ne.s32.totalorder %s444, %s447
      %p456 = scmp.eq.s32.totalorder %s35, 3
      %p457 = por %p455, %p456
      %p458 = scmp.ne.s32.totalorder %s447, %s448
      %p459 = scmp.eq.s32.totalorder %s35, 0
      %p460 = por %p458, %p459
      %p461 = scmp.ne.s32.totalorder %s447, %s448
      %p462 = scmp.eq.s32.totalorder %s36, 3
      %p463 = por %p461, %p462
      %p465 = scmp.ne.s32.totalorder %s448, %s464
      %p466 = scmp.eq.s32.totalorder %s36, 0
      %p467 = por %p465, %p466
      %s468 = ssub.s32 %s38, %s45
      %p469 = scmp.eq.s32.totalorder %s468, 0
      %s471 = sadd.s32 %s470, 1
      %s472 = scalar_select %p469, %s470, %s471
      %p475 = pneg %p469
      %p476 = scmp.eq.s32.totalorder %s30, 3
      %p477 = por %p475, %p476
      %p478 = scmp.ne.s32.totalorder %s470, %s473
      %p479 = scmp.eq.s32.totalorder %s30, 0
      %p480 = por %p478, %p479
      %p481 = scmp.ne.s32.totalorder %s470, %s473
      %p482 = scmp.eq.s32.totalorder %s35, 3
      %p483 = por %p481, %p482
      %p484 = scmp.ne.s32.totalorder %s473, %s474
      %p485 = scmp.eq.s32.totalorder %s35, 0
      %p486 = por %p484, %p485
      %p487 = scmp.ne.s32.totalorder %s473, %s474
      %p488 = scmp.eq.s32.totalorder %s36, 3
      %p489 = por %p487, %p488
      %p491 = scmp.ne.s32.totalorder %s474, %s490
      %p492 = scmp.eq.s32.totalorder %s36, 0
      %p493 = por %p491, %p492
      %s494 = ssub.s32 %s38, %s45
      %p495 = scmp.eq.s32.totalorder %s494, 0
      %s497 = sadd.s32 %s496, 1
      %s498 = scalar_select %p495, %s496, %s497
      %p501 = pneg %p495
      %p502 = scmp.eq.s32.totalorder %s30, 3
      %p503 = por %p501, %p502
      %p504 = scmp.ne.s32.totalorder %s496, %s499
      %p505 = scmp.eq.s32.totalorder %s30, 0
      %p506 = por %p504, %p505
      %p507 = scmp.ne.s32.totalorder %s496, %s499
      %p508 = scmp.eq.s32.totalorder %s35, 3
      %p509 = por %p507, %p508
      %p510 = scmp.ne.s32.totalorder %s499, %s500
      %p511 = scmp.eq.s32.totalorder %s35, 0
      %p512 = por %p510, %p511
      %p513 = scmp.ne.s32.totalorder %s499, %s500
      %p514 = scmp.eq.s32.totalorder %s36, 3
      %p515 = por %p513, %p514
      %p517 = scmp.ne.s32.totalorder %s500, %s516
      %p518 = scmp.eq.s32.totalorder %s36, 0
      %p519 = por %p517, %p518
      %s520 = ssub.s32 %s37, %s49
      %p521 = scmp.eq.s32.totalorder %s520, 0
      %s523 = sadd.s32 %s522, 1
      %s524 = scalar_select %p521, %s522, %s523
      %p527 = pneg %p521
      %p528 = scmp.eq.s32.totalorder %s30, 3
      %p529 = por %p527, %p528
      %p530 = scmp.ne.s32.totalorder %s522, %s525
      %p531 = scmp.eq.s32.totalorder %s30, 0
      %p532 = por %p530, %p531
      %p533 = scmp.ne.s32.totalorder %s522, %s525
      %p534 = scmp.eq.s32.totalorder %s35, 3
      %p535 = por %p533, %p534
      %p536 = scmp.ne.s32.totalorder %s525, %s526
      %p537 = scmp.eq.s32.totalorder %s35, 0
      %p538 = por %p536, %p537
      %p539 = scmp.ne.s32.totalorder %s525, %s526
      %p540 = scmp.eq.s32.totalorder %s36, 3
      %p541 = por %p539, %p540
      %p543 = scmp.ne.s32.totalorder %s526, %s542
      %p544 = scmp.eq.s32.totalorder %s36, 0
      %p545 = por %p543, %p544
      %p546 = scmp.le.s32.totalorder 1, %s30
      %p547 = scmp.lt.s32.totalorder %s30, 5
      %p548 = pnand %p546, %p547
      %p549 = pneg %p548
      // Predicated region
      $region9: #{dpt_multiview_vit_encoder.1} parent=5 // pred_check
        _
      $region10: #{dpt_multiview_vit_encoder.1} parent=5 // pred_check_branch
        %551 = sbr.rel (%p548) target = $region12
      $region11: #{dpt_multiview_vit_encoder.1} parent=5 // pred_region
        %s552 = ssub.s32 %s30, 1
      $region12: #{dpt_multiview_vit_encoder.1} parent=5 // pred_fallthru
        _
      %p553 = scmp.lt.s32.totalorder %s30, 4
      // Predicated region
      $region13: #{dpt_multiview_vit_encoder.1} parent=5 // pred_check
        %p554 = pneg %p553
      $region14: #{dpt_multiview_vit_encoder.1} parent=5 // pred_check_branch
        %556 = sbr.rel (%p554) target = $region16
      $region15: #{dpt_multiview_vit_encoder.1} parent=5 // pred_region
        // Predicated region
        $region17: #{dpt_multiview_vit_encoder.1} parent=15 // pred_check
          %p557 = pneg %p62
        $region18: #{dpt_multiview_vit_encoder.1} parent=15 // pred_check_branch
          %559 = sbr.rel (%p557) target = $region20
        $region19: #{dpt_multiview_vit_encoder.1} parent=15 // pred_region
          %p560 = scmp.lt.s32.totalorder %s37, 1
          %s561 = scalar_select %p560, %s37, 1
          %s562 = smul.addr %s561, 8
          %s563 = scalar_lea.vmem %s0, %s562
        $region20: #{dpt_multiview_vit_encoder.1} parent=15 // pred_fallthru
          _
        // Predicated region
        $region21: #{dpt_multiview_vit_encoder.1} parent=15 // pred_check
          %p564 = pneg %p90
        $region22: #{dpt_multiview_vit_encoder.1} parent=15 // pred_check_branch
          %566 = sbr.rel (%p564) target = $region24
        $region23: #{dpt_multiview_vit_encoder.1} parent=15 // pred_region
          %p567 = scmp.lt.s32.totalorder %s38, 1
          %s568 = scalar_select %p567, %s38, 1
          %p569 = scmp.lt.s32.totalorder %s37, 1
          %s570 = scalar_select %p569, %s37, 1
          %s571 = smul.addr %s568, 2
          %s572 = sadd.s32 %s570, %s571
          %s573 = smul.addr %s572, 8
          %s574 = scalar_lea.vmem %s1, %s573
        $region24: #{dpt_multiview_vit_encoder.1} parent=15 // pred_fallthru
          _
        // Predicated region
        $region25: #{dpt_multiview_vit_encoder.1} parent=15 // pred_check
          %p575 = pneg %p116
        $region26: #{dpt_multiview_vit_encoder.1} parent=15 // pred_check_branch
          %577 = sbr.rel (%p575) target = $region28
        $region27: #{dpt_multiview_vit_encoder.1} parent=15 // pred_region
          %p578 = scmp.lt.s32.totalorder %s38, 1
          %s579 = scalar_select %p578, %s38, 1
          %s580 = scalar_lea.vmem %s2, %s579
        $region28: #{dpt_multiview_vit_encoder.1} parent=15 // pred_fallthru
          _
        // Predicated region
        $region29: #{dpt_multiview_vit_encoder.1} parent=15 // pred_check
          %p581 = pneg %p142
        $region30: #{dpt_multiview_vit_encoder.1} parent=15 // pred_check_branch
          %583 = sbr.rel (%p581) target = $region32
        $region31: #{dpt_multiview_vit_encoder.1} parent=15 // pred_region
          %p584 = scmp.lt.s32.totalorder %s38, 1
          %s585 = scalar_select %p584, %s38, 1
          %s586 = scalar_lea.vmem %s3, %s585
        $region32: #{dpt_multiview_vit_encoder.1} parent=15 // pred_fallthru
          _
        // Predicated region
        $region33: #{dpt_multiview_vit_encoder.1} parent=15 // pred_check
          %p587 = pneg %p168
        $region34: #{dpt_multiview_vit_encoder.1} parent=15 // pred_check_branch
          %589 = sbr.rel (%p587) target = $region36
        $region35: #{dpt_multiview_vit_encoder.1} parent=15 // pred_region
          %p590 = scmp.lt.s32.totalorder %s38, 1
          %s591 = scalar_select %p590, %s38, 1
          %s592 = smul.addr %s591, 4
          %s593 = smul.addr %s592, 8
          %s594 = scalar_lea.vmem %s4, %s593
        $region36: #{dpt_multiview_vit_encoder.1} parent=15 // pred_fallthru
          _
        // Predicated region
        $region37: #{dpt_multiview_vit_encoder.1} parent=15 // pred_check
          %p595 = pneg %p194
        $region38: #{dpt_multiview_vit_encoder.1} parent=15 // pred_check_branch
          %597 = sbr.rel (%p595) target = $region40
        $region39: #{dpt_multiview_vit_encoder.1} parent=15 // pred_region
          %p598 = scmp.lt.s32.totalorder %s38, 1
          %s599 = scalar_select %p598, %s38, 1
          %s600 = scalar_lea.vmem %s5, %s599
        $region40: #{dpt_multiview_vit_encoder.1} parent=15 // pred_fallthru
          _
        // Predicated region
        $region41: #{dpt_multiview_vit_encoder.1} parent=15 // pred_check
          %p601 = pneg %p220
        $region42: #{dpt_multiview_vit_encoder.1} parent=15 // pred_check_branch
          %603 = sbr.rel (%p601) target = $region44
        $region43: #{dpt_multiview_vit_encoder.1} parent=15 // pred_region
          %p604 = scmp.lt.s32.totalorder %s38, 1
          %s605 = scalar_select %p604, %s38, 1
          %s606 = smul.addr %s605, 4
          %s607 = smul.addr %s606, 8
          %s608 = scalar_lea.vmem %s6, %s607
        $region44: #{dpt_multiview_vit_encoder.1} parent=15 // pred_fallthru
          _
        // Predicated region
        $region45: #{dpt_multiview_vit_encoder.1} parent=15 // pred_check
          %p609 = pneg %p246
        $region46: #{dpt_multiview_vit_encoder.1} parent=15 // pred_check_branch
          %611 = sbr.rel (%p609) target = $region48
        $region47: #{dpt_multiview_vit_encoder.1} parent=15 // pred_region
          %p612 = scmp.lt.s32.totalorder %s38, 1
          %s613 = scalar_select %p612, %s38, 1
          %s614 = scalar_lea.vmem %s7, %s613
        $region48: #{dpt_multiview_vit_encoder.1} parent=15 // pred_fallthru
          _
        // Predicated region
        $region49: #{dpt_multiview_vit_encoder.1} parent=15 // pred_check
          %p615 = pneg %p272
        $region50: #{dpt_multiview_vit_encoder.1} parent=15 // pred_check_branch
          %617 = sbr.rel (%p615) target = $region52
        $region51: #{dpt_multiview_vit_encoder.1} parent=15 // pred_region
          %p618 = scmp.lt.s32.totalorder %s38, 1
          %s619 = scalar_select %p618, %s38, 1
          %s620 = smul.addr %s619, 4
          %s621 = smul.addr %s620, 8
          %s622 = scalar_lea.vmem %s8, %s621
        $region52: #{dpt_multiview_vit_encoder.1} parent=15 // pred_fallthru
          _
        // Predicated region
        $region53: #{dpt_multiview_vit_encoder.1} parent=15 // pred_check
          %p623 = pneg %p298
        $region54: #{dpt_multiview_vit_encoder.1} parent=15 // pred_check_branch
          %625 = sbr.rel (%p623) target = $region56
        $region55: #{dpt_multiview_vit_encoder.1} parent=15 // pred_region
          %p626 = scmp.lt.s32.totalorder %s38, 1
          %s627 = scalar_select %p626, %s38, 1
          %s628 = scalar_lea.vmem %s9, %s627
        $region56: #{dpt_multiview_vit_encoder.1} parent=15 // pred_fallthru
          _
        // Predicated region
        $region57: #{dpt_multiview_vit_encoder.1} parent=15 // pred_check
          %p629 = pneg %p324
        $region58: #{dpt_multiview_vit_encoder.1} parent=15 // pred_check_branch
          %631 = sbr.rel (%p629) target = $region60
        $region59: #{dpt_multiview_vit_encoder.1} parent=15 // pred_region
          %p632 = scmp.lt.s32.totalorder %s38, 1
          %s633 = scalar_select %p632, %s38, 1
          %s634 = smul.addr %s633, 4
          %s635 = smul.addr %s634, 8
          %s636 = scalar_lea.vmem %s10, %s635
        $region60: #{dpt_multiview_vit_encoder.1} parent=15 // pred_fallthru
          _
        // Predicated region
        $region61: #{dpt_multiview_vit_encoder.1} parent=15 // pred_check
          %p637 = pneg %p350
        $region62: #{dpt_multiview_vit_encoder.1} parent=15 // pred_check_branch
          %639 = sbr.rel (%p637) target = $region64
        $region63: #{dpt_multiview_vit_encoder.1} parent=15 // pred_region
          %p640 = scmp.lt.s32.totalorder %s38, 1
          %s641 = scalar_select %p640, %s38, 1
          %s642 = scalar_lea.vmem %s11, %s641
        $region64: #{dpt_multiview_vit_encoder.1} parent=15 // pred_fallthru
          _
        // Predicated region
        $region65: #{dpt_multiview_vit_encoder.1} parent=15 // pred_check
          %p643 = pneg %p376
        $region66: #{dpt_multiview_vit_encoder.1} parent=15 // pred_check_branch
          %645 = sbr.rel (%p643) target = $region68
        $region67: #{dpt_multiview_vit_encoder.1} parent=15 // pred_region
          %p646 = scmp.lt.s32.totalorder %s38, 1
          %s647 = scalar_select %p646, %s38, 1
          %s648 = scalar_lea.vmem %s12, %s647
        $region68: #{dpt_multiview_vit_encoder.1} parent=15 // pred_fallthru
          _
        // Predicated region
        $region69: #{dpt_multiview_vit_encoder.1} parent=15 // pred_check
          %p649 = pneg %p402
        $region70: #{dpt_multiview_vit_encoder.1} parent=15 // pred_check_branch
          %651 = sbr.rel (%p649) target = $region72
        $region71: #{dpt_multiview_vit_encoder.1} parent=15 // pred_region
          %p652 = scmp.lt.s32.totalorder %s38, 1
          %s653 = scalar_select %p652, %s38, 1
          %s654 = scalar_lea.vmem %s13, %s653
        $region72: #{dpt_multiview_vit_encoder.1} parent=15 // pred_fallthru
          _
        // Predicated region
        $region73: #{dpt_multiview_vit_encoder.1} parent=15 // pred_check
          %p655 = pneg %p428
        $region74: #{dpt_multiview_vit_encoder.1} parent=15 // pred_check_branch
          %657 = sbr.rel (%p655) target = $region76
        $region75: #{dpt_multiview_vit_encoder.1} parent=15 // pred_region
          %p658 = scmp.lt.s32.totalorder %s38, 1
          %s659 = scalar_select %p658, %s38, 1
          %s660 = smul.addr %s659, 16
          %s661 = smul.addr %s660, 8
          %s662 = scalar_lea.vmem %s14, %s661
        $region76: #{dpt_multiview_vit_encoder.1} parent=15 // pred_fallthru
          _
        // Predicated region
        $region77: #{dpt_multiview_vit_encoder.1} parent=15 // pred_check
          %p663 = pneg %p454
        $region78: #{dpt_multiview_vit_encoder.1} parent=15 // pred_check_branch
          %665 = sbr.rel (%p663) target = $region80
        $region79: #{dpt_multiview_vit_encoder.1} parent=15 // pred_region
          %p666 = scmp.lt.s32.totalorder %s38, 1
          %s667 = scalar_select %p666, %s38, 1
          %s668 = scalar_lea.vmem %s15, %s667
        $region80: #{dpt_multiview_vit_encoder.1} parent=15 // pred_fallthru
          _
        // Predicated region
        $region81: #{dpt_multiview_vit_encoder.1} parent=15 // pred_check
          %p669 = pneg %p480
        $region82: #{dpt_multiview_vit_encoder.1} parent=15 // pred_check_branch
          %671 = sbr.rel (%p669) target = $region84
        $region83: #{dpt_multiview_vit_encoder.1} parent=15 // pred_region
          %s672 = sand.u32 %s470, 1
          %s673 = scalar_lea.sflag [#allocation3], %s672
          %s674 = sand.u32 %s470, 1
          %s675 = smul.addr %s674, 32
          %s676 = scalar_lea.vmem [#allocation2], %s675
          %s678 = ssub.s32 512, 512
          %679 = vsyncadd %s673, %s678
          %s680 = smul.addr %s38, 4
          %s681 = smul.addr %s680, 128
          %s682 = scalar_lea.hbm %s16, %s681
          %s683 = sshll.u32 %s676, 4
          %s684 = int_to_ptr.vmem [resolvable:$true] %s683
          %689 = dma.hbm_to_vmem [thread:$0]  %s682, 512, %s684, %s673, 128, 128, 8
        $region84: #{dpt_multiview_vit_encoder.1} parent=15 // pred_fallthru
          _
        // Predicated region
        $region85: #{dpt_multiview_vit_encoder.1} parent=15 // pred_check
          %p690 = pneg %p506
        $region86: #{dpt_multiview_vit_encoder.1} parent=15 // pred_check_branch
          %692 = sbr.rel (%p690) target = $region88
        $region87: #{dpt_multiview_vit_encoder.1} parent=15 // pred_region
          %p693 = scmp.lt.s32.totalorder %s38, 1
          %s694 = scalar_select %p693, %s38, 1
          %s695 = scalar_lea.vmem %s17, %s694
        $region88: #{dpt_multiview_vit_encoder.1} parent=15 // pred_fallthru
          _
      $region16: #{dpt_multiview_vit_encoder.1} parent=5 // pred_fallthru
        _
      %p696 = scmp.le.s32.totalorder 1, %s30
      %p697 = scmp.lt.s32.totalorder %s30, 5
      %p698 = pnand %p696, %p697
      %p699 = pneg %p698
      // Predicated region
      $region89: #{dpt_multiview_vit_encoder.1} parent=5 // pred_check
        _
      $region90: #{dpt_multiview_vit_encoder.1} parent=5 // pred_check_branch
        %701 = sbr.rel (%p698) target = $region92
      $region91: #{dpt_multiview_vit_encoder.1} parent=5 // pred_region
        %s702 = ssub.s32 %s30, 1
        %s703 = sand.u32 %s473, 1
        %s704 = scalar_lea.sflag [#allocation3], %s703
        %s705 = sand.u32 %s473, 1
        %s706 = smul.addr %s705, 32
        %s707 = scalar_lea.vmem [#allocation2], %s706
        // Predicated region
        $region93: #{dpt_multiview_vit_encoder.1} parent=91 // pred_check
          %p708 = pneg %p486
        $region94: #{dpt_multiview_vit_encoder.1} parent=91 // pred_check_branch
          %710 = sbr.rel (%p708) target = $region96
        $region95: #{dpt_multiview_vit_encoder.1} parent=91 // pred_region
          %711 = dma.done %s704, 512
        $region96: #{dpt_multiview_vit_encoder.1} parent=91 // pred_fallthru
          _
        %p712 = scmp.lt.s32.totalorder %s39, 1
        %s713 = scalar_select %p712, %s39, 1
        %s714 = smul.addr %s713, 8
        %s715 = scalar_lea.vmem %s0, %s714
        %p716 = pneg %p68
        %p717 = pneg %p65
        %p718 = scmp.lt.s32.totalorder %s40, 1
        %s719 = scalar_select %p718, %s40, 1
        %p720 = scmp.lt.s32.totalorder %s39, 1
        %s721 = scalar_select %p720, %s39, 1
        %s722 = smul.addr %s719, 2
        %s723 = sadd.s32 %s721, %s722
        %s724 = smul.addr %s723, 8
        %s725 = scalar_lea.vmem %s1, %s724
        %p726 = pneg %p96
        %p727 = pneg %p93
        %p728 = scmp.lt.s32.totalorder %s40, 1
        %s729 = scalar_select %p728, %s40, 1
        %s730 = scalar_lea.vmem %s2, %s729
        %p731 = pneg %p122
        %p732 = pneg %p119
        %p733 = scmp.lt.s32.totalorder %s40, 1
        %s734 = scalar_select %p733, %s40, 1
        %s735 = scalar_lea.vmem %s3, %s734
        %p736 = pneg %p148
        %p737 = pneg %p145
        %p738 = scmp.lt.s32.totalorder %s40, 1
        %s739 = scalar_select %p738, %s40, 1
        %s740 = smul.addr %s739, 4
        %s741 = smul.addr %s740, 8
        %s742 = scalar_lea.vmem %s4, %s741
        %p743 = pneg %p174
        %p744 = pneg %p171
        %p745 = scmp.lt.s32.totalorder %s40, 1
        %s746 = scalar_select %p745, %s40, 1
        %s747 = scalar_lea.vmem %s5, %s746
        %p748 = pneg %p200
        %p749 = pneg %p197
        %p750 = scmp.lt.s32.totalorder %s40, 1
        %s751 = scalar_select %p750, %s40, 1
        %s752 = smul.addr %s751, 4
        %s753 = smul.addr %s752, 8
        %s754 = scalar_lea.vmem %s6, %s753
        %p755 = pneg %p226
        %p756 = pneg %p223
        %p757 = scmp.lt.s32.totalorder %s40, 1
        %s758 = scalar_select %p757, %s40, 1
        %s759 = scalar_lea.vmem %s7, %s758
        %p760 = pneg %p252
        %p761 = pneg %p249
        %p762 = scmp.lt.s32.totalorder %s40, 1
        %s763 = scalar_select %p762, %s40, 1
        %s764 = smul.addr %s763, 4
        %s765 = smul.addr %s764, 8
        %s766 = scalar_lea.vmem %s8, %s765
        %p767 = pneg %p278
        %p768 = pneg %p275
        %p769 = scmp.lt.s32.totalorder %s40, 1
        %s770 = scalar_select %p769, %s40, 1
        %s771 = scalar_lea.vmem %s9, %s770
        %p772 = pneg %p304
        %p773 = pneg %p301
        %p774 = scmp.lt.s32.totalorder %s40, 1
        %s775 = scalar_select %p774, %s40, 1
        %s776 = smul.addr %s775, 4
        %s777 = smul.addr %s776, 8
        %s778 = scalar_lea.vmem %s10, %s777
        %p779 = pneg %p330
        %p780 = pneg %p327
        %p781 = scmp.lt.s32.totalorder %s40, 1
        %s782 = scalar_select %p781, %s40, 1
        %s783 = scalar_lea.vmem %s11, %s782
        %p784 = pneg %p356
        %p785 = pneg %p353
        %p786 = scmp.lt.s32.totalorder %s40, 1
        %s787 = scalar_select %p786, %s40, 1
        %s788 = scalar_lea.vmem %s12, %s787
        %p789 = pneg %p382
        %p790 = pneg %p379
        %p791 = scmp.lt.s32.totalorder %s40, 1
        %s792 = scalar_select %p791, %s40, 1
        %s793 = scalar_lea.vmem %s13, %s792
        %p794 = pneg %p408
        %p795 = pneg %p405
        %p796 = scmp.lt.s32.totalorder %s40, 1
        %s797 = scalar_select %p796, %s40, 1
        %s798 = smul.addr %s797, 16
        %s799 = smul.addr %s798, 8
        %s800 = scalar_lea.vmem %s14, %s799
        %p801 = pneg %p434
        %p802 = pneg %p431
        %p803 = scmp.lt.s32.totalorder %s40, 1
        %s804 = scalar_select %p803, %s40, 1
        %s805 = scalar_lea.vmem %s15, %s804
        %p806 = pneg %p460
        %p807 = pneg %p457
        %s808 = sand.u32 %s473, 1
        %s809 = scalar_lea.sflag [#allocation3], %s808
        %s810 = sand.u32 %s473, 1
        %s811 = smul.addr %s810, 32
        %s812 = scalar_lea.vmem [#allocation2], %s811
        %p813 = pneg %p486
        %p814 = pneg %p483
        %p815 = scmp.lt.s32.totalorder %s40, 1
        %s816 = scalar_select %p815, %s40, 1
        %s817 = scalar_lea.vmem %s17, %s816
        %p818 = pneg %p512
        %p819 = pneg %p509
        %p820 = pneg %p538
        %p821 = pneg %p535
        %s822 = sand.u32 %s525, 1
        %s823 = scalar_lea.sflag [#allocation4], %s822
        %s824 = sand.u32 %s525, 1
        %s825 = smul.addr %s824, 8
        %s826 = scalar_lea.vmem [#allocation5], %s825
        %p827 = scmp.lt.s32.totalorder %s39, 1
        %s828 = scalar_select %p827, %s39, 1
        %s829 = smul.addr %s828, 8
        %s830 = scalar_lea.vmem %s0, %s829
        %p831 = scmp.lt.s32.totalorder %s40, 1
        %s832 = scalar_select %p831, %s40, 1
        %p833 = scmp.lt.s32.totalorder %s39, 1
        %s834 = scalar_select %p833, %s39, 1
        %s835 = smul.addr %s832, 2
        %s836 = sadd.s32 %s834, %s835
        %s837 = smul.addr %s836, 8
        %s838 = scalar_lea.vmem %s1, %s837
        %p839 = scmp.lt.s32.totalorder %s40, 1
        %s840 = scalar_select %p839, %s40, 1
        %s841 = scalar_lea.vmem %s2, %s840
        %p842 = scmp.lt.s32.totalorder %s40, 1
        %s843 = scalar_select %p842, %s40, 1
        %s844 = scalar_lea.vmem %s3, %s843
        %p845 = scmp.lt.s32.totalorder %s40, 1
        %s846 = scalar_select %p845, %s40, 1
        %s847 = smul.addr %s846, 4
        %s848 = smul.addr %s847, 8
        %s849 = scalar_lea.vmem %s4, %s848
        %p850 = scmp.lt.s32.totalorder %s40, 1
        %s851 = scalar_select %p850, %s40, 1
        %s852 = scalar_lea.vmem %s5, %s851
        %p853 = scmp.lt.s32.totalorder %s40, 1
        %s854 = scalar_select %p853, %s40, 1
        %s855 = smul.addr %s854, 4
        %s856 = smul.addr %s855, 8
        %s857 = scalar_lea.vmem %s6, %s856
        %p858 = scmp.lt.s32.totalorder %s40, 1
        %s859 = scalar_select %p858, %s40, 1
        %s860 = scalar_lea.vmem %s7, %s859
        %p861 = scmp.lt.s32.totalorder %s40, 1
        %s862 = scalar_select %p861, %s40, 1
        %s863 = smul.addr %s862, 4
        %s864 = smul.addr %s863, 8
        %s865 = scalar_lea.vmem %s8, %s864
        %p866 = scmp.lt.s32.totalorder %s40, 1
        %s867 = scalar_select %p866, %s40, 1
        %s868 = scalar_lea.vmem %s9, %s867
        %p869 = scmp.lt.s32.totalorder %s40, 1
        %s870 = scalar_select %p869, %s40, 1
        %s871 = smul.addr %s870, 4
        %s872 = smul.addr %s871, 8
        %s873 = scalar_lea.vmem %s10, %s872
        %p874 = scmp.lt.s32.totalorder %s40, 1
        %s875 = scalar_select %p874, %s40, 1
        %s876 = scalar_lea.vmem %s11, %s875
        %p877 = scmp.lt.s32.totalorder %s40, 1
        %s878 = scalar_select %p877, %s40, 1
        %s879 = scalar_lea.vmem %s12, %s878
        %p880 = scmp.lt.s32.totalorder %s40, 1
        %s881 = scalar_select %p880, %s40, 1
        %s882 = scalar_lea.vmem %s13, %s881
        %p883 = scmp.lt.s32.totalorder %s40, 1
        %s884 = scalar_select %p883, %s40, 1
        %s885 = smul.addr %s884, 16
        %s886 = smul.addr %s885, 8
        %s887 = scalar_lea.vmem %s14, %s886
        %p888 = scmp.lt.s32.totalorder %s40, 1
        %s889 = scalar_select %p888, %s40, 1
        %s890 = scalar_lea.vmem %s15, %s889
        %p891 = scmp.lt.s32.totalorder %s40, 1
        %s892 = scalar_select %p891, %s40, 1
        %s893 = scalar_lea.vmem %s17, %s892
        %p894 = scmp.eq.s32.totalorder %s40, 0
        // Predicated region
        $region97: #{dpt_multiview_vit_encoder.1} parent=91 // pred_check
          %p895 = pneg %p894
        $region98: #{dpt_multiview_vit_encoder.1} parent=91 // pred_check_branch
          %897 = sbr.rel (%p895) target = $region100
        $region99: #{dpt_multiview_vit_encoder.1} parent=91 // pred_region
          %v898 = vld [vmem:[%s830] sm:$0xff]
          %vm899 = vcmask 261120
          %900 = vst.msk [vmem:[%s826] sm:$0xff] %vm899, %v898
        $region100: #{dpt_multiview_vit_encoder.1} parent=91 // pred_fallthru
          _
        %v901 = vld [vmem:[%s826] sm:$0xff]
        %v902 = vld [vmem:[%s838] sm:$0xff]
        %v903 = vld [vmem:[%s841] sm:$0x1]
        %v904 = vld [vmem:[%s844] sm:$0x1]
        %vm905 = vcmask 261120
        %v906 = vsel %vm905, %v901, 0.0
        %907 = vadd.xlane.f32.xlu0 %v906
        %v908 = vpop.xlane.xlu0 %907
        %v909 = vsel %vm905, %v902, 0.0
        %910 = vadd.xlane.f32.xlu0 %v909
        %v911 = vpop.xlane.xlu0 %910
        %v912 = vrcp.pop 32.0
        %v913 = vmul.f32 %v908, %v912
        %v914 = vmul.f32 %v911, %v912
        %v915 = vsub.f32 %v901, %v913
        %v916 = vsub.f32 %v902, %v914
        %v917 = vmul.f32 %v915, %v915
        %v918 = vmul.f32 %v916, %v916
        %v919 = vsel %vm905, %v917, 0.0
        %920 = vadd.xlane.f32.xlu0 %v919
        %v921 = vpop.xlane.xlu0 %920
        %v922 = vsel %vm905, %v918, 0.0
        %923 = vadd.xlane.f32.xlu0 %v922
        %v924 = vpop.xlane.xlu0 %923
        %v925 = vmul.f32 %v921, %v912
        %v926 = vmul.f32 %v924, %v912
        %v927 = vadd.f32 %v925, 1e-12
        %v928 = vadd.f32 %v926, 1e-12
        %v929 = vrsqrt.pop %v927
        %v930 = vrsqrt.pop %v928
        %v931 = vmul.f32 %v915, %v929
        %v932 = vmul.f32 %v916, %v930
        %v934 = vlaneseq
        %v935 = vshrl.u32 %v934, 7
        %v936 = vsub.s32 0, %v935
        %v937 = vrot.slane %v903, %v936
        %v939 = vmul.f32 %v931, %v937
        %v940 = vmul.f32 %v932, %v937
        %v942 = vlaneseq
        %v943 = vshrl.u32 %v942, 7
        %v944 = vsub.s32 0, %v943
        %v945 = vrot.slane %v904, %v944
        %v947 = vadd.f32 %v939, %v945
        %v948 = vadd.f32 %v940, %v945
        %v949 = vld [vmem:[%s849] sm:$0xff]
        %v950 = vld [vmem:[%s849 + $0x8] sm:$0xff]
        %v951 = vld [vmem:[%s849 + $0x10] sm:$0xff]
        %v952 = vld [vmem:[%s849 + $0x18] sm:$0xff]
        %v953 = vld [vmem:[%s852] sm:$0x1]
        %v955 = vlaneseq
        %v956 = vshrl.u32 %v955, 7
        %v957 = vsub.s32 0, %v956
        %v958 = vrot.slane %v953, %v957
        %v961 = vsel %vm905, %v947, 0
        %v964 = vsel %vm905, %v948, 0
        %v967 = vsel %vm905, %v949, 0
        %v970 = vsel %vm905, %v950, 0
        %v973 = vsel %vm905, %v951, 0
        %v976 = vsel %vm905, %v952, 0
        %978 = vmatprep.subr.mxu0 0.0
        %979 = vmatpush1.xpose.msra.mxu0 0.0
        %980 = vmatprep.subr.mxu0 0.0
        %981 = vmatpush1.xpose.msra.mxu0 0.0
        %982 = vmatprep.subr.mxu0 0.0
        %983 = vmatpush1.xpose.msra.mxu0 0.0
        %984 = vmatprep.subr.mxu0 0.0
        %985 = vmatpush1.xpose.msra.mxu0 0.0
        %986 = vmatprep.subr.mxu0 0.0
        %987 = vmatpush1.xpose.msra.mxu0 0.0
        %988 = vmatprep.subr.mxu0 0.0
        %989 = vmatpush1.xpose.msra.mxu0 0.0
        %990 = vmatprep.subr.mxu0 0.0
        %991 = vmatpush1.xpose.msra.mxu0 0.0
        %992 = vmatprep.subr.mxu0 0.0
        %993 = vmatpush1.xpose.msra.mxu0 0.0
        %994 = vmatprep.subr.mxu0 0.0
        %995 = vmatpush1.xpose.msra.mxu0 0.0
        %996 = vmatprep.subr.mxu0 0.0
        %997 = vmatpush1.xpose.msra.mxu0 0.0
        %998 = vmatprep.subr.mxu0 0.0
        %999 = vmatpush1.xpose.msra.mxu0 0.0
        %1000 = vmatprep.subr.mxu0 0.0
        %1001 = vmatpush1.xpose.msra.mxu0 0.0
        %1002 = vmatprep.subr.mxu0 0.0
        %1003 = vmatpush1.xpose.msra.mxu0 %v976
        %1004 = vmatprep.subr.mxu0 0.0
        %1005 = vmatpush1.xpose.msra.mxu0 %v973
        %1006 = vmatprep.subr.mxu0 0.0
        %1007 = vmatpush1.xpose.msra.mxu0 %v970
        %1008 = vmatprep.subr.mxu0 0.0
        %1009 = vmatpush1.xpose.msra.mxu0 %v967
        %1010 = vmatprep.subr.mxu0 0.0
        %1011 = vmatpush2.xpose.msra.mxu0 0.0
        %1012 = vmatprep.subr.mxu0 0.0
        %1013 = vmatpush2.xpose.msra.mxu0 0.0
        %1014 = vmatprep.subr.mxu0 0.0
        %1015 = vmatpush2.xpose.msra.mxu0 0.0
        %1016 = vmatprep.subr.mxu0 0.0
        %1017 = vmatpush2.xpose.msra.mxu0 0.0
        %1018 = vmatprep.subr.mxu0 0.0
        %1019 = vmatpush2.xpose.msra.mxu0 0.0
        %1020 = vmatprep.subr.mxu0 0.0
        %1021 = vmatpush2.xpose.msra.mxu0 0.0
        %1022 = vmatprep.subr.mxu0 0.0
        %1023 = vmatpush2.xpose.msra.mxu0 0.0
        %1024 = vmatprep.subr.mxu0 0.0
        %1025 = vmatpush2.xpose.msra.mxu0 0.0
        %1026 = vmatprep.subr.mxu0 0.0
        %1027 = vmatpush2.xpose.msra.mxu0 0.0
        %1028 = vmatprep.subr.mxu0 0.0
        %1029 = vmatpush2.xpose.msra.mxu0 0.0
        %1030 = vmatprep.subr.mxu0 0.0
        %1031 = vmatpush2.xpose.msra.mxu0 0.0
        %1032 = vmatprep.subr.mxu0 0.0
        %1033 = vmatpush2.xpose.msra.mxu0 0.0
        %1034 = vmatprep.subr.mxu0 0.0
        %1035 = vmatpush2.xpose.msra.mxu0 0.0
        %1036 = vmatprep.subr.mxu0 0.0
        %1037 = vmatpush2.xpose.msra.mxu0 0.0
        %1038 = vmatprep.subr.mxu0 0.0
        %1039 = vmatpush2.xpose.msra.mxu0 0.0
        %1040 = vmatprep.subr.mxu0 0.0
        %1041 = vmatpush2.xpose.msra.mxu0 0.0
        %1042 = vmatprep.mubr.f32.mxu0 0.0
        %1043 = vmatmul.mubr.f32.gmra.mxu0 %v961
        %v1044 = vpop.f32.mrf.mxu0
        %v1045 = vadd.f32 %v958, %v1044
        %v1046 = vpop.f32.mrf.mxu0
        %1047 = vmatprep.mubr.f32.mxu0 0.0
        %1048 = vmatmul.mubr.f32.gmra.mxu0 %v964
        %v1049 = vpop.f32.mrf.mxu0
        %v1050 = vadd.f32 %v958, %v1049
        %v1051 = vpop.f32.mrf.mxu0
        %1052 = vdwg.mxu0
        %v1053 = vld [vmem:[%s857] sm:$0xff]
        %v1054 = vld [vmem:[%s857 + $0x8] sm:$0xff]
        %v1055 = vld [vmem:[%s857 + $0x10] sm:$0xff]
        %v1056 = vld [vmem:[%s857 + $0x18] sm:$0xff]
        %v1057 = vld [vmem:[%s860] sm:$0x1]
        %v1059 = vlaneseq
        %v1060 = vshrl.u32 %v1059, 7
        %v1061 = vsub.s32 0, %v1060
        %v1062 = vrot.slane %v1057, %v1061
        %v1065 = vsel %vm905, %v1053, 0
        %v1068 = vsel %vm905, %v1054, 0
        %v1071 = vsel %vm905, %v1055, 0
        %v1074 = vsel %vm905, %v1056, 0
        %1076 = vmatprep.subr.mxu0 0.0
        %1077 = vmatpush1.xpose.msra.mxu0 0.0
        %1078 = vmatprep.subr.mxu0 0.0
        %1079 = vmatpush1.xpose.msra.mxu0 0.0
        %1080 = vmatprep.subr.mxu0 0.0
        %1081 = vmatpush1.xpose.msra.mxu0 0.0
        %1082 = vmatprep.subr.mxu0 0.0
        %1083 = vmatpush1.xpose.msra.mxu0 0.0
        %1084 = vmatprep.subr.mxu0 0.0
        %1085 = vmatpush1.xpose.msra.mxu0 0.0
        %1086 = vmatprep.subr.mxu0 0.0
        %1087 = vmatpush1.xpose.msra.mxu0 0.0
        %1088 = vmatprep.subr.mxu0 0.0
        %1089 = vmatpush1.xpose.msra.mxu0 0.0
        %1090 = vmatprep.subr.mxu0 0.0
        %1091 = vmatpush1.xpose.msra.mxu0 0.0
        %1092 = vmatprep.subr.mxu0 0.0
        %1093 = vmatpush1.xpose.msra.mxu0 0.0
        %1094 = vmatprep.subr.mxu0 0.0
        %1095 = vmatpush1.xpose.msra.mxu0 0.0
        %1096 = vmatprep.subr.mxu0 0.0
        %1097 = vmatpush1.xpose.msra.mxu0 0.0
        %1098 = vmatprep.subr.mxu0 0.0
        %1099 = vmatpush1.xpose.msra.mxu0 0.0
        %1100 = vmatprep.subr.mxu0 0.0
        %1101 = vmatpush1.xpose.msra.mxu0 %v1074
        %1102 = vmatprep.subr.mxu0 0.0
        %1103 = vmatpush1.xpose.msra.mxu0 %v1071
        %1104 = vmatprep.subr.mxu0 0.0
        %1105 = vmatpush1.xpose.msra.mxu0 %v1068
        %1106 = vmatprep.subr.mxu0 0.0
        %1107 = vmatpush1.xpose.msra.mxu0 %v1065
        %1108 = vmatprep.subr.mxu0 0.0
        %1109 = vmatpush2.xpose.msra.mxu0 0.0
        %1110 = vmatprep.subr.mxu0 0.0
        %1111 = vmatpush2.xpose.msra.mxu0 0.0
        %1112 = vmatprep.subr.mxu0 0.0
        %1113 = vmatpush2.xpose.msra.mxu0 0.0
        %1114 = vmatprep.subr.mxu0 0.0
        %1115 = vmatpush2.xpose.msra.mxu0 0.0
        %1116 = vmatprep.subr.mxu0 0.0
        %1117 = vmatpush2.xpose.msra.mxu0 0.0
        %1118 = vmatprep.subr.mxu0 0.0
        %1119 = vmatpush2.xpose.msra.mxu0 0.0
        %1120 = vmatprep.subr.mxu0 0.0
        %1121 = vmatpush2.xpose.msra.mxu0 0.0
        %1122 = vmatprep.subr.mxu0 0.0
        %1123 = vmatpush2.xpose.msra.mxu0 0.0
        %1124 = vmatprep.subr.mxu0 0.0
        %1125 = vmatpush2.xpose.msra.mxu0 0.0
        %1126 = vmatprep.subr.mxu0 0.0
        %1127 = vmatpush2.xpose.msra.mxu0 0.0
        %1128 = vmatprep.subr.mxu0 0.0
        %1129 = vmatpush2.xpose.msra.mxu0 0.0
        %1130 = vmatprep.subr.mxu0 0.0
        %1131 = vmatpush2.xpose.msra.mxu0 0.0
        %1132 = vmatprep.subr.mxu0 0.0
        %1133 = vmatpush2.xpose.msra.mxu0 0.0
        %1134 = vmatprep.subr.mxu0 0.0
        %1135 = vmatpush2.xpose.msra.mxu0 0.0
        %1136 = vmatprep.subr.mxu0 0.0
        %1137 = vmatpush2.xpose.msra.mxu0 0.0
        %1138 = vmatprep.subr.mxu0 0.0
        %1139 = vmatpush2.xpose.msra.mxu0 0.0
        %1140 = vmatprep.mubr.f32.mxu0 0.0
        %1141 = vmatmul.mubr.f32.gmra.mxu0 %v961
        %v1142 = vpop.f32.mrf.mxu0
        %v1143 = vadd.f32 %v1062, %v1142
        %v1144 = vpop.f32.mrf.mxu0
        %1145 = vmatprep.mubr.f32.mxu0 0.0
        %1146 = vmatmul.mubr.f32.gmra.mxu0 %v964
        %v1147 = vpop.f32.mrf.mxu0
        %v1148 = vadd.f32 %v1062, %v1147
        %v1149 = vpop.f32.mrf.mxu0
        %1150 = vdwg.mxu0
        %v1151 = vld [vmem:[%s865] sm:$0xff]
        %v1152 = vld [vmem:[%s865 + $0x8] sm:$0xff]
        %v1153 = vld [vmem:[%s865 + $0x10] sm:$0xff]
        %v1154 = vld [vmem:[%s865 + $0x18] sm:$0xff]
        %v1155 = vld [vmem:[%s868] sm:$0x1]
        %v1157 = vlaneseq
        %v1158 = vshrl.u32 %v1157, 7
        %v1159 = vsub.s32 0, %v1158
        %v1160 = vrot.slane %v1155, %v1159
        %v1163 = vsel %vm905, %v1151, 0
        %v1166 = vsel %vm905, %v1152, 0
        %v1169 = vsel %vm905, %v1153, 0
        %v1172 = vsel %vm905, %v1154, 0
        %1174 = vmatprep.subr.mxu0 0.0
        %1175 = vmatpush1.xpose.msra.mxu0 0.0
        %1176 = vmatprep.subr.mxu0 0.0
        %1177 = vmatpush1.xpose.msra.mxu0 0.0
        %1178 = vmatprep.subr.mxu0 0.0
        %1179 = vmatpush1.xpose.msra.mxu0 0.0
        %1180 = vmatprep.subr.mxu0 0.0
        %1181 = vmatpush1.xpose.msra.mxu0 0.0
        %1182 = vmatprep.subr.mxu0 0.0
        %1183 = vmatpush1.xpose.msra.mxu0 0.0
        %1184 = vmatprep.subr.mxu0 0.0
        %1185 = vmatpush1.xpose.msra.mxu0 0.0
        %1186 = vmatprep.subr.mxu0 0.0
        %1187 = vmatpush1.xpose.msra.mxu0 0.0
        %1188 = vmatprep.subr.mxu0 0.0
        %1189 = vmatpush1.xpose.msra.mxu0 0.0
        %1190 = vmatprep.subr.mxu0 0.0
        %1191 = vmatpush1.xpose.msra.mxu0 0.0
        %1192 = vmatprep.subr.mxu0 0.0
        %1193 = vmatpush1.xpose.msra.mxu0 0.0
        %1194 = vmatprep.subr.mxu0 0.0
        %1195 = vmatpush1.xpose.msra.mxu0 0.0
        %1196 = vmatprep.subr.mxu0 0.0
        %1197 = vmatpush1.xpose.msra.mxu0 0.0
        %1198 = vmatprep.subr.mxu0 0.0
        %1199 = vmatpush1.xpose.msra.mxu0 %v1172
        %1200 = vmatprep.subr.mxu0 0.0
        %1201 = vmatpush1.xpose.msra.mxu0 %v1169
        %1202 = vmatprep.subr.mxu0 0.0
        %1203 = vmatpush1.xpose.msra.mxu0 %v1166
        %1204 = vmatprep.subr.mxu0 0.0
        %1205 = vmatpush1.xpose.msra.mxu0 %v1163
        %1206 = vmatprep.subr.mxu0 0.0
        %1207 = vmatpush2.xpose.msra.mxu0 0.0
        %1208 = vmatprep.subr.mxu0 0.0
        %1209 = vmatpush2.xpose.msra.mxu0 0.0
        %1210 = vmatprep.subr.mxu0 0.0
        %1211 = vmatpush2.xpose.msra.mxu0 0.0
        %1212 = vmatprep.subr.mxu0 0.0
        %1213 = vmatpush2.xpose.msra.mxu0 0.0
        %1214 = vmatprep.subr.mxu0 0.0
        %1215 = vmatpush2.xpose.msra.mxu0 0.0
        %1216 = vmatprep.subr.mxu0 0.0
        %1217 = vmatpush2.xpose.msra.mxu0 0.0
        %1218 = vmatprep.subr.mxu0 0.0
        %1219 = vmatpush2.xpose.msra.mxu0 0.0
        %1220 = vmatprep.subr.mxu0 0.0
        %1221 = vmatpush2.xpose.msra.mxu0 0.0
        %1222 = vmatprep.subr.mxu0 0.0
        %1223 = vmatpush2.xpose.msra.mxu0 0.0
        %1224 = vmatprep.subr.mxu0 0.0
        %1225 = vmatpush2.xpose.msra.mxu0 0.0
        %1226 = vmatprep.subr.mxu0 0.0
        %1227 = vmatpush2.xpose.msra.mxu0 0.0
        %1228 = vmatprep.subr.mxu0 0.0
        %1229 = vmatpush2.xpose.msra.mxu0 0.0
        %1230 = vmatprep.subr.mxu0 0.0
        %1231 = vmatpush2.xpose.msra.mxu0 0.0
        %1232 = vmatprep.subr.mxu0 0.0
        %1233 = vmatpush2.xpose.msra.mxu0 0.0
        %1234 = vmatprep.subr.mxu0 0.0
        %1235 = vmatpush2.xpose.msra.mxu0 0.0
        %1236 = vmatprep.subr.mxu0 0.0
        %1237 = vmatpush2.xpose.msra.mxu0 0.0
        %1238 = vmatprep.mubr.f32.mxu0 0.0
        %1239 = vmatmul.mubr.f32.gmra.mxu0 %v961
        %v1240 = vpop.f32.mrf.mxu0
        %v1241 = vadd.f32 %v1160, %v1240
        %v1242 = vpop.f32.mrf.mxu0
        %1243 = vmatprep.mubr.f32.mxu0 0.0
        %1244 = vmatmul.mubr.f32.gmra.mxu0 %v964
        %v1245 = vpop.f32.mrf.mxu0
        %v1246 = vadd.f32 %v1160, %v1245
        %v1247 = vpop.f32.mrf.mxu0
        %1248 = vdwg.mxu0
        %v1249 = vld [vmem:[%s873] sm:$0xff]
        %v1250 = vld [vmem:[%s873 + $0x8] sm:$0xff]
        %v1251 = vld [vmem:[%s873 + $0x10] sm:$0xff]
        %v1252 = vld [vmem:[%s873 + $0x18] sm:$0xff]
        %vm1253 = vcmask 64512
        %v1255 = vsel %vm1253, %v1045, 0
        %v1258 = vsel %vm1253, %v1050, 0
        %v1261 = vsel %vm1253, %v1143, 0
        %v1264 = vsel %vm1253, %v1148, 0
        %1266 = vmatprep.subr.mxu0 0.0
        %1267 = vmatpush1.xpose.msra.mxu0 0.0
        %1268 = vmatprep.subr.mxu0 0.0
        %1269 = vmatpush1.xpose.msra.mxu0 0.0
        %1270 = vmatprep.subr.mxu0 0.0
        %1271 = vmatpush1.xpose.msra.mxu0 0.0
        %1272 = vmatprep.subr.mxu0 0.0
        %1273 = vmatpush1.xpose.msra.mxu0 0.0
        %1274 = vmatprep.subr.mxu0 0.0
        %1275 = vmatpush1.xpose.msra.mxu0 0.0
        %1276 = vmatprep.subr.mxu0 0.0
        %1277 = vmatpush1.xpose.msra.mxu0 0.0
        %1278 = vmatprep.subr.mxu0 0.0
        %1279 = vmatpush1.xpose.msra.mxu0 0.0
        %1280 = vmatprep.subr.mxu0 0.0
        %1281 = vmatpush1.xpose.msra.mxu0 0.0
        %1282 = vmatprep.subr.mxu0 0.0
        %1283 = vmatpush1.xpose.msra.mxu0 0.0
        %1284 = vmatprep.subr.mxu0 0.0
        %1285 = vmatpush1.xpose.msra.mxu0 0.0
        %1286 = vmatprep.subr.mxu0 0.0
        %1287 = vmatpush1.xpose.msra.mxu0 0.0
        %1288 = vmatprep.subr.mxu0 0.0
        %1289 = vmatpush1.xpose.msra.mxu0 0.0
        %1290 = vmatprep.subr.mxu0 0.0
        %1291 = vmatpush1.xpose.msra.mxu0 0.0
        %1292 = vmatprep.subr.mxu0 0.0
        %1293 = vmatpush1.xpose.msra.mxu0 0.0
        %1294 = vmatprep.subr.mxu0 0.0
        %1295 = vmatpush1.xpose.msra.mxu0 %v1264
        %1296 = vmatprep.subr.mxu0 0.0
        %1297 = vmatpush1.xpose.msra.mxu0 %v1261
        %1298 = vmatprep.subr.mxu0 0.0
        %1299 = vmatpush2.xpose.msra.mxu0 0.0
        %1300 = vmatprep.subr.mxu0 0.0
        %1301 = vmatpush2.xpose.msra.mxu0 0.0
        %1302 = vmatprep.subr.mxu0 0.0
        %1303 = vmatpush2.xpose.msra.mxu0 0.0
        %1304 = vmatprep.subr.mxu0 0.0
        %1305 = vmatpush2.xpose.msra.mxu0 0.0
        %1306 = vmatprep.subr.mxu0 0.0
        %1307 = vmatpush2.xpose.msra.mxu0 0.0
        %1308 = vmatprep.subr.mxu0 0.0
        %1309 = vmatpush2.xpose.msra.mxu0 0.0
        %1310 = vmatprep.subr.mxu0 0.0
        %1311 = vmatpush2.xpose.msra.mxu0 0.0
        %1312 = vmatprep.subr.mxu0 0.0
        %1313 = vmatpush2.xpose.msra.mxu0 0.0
        %1314 = vmatprep.subr.mxu0 0.0
        %1315 = vmatpush2.xpose.msra.mxu0 0.0
        %1316 = vmatprep.subr.mxu0 0.0
        %1317 = vmatpush2.xpose.msra.mxu0 0.0
        %1318 = vmatprep.subr.mxu0 0.0
        %1319 = vmatpush2.xpose.msra.mxu0 0.0
        %1320 = vmatprep.subr.mxu0 0.0
        %1321 = vmatpush2.xpose.msra.mxu0 0.0
        %1322 = vmatprep.subr.mxu0 0.0
        %1323 = vmatpush2.xpose.msra.mxu0 0.0
        %1324 = vmatprep.subr.mxu0 0.0
        %1325 = vmatpush2.xpose.msra.mxu0 0.0
        %1326 = vmatprep.subr.mxu0 0.0
        %1327 = vmatpush2.xpose.msra.mxu0 0.0
        %1328 = vmatprep.subr.mxu0 0.0
        %1329 = vmatpush2.xpose.msra.mxu0 0.0
        %1330 = vmatprep.mubr.f32.mxu0 0.0
        %1331 = vmatmul.mubr.f32.gmra.mxu0 %v1255
        %v1332 = vpop.f32.mrf.mxu0
        %v1333 = vadd.f32 0.0, %v1332
        %v1334 = vpop.f32.mrf.mxu0
        %1335 = vmatprep.mubr.f32.mxu0 0.0
        %1336 = vmatmul.mubr.f32.gmra.mxu0 %v1258
        %v1337 = vpop.f32.mrf.mxu0
        %v1338 = vadd.f32 0.0, %v1337
        %v1339 = vpop.f32.mrf.mxu0
        %1340 = vdwg.mxu0
        %v1341 = vmul.f32 %v1333, 0.35355338
        %v1342 = vmul.f32 %v1338, 0.35355338
        %vm1343 = vcmask 130048
        %v1344 = vsel %vm1343, %v1341, -inf
        %1345 = vmax.xlane.f32.xlu0 %v1344
        %v1346 = vpop.xlane.xlu0 %1345
        %v1347 = vsel %vm1343, %v1342, -inf
        %1348 = vmax.xlane.f32.xlu0 %v1347
        %v1349 = vpop.xlane.xlu0 %1348
        %v1350 = vsub.f32 %v1341, %v1346
        %v1351 = vsub.f32 %v1342, %v1349
        %v1352 = vmul.f32 %v1350, 1.442695
        %v1353 = vpow.pop %v1352
        %v1354 = vmul.f32 %v1351, 1.442695
        %v1355 = vpow.pop %v1354
        %v1356 = vsel %vm1343, %v1353, 0.0
        %1357 = vadd.xlane.f32.xlu0 %v1356
        %v1358 = vpop.xlane.xlu0 %1357
        %v1359 = vsel %vm1343, %v1355, 0.0
        %1360 = vadd.xlane.f32.xlu0 %v1359
        %v1361 = vpop.xlane.xlu0 %1360
        %v1362 = vrcp.pop %v1358
        %v1363 = vmul.f32 %v1353, %v1362
        %v1364 = vrcp.pop %v1361
        %v1365 = vmul.f32 %v1355, %v1364
        %v1367 = vsel %vm1343, %v1363, 0
        %v1370 = vsel %vm1343, %v1365, 0
        %1372 = vmatprep.subr.mxu0 0.0
        %1373 = vmatpush1.msra.mxu0 0.0
        %1374 = vmatprep.subr.mxu0 0.0
        %1375 = vmatpush1.msra.mxu0 0.0
        %1376 = vmatprep.subr.mxu0 0.0
        %1377 = vmatpush1.msra.mxu0 0.0
        %1378 = vmatprep.subr.mxu0 0.0
        %1379 = vmatpush1.msra.mxu0 0.0
        %1380 = vmatprep.subr.mxu0 0.0
        %1381 = vmatpush1.msra.mxu0 0.0
        %1382 = vmatprep.subr.mxu0 0.0
        %1383 = vmatpush1.msra.mxu0 0.0
        %1384 = vmatprep.subr.mxu0 0.0
        %1385 = vmatpush1.msra.mxu0 0.0
        %1386 = vmatprep.subr.mxu0 0.0
        %1387 = vmatpush1.msra.mxu0 0.0
        %1388 = vmatprep.subr.mxu0 0.0
        %1389 = vmatpush1.msra.mxu0 0.0
        %1390 = vmatprep.subr.mxu0 0.0
        %1391 = vmatpush1.msra.mxu0 0.0
        %1392 = vmatprep.subr.mxu0 0.0
        %1393 = vmatpush1.msra.mxu0 0.0
        %1394 = vmatprep.subr.mxu0 0.0
        %1395 = vmatpush1.msra.mxu0 0.0
        %1396 = vmatprep.subr.mxu0 0.0
        %1397 = vmatpush1.msra.mxu0 0.0
        %1398 = vmatprep.subr.mxu0 0.0
        %1399 = vmatpush1.msra.mxu0 0.0
        %1400 = vmatprep.subr.mxu0 0.0
        %1401 = vmatpush1.msra.mxu0 %v1246
        %1402 = vmatprep.subr.mxu0 0.0
        %1403 = vmatpush1.msra.mxu0 %v1241
        %1404 = vmatprep.subr.mxu0 0.0
        %1405 = vmatpush2.msra.mxu0 0.0
        %1406 = vmatprep.subr.mxu0 0.0
        %1407 = vmatpush2.msra.mxu0 0.0
        %1408 = vmatprep.subr.mxu0 0.0
        %1409 = vmatpush2.msra.mxu0 0.0
        %1410 = vmatprep.subr.mxu0 0.0
        %1411 = vmatpush2.msra.mxu0 0.0
        %1412 = vmatprep.subr.mxu0 0.0
        %1413 = vmatpush2.msra.mxu0 0.0
        %1414 = vmatprep.subr.mxu0 0.0
        %1415 = vmatpush2.msra.mxu0 0.0
        %1416 = vmatprep.subr.mxu0 0.0
        %1417 = vmatpush2.msra.mxu0 0.0
        %1418 = vmatprep.subr.mxu0 0.0
        %1419 = vmatpush2.msra.mxu0 0.0
        %1420 = vmatprep.subr.mxu0 0.0
        %1421 = vmatpush2.msra.mxu0 0.0
        %1422 = vmatprep.subr.mxu0 0.0
        %1423 = vmatpush2.msra.mxu0 0.0
        %1424 = vmatprep.subr.mxu0 0.0
        %1425 = vmatpush2.msra.mxu0 0.0
        %1426 = vmatprep.subr.mxu0 0.0
        %1427 = vmatpush2.msra.mxu0 0.0
        %1428 = vmatprep.subr.mxu0 0.0
        %1429 = vmatpush2.msra.mxu0 0.0
        %1430 = vmatprep.subr.mxu0 0.0
        %1431 = vmatpush2.msra.mxu0 0.0
        %1432 = vmatprep.subr.mxu0 0.0
        %1433 = vmatpush2.msra.mxu0 0.0
        %1434 = vmatprep.subr.mxu0 0.0
        %1435 = vmatpush2.msra.mxu0 0.0
        %1436 = vmatprep.mubr.f32.mxu0 0.0
        %1437 = vmatmul.mubr.f32.gmra.mxu0 %v1367
        %v1438 = vpop.f32.mrf.mxu0
        %v1439 = vadd.f32 0.0, %v1438
        %v1440 = vpop.f32.mrf.mxu0
        %1441 = vmatprep.mubr.f32.mxu0 0.0
        %1442 = vmatmul.mubr.f32.gmra.mxu0 %v1370
        %v1443 = vpop.f32.mrf.mxu0
        %v1444 = vadd.f32 0.0, %v1443
        %v1445 = vpop.f32.mrf.mxu0
        %1446 = vdwg.mxu0
        %1447 = vrot.lane.b32.xlu0 %v1045, 120
        %v1448 = vpop.permute.xlu0 %1447
        %1449 = vrot.lane.b32.xlu0 %v1050, 120
        %v1450 = vpop.permute.xlu0 %1449
        %1451 = vrot.lane.b32.xlu0 %v1143, 120
        %v1452 = vpop.permute.xlu0 %1451
        %1453 = vrot.lane.b32.xlu0 %v1148, 120
        %v1454 = vpop.permute.xlu0 %1453
        %v1455 = vsel %vm1253, %v1448, 0
        %v1457 = vsel %vm1253, %v1450, 0
        %v1459 = vsel %vm1253, %v1452, 0
        %v1461 = vsel %vm1253, %v1454, 0
        %1463 = vmatprep.subr.mxu0 0.0
        %1464 = vmatpush1.xpose.msra.mxu0 0.0
        %1465 = vmatprep.subr.mxu0 0.0
        %1466 = vmatpush1.xpose.msra.mxu0 0.0
        %1467 = vmatprep.subr.mxu0 0.0
        %1468 = vmatpush1.xpose.msra.mxu0 0.0
        %1469 = vmatprep.subr.mxu0 0.0
        %1470 = vmatpush1.xpose.msra.mxu0 0.0
        %1471 = vmatprep.subr.mxu0 0.0
        %1472 = vmatpush1.xpose.msra.mxu0 0.0
        %1473 = vmatprep.subr.mxu0 0.0
        %1474 = vmatpush1.xpose.msra.mxu0 0.0
        %1475 = vmatprep.subr.mxu0 0.0
        %1476 = vmatpush1.xpose.msra.mxu0 0.0
        %1477 = vmatprep.subr.mxu0 0.0
        %1478 = vmatpush1.xpose.msra.mxu0 0.0
        %1479 = vmatprep.subr.mxu0 0.0
        %1480 = vmatpush1.xpose.msra.mxu0 0.0
        %1481 = vmatprep.subr.mxu0 0.0
        %1482 = vmatpush1.xpose.msra.mxu0 0.0
        %1483 = vmatprep.subr.mxu0 0.0
        %1484 = vmatpush1.xpose.msra.mxu0 0.0
        %1485 = vmatprep.subr.mxu0 0.0
        %1486 = vmatpush1.xpose.msra.mxu0 0.0
        %1487 = vmatprep.subr.mxu0 0.0
        %1488 = vmatpush1.xpose.msra.mxu0 0.0
        %1489 = vmatprep.subr.mxu0 0.0
        %1490 = vmatpush1.xpose.msra.mxu0 0.0
        %1491 = vmatprep.subr.mxu0 0.0
        %1492 = vmatpush1.xpose.msra.mxu0 %v1461
        %1493 = vmatprep.subr.mxu0 0.0
        %1494 = vmatpush1.xpose.msra.mxu0 %v1459
        %1495 = vmatprep.subr.mxu0 0.0
        %1496 = vmatpush2.xpose.msra.mxu0 0.0
        %1497 = vmatprep.subr.mxu0 0.0
        %1498 = vmatpush2.xpose.msra.mxu0 0.0
        %1499 = vmatprep.subr.mxu0 0.0
        %1500 = vmatpush2.xpose.msra.mxu0 0.0
        %1501 = vmatprep.subr.mxu0 0.0
        %1502 = vmatpush2.xpose.msra.mxu0 0.0
        %1503 = vmatprep.subr.mxu0 0.0
        %1504 = vmatpush2.xpose.msra.mxu0 0.0
        %1505 = vmatprep.subr.mxu0 0.0
        %1506 = vmatpush2.xpose.msra.mxu0 0.0
        %1507 = vmatprep.subr.mxu0 0.0
        %1508 = vmatpush2.xpose.msra.mxu0 0.0
        %1509 = vmatprep.subr.mxu0 0.0
        %1510 = vmatpush2.xpose.msra.mxu0 0.0
        %1511 = vmatprep.subr.mxu0 0.0
        %1512 = vmatpush2.xpose.msra.mxu0 0.0
        %1513 = vmatprep.subr.mxu0 0.0
        %1514 = vmatpush2.xpose.msra.mxu0 0.0
        %1515 = vmatprep.subr.mxu0 0.0
        %1516 = vmatpush2.xpose.msra.mxu0 0.0
        %1517 = vmatprep.subr.mxu0 0.0
        %1518 = vmatpush2.xpose.msra.mxu0 0.0
        %1519 = vmatprep.subr.mxu0 0.0
        %1520 = vmatpush2.xpose.msra.mxu0 0.0
        %1521 = vmatprep.subr.mxu0 0.0
        %1522 = vmatpush2.xpose.msra.mxu0 0.0
        %1523 = vmatprep.subr.mxu0 0.0
        %1524 = vmatpush2.xpose.msra.mxu0 0.0
        %1525 = vmatprep.subr.mxu0 0.0
        %1526 = vmatpush2.xpose.msra.mxu0 0.0
        %1527 = vmatprep.mubr.f32.mxu0 0.0
        %1528 = vmatmul.mubr.f32.gmra.mxu0 %v1455
        %v1529 = vpop.f32.mrf.mxu0
        %v1530 = vadd.f32 0.0, %v1529
        %v1531 = vpop.f32.mrf.mxu0
        %1532 = vmatprep.mubr.f32.mxu0 0.0
        %1533 = vmatmul.mubr.f32.gmra.mxu0 %v1457
        %v1534 = vpop.f32.mrf.mxu0
        %v1535 = vadd.f32 0.0, %v1534
        %v1536 = vpop.f32.mrf.mxu0
        %1537 = vdwg.mxu0
        %v1538 = vmul.f32 %v1530, 0.35355338
        %v1539 = vmul.f32 %v1535, 0.35355338
        %v1540 = vsel %vm1343, %v1538, -inf
        %1541 = vmax.xlane.f32.xlu0 %v1540
        %v1542 = vpop.xlane.xlu0 %1541
        %v1543 = vsel %vm1343, %v1539, -inf
        %1544 = vmax.xlane.f32.xlu0 %v1543
        %v1545 = vpop.xlane.xlu0 %1544
        %v1546 = vsub.f32 %v1538, %v1542
        %v1547 = vsub.f32 %v1539, %v1545
        %v1548 = vmul.f32 %v1546, 1.442695
        %v1549 = vpow.pop %v1548
        %v1550 = vmul.f32 %v1547, 1.442695
        %v1551 = vpow.pop %v1550
        %v1552 = vsel %vm1343, %v1549, 0.0
        %1553 = vadd.xlane.f32.xlu0 %v1552
        %v1554 = vpop.xlane.xlu0 %1553
        %v1555 = vsel %vm1343, %v1551, 0.0
        %1556 = vadd.xlane.f32.xlu0 %v1555
        %v1557 = vpop.xlane.xlu0 %1556
        %v1558 = vrcp.pop %v1554
        %v1559 = vmul.f32 %v1549, %v1558
        %v1560 = vrcp.pop %v1557
        %v1561 = vmul.f32 %v1551, %v1560
        %1564 = vrot.lane.b32.xlu0 %v1241, 120
        %v1565 = vpop.permute.xlu0 %1564
        %1566 = vrot.lane.b32.xlu0 %v1246, 120
        %v1567 = vpop.permute.xlu0 %1566
        %v1571 = vsel %vm1343, %v1559, 0
        %v1574 = vsel %vm1343, %v1561, 0
        %1576 = vmatprep.subr.mxu0 0.0
        %1577 = vmatpush1.msra.mxu0 0.0
        %1578 = vmatprep.subr.mxu0 0.0
        %1579 = vmatpush1.msra.mxu0 0.0
        %1580 = vmatprep.subr.mxu0 0.0
        %1581 = vmatpush1.msra.mxu0 0.0
        %1582 = vmatprep.subr.mxu0 0.0
        %1583 = vmatpush1.msra.mxu0 0.0
        %1584 = vmatprep.subr.mxu0 0.0
        %1585 = vmatpush1.msra.mxu0 0.0
        %1586 = vmatprep.subr.mxu0 0.0
        %1587 = vmatpush1.msra.mxu0 0.0
        %1588 = vmatprep.subr.mxu0 0.0
        %1589 = vmatpush1.msra.mxu0 0.0
        %1590 = vmatprep.subr.mxu0 0.0
        %1591 = vmatpush1.msra.mxu0 0.0
        %1592 = vmatprep.subr.mxu0 0.0
        %1593 = vmatpush1.msra.mxu0 0.0
        %1594 = vmatprep.subr.mxu0 0.0
        %1595 = vmatpush1.msra.mxu0 0.0
        %1596 = vmatprep.subr.mxu0 0.0
        %1597 = vmatpush1.msra.mxu0 0.0
        %1598 = vmatprep.subr.mxu0 0.0
        %1599 = vmatpush1.msra.mxu0 0.0
        %1600 = vmatprep.subr.mxu0 0.0
        %1601 = vmatpush1.msra.mxu0 0.0
        %1602 = vmatprep.subr.mxu0 0.0
        %1603 = vmatpush1.msra.mxu0 0.0
        %1604 = vmatprep.subr.mxu0 0.0
        %1605 = vmatpush1.msra.mxu0 %v1567
        %1606 = vmatprep.subr.mxu0 0.0
        %1607 = vmatpush1.msra.mxu0 %v1565
        %1608 = vmatprep.subr.mxu0 0.0
        %1609 = vmatpush2.msra.mxu0 0.0
        %1610 = vmatprep.subr.mxu0 0.0
        %1611 = vmatpush2.msra.mxu0 0.0
        %1612 = vmatprep.subr.mxu0 0.0
        %1613 = vmatpush2.msra.mxu0 0.0
        %1614 = vmatprep.subr.mxu0 0.0
        %1615 = vmatpush2.msra.mxu0 0.0
        %1616 = vmatprep.subr.mxu0 0.0
        %1617 = vmatpush2.msra.mxu0 0.0
        %1618 = vmatprep.subr.mxu0 0.0
        %1619 = vmatpush2.msra.mxu0 0.0
        %1620 = vmatprep.subr.mxu0 0.0
        %1621 = vmatpush2.msra.mxu0 0.0
        %1622 = vmatprep.subr.mxu0 0.0
        %1623 = vmatpush2.msra.mxu0 0.0
        %1624 = vmatprep.subr.mxu0 0.0
        %1625 = vmatpush2.msra.mxu0 0.0
        %1626 = vmatprep.subr.mxu0 0.0
        %1627 = vmatpush2.msra.mxu0 0.0
        %1628 = vmatprep.subr.mxu0 0.0
        %1629 = vmatpush2.msra.mxu0 0.0
        %1630 = vmatprep.subr.mxu0 0.0
        %1631 = vmatpush2.msra.mxu0 0.0
        %1632 = vmatprep.subr.mxu0 0.0
        %1633 = vmatpush2.msra.mxu0 0.0
        %1634 = vmatprep.subr.mxu0 0.0
        %1635 = vmatpush2.msra.mxu0 0.0
        %1636 = vmatprep.subr.mxu0 0.0
        %1637 = vmatpush2.msra.mxu0 0.0
        %1638 = vmatprep.subr.mxu0 0.0
        %1639 = vmatpush2.msra.mxu0 0.0
        %1640 = vmatprep.mubr.f32.mxu0 0.0
        %1641 = vmatmul.mubr.f32.gmra.mxu0 %v1571
        %v1642 = vpop.f32.mrf.mxu0
        %v1643 = vadd.f32 0.0, %v1642
        %v1644 = vpop.f32.mrf.mxu0
        %1645 = vmatprep.mubr.f32.mxu0 0.0
        %1646 = vmatmul.mubr.f32.gmra.mxu0 %v1574
        %v1647 = vpop.f32.mrf.mxu0
        %v1648 = vadd.f32 0.0, %v1647
        %v1649 = vpop.f32.mrf.mxu0
        %1650 = vdwg.mxu0
        %1655 = vrot.lane.b32.xlu0 %v1249, 120
        %v1656 = vpop.permute.xlu0 %1655
        %1657 = vrot.lane.b32.xlu0 %v1250, 120
        %v1658 = vpop.permute.xlu0 %1657
        %1659 = vrot.lane.b32.xlu0 %v1251, 120
        %v1660 = vpop.permute.xlu0 %1659
        %1661 = vrot.lane.b32.xlu0 %v1252, 120
        %v1662 = vpop.permute.xlu0 %1661
        %v1664 = vsel %vm1253, %v1643, 0
        %v1667 = vsel %vm1253, %v1648, 0
        %v1669 = vsel %vm1253, %v1656, 0
        %v1671 = vsel %vm1253, %v1658, 0
        %v1673 = vsel %vm1253, %v1660, 0
        %v1675 = vsel %vm1253, %v1662, 0
        %1677 = vmatprep.subr.mxu0 0.0
        %1678 = vmatpush1.xpose.msra.mxu0 0.0
        %1679 = vmatprep.subr.mxu0 0.0
        %1680 = vmatpush1.xpose.msra.mxu0 0.0
        %1681 = vmatprep.subr.mxu0 0.0
        %1682 = vmatpush1.xpose.msra.mxu0 0.0
        %1683 = vmatprep.subr.mxu0 0.0
        %1684 = vmatpush1.xpose.msra.mxu0 0.0
        %1685 = vmatprep.subr.mxu0 0.0
        %1686 = vmatpush1.xpose.msra.mxu0 0.0
        %1687 = vmatprep.subr.mxu0 0.0
        %1688 = vmatpush1.xpose.msra.mxu0 0.0
        %1689 = vmatprep.subr.mxu0 0.0
        %1690 = vmatpush1.xpose.msra.mxu0 0.0
        %1691 = vmatprep.subr.mxu0 0.0
        %1692 = vmatpush1.xpose.msra.mxu0 0.0
        %1693 = vmatprep.subr.mxu0 0.0
        %1694 = vmatpush1.xpose.msra.mxu0 0.0
        %1695 = vmatprep.subr.mxu0 0.0
        %1696 = vmatpush1.xpose.msra.mxu0 0.0
        %1697 = vmatprep.subr.mxu0 0.0
        %1698 = vmatpush1.xpose.msra.mxu0 0.0
        %1699 = vmatprep.subr.mxu0 0.0
        %1700 = vmatpush1.xpose.msra.mxu0 0.0
        %1701 = vmatprep.subr.mxu0 0.0
        %1702 = vmatpush1.xpose.msra.mxu0 %v1675
        %1703 = vmatprep.subr.mxu0 0.0
        %1704 = vmatpush1.xpose.msra.mxu0 %v1673
        %1705 = vmatprep.subr.mxu0 0.0
        %1706 = vmatpush1.xpose.msra.mxu0 %v1671
        %1707 = vmatprep.subr.mxu0 0.0
        %1708 = vmatpush1.xpose.msra.mxu0 %v1669
        %1709 = vmatprep.subr.mxu0 0.0
        %1710 = vmatpush2.xpose.msra.mxu0 0.0
        %1711 = vmatprep.subr.mxu0 0.0
        %1712 = vmatpush2.xpose.msra.mxu0 0.0
        %1713 = vmatprep.subr.mxu0 0.0
        %1714 = vmatpush2.xpose.msra.mxu0 0.0
        %1715 = vmatprep.subr.mxu0 0.0
        %1716 = vmatpush2.xpose.msra.mxu0 0.0
        %1717 = vmatprep.subr.mxu0 0.0
        %1718 = vmatpush2.xpose.msra.mxu0 0.0
        %1719 = vmatprep.subr.mxu0 0.0
        %1720 = vmatpush2.xpose.msra.mxu0 0.0
        %1721 = vmatprep.subr.mxu0 0.0
        %1722 = vmatpush2.xpose.msra.mxu0 0.0
        %1723 = vmatprep.subr.mxu0 0.0
        %1724 = vmatpush2.xpose.msra.mxu0 0.0
        %1725 = vmatprep.subr.mxu0 0.0
        %1726 = vmatpush2.xpose.msra.mxu0 0.0
        %1727 = vmatprep.subr.mxu0 0.0
        %1728 = vmatpush2.xpose.msra.mxu0 0.0
        %1729 = vmatprep.subr.mxu0 0.0
        %1730 = vmatpush2.xpose.msra.mxu0 0.0
        %1731 = vmatprep.subr.mxu0 0.0
        %1732 = vmatpush2.xpose.msra.mxu0 0.0
        %1733 = vmatprep.subr.mxu0 0.0
        %1734 = vmatpush2.xpose.msra.mxu0 0.0
        %1735 = vmatprep.subr.mxu0 0.0
        %1736 = vmatpush2.xpose.msra.mxu0 0.0
        %1737 = vmatprep.subr.mxu0 0.0
        %1738 = vmatpush2.xpose.msra.mxu0 0.0
        %1739 = vmatprep.subr.mxu0 0.0
        %1740 = vmatpush2.xpose.msra.mxu0 0.0
        %1741 = vmatprep.mubr.f32.mxu0 0.0
        %1742 = vmatmul.mubr.f32.gmra.mxu0 %v1664
        %v1743 = vpop.f32.mrf.mxu0
        %v1744 = vadd.f32 0.0, %v1743
        %v1745 = vpop.f32.mrf.mxu0
        %1746 = vmatprep.mubr.f32.mxu0 0.0
        %1747 = vmatmul.mubr.f32.gmra.mxu0 %v1667
        %v1748 = vpop.f32.mrf.mxu0
        %v1749 = vadd.f32 0.0, %v1748
        %v1750 = vpop.f32.mrf.mxu0
        %1751 = vdwg.mxu0
        %v1753 = vsel %vm1253, %v1439, 0
        %v1756 = vsel %vm1253, %v1444, 0
        %v1758 = vsel %vm1253, %v1249, 0
        %v1760 = vsel %vm1253, %v1250, 0
        %v1762 = vsel %vm1253, %v1251, 0
        %v1764 = vsel %vm1253, %v1252, 0
        %1766 = vmatprep.subr.mxu0 0.0
        %1767 = vmatpush1.xpose.msra.mxu0 0.0
        %1768 = vmatprep.subr.mxu0 0.0
        %1769 = vmatpush1.xpose.msra.mxu0 0.0
        %1770 = vmatprep.subr.mxu0 0.0
        %1771 = vmatpush1.xpose.msra.mxu0 0.0
        %1772 = vmatprep.subr.mxu0 0.0
        %1773 = vmatpush1.xpose.msra.mxu0 0.0
        %1774 = vmatprep.subr.mxu0 0.0
        %1775 = vmatpush1.xpose.msra.mxu0 0.0
        %1776 = vmatprep.subr.mxu0 0.0
        %1777 = vmatpush1.xpose.msra.mxu0 0.0
        %1778 = vmatprep.subr.mxu0 0.0
        %1779 = vmatpush1.xpose.msra.mxu0 0.0
        %1780 = vmatprep.subr.mxu0 0.0
        %1781 = vmatpush1.xpose.msra.mxu0 0.0
        %1782 = vmatprep.subr.mxu0 0.0
        %1783 = vmatpush1.xpose.msra.mxu0 0.0
        %1784 = vmatprep.subr.mxu0 0.0
        %1785 = vmatpush1.xpose.msra.mxu0 0.0
        %1786 = vmatprep.subr.mxu0 0.0
        %1787 = vmatpush1.xpose.msra.mxu0 0.0
        %1788 = vmatprep.subr.mxu0 0.0
        %1789 = vmatpush1.xpose.msra.mxu0 0.0
        %1790 = vmatprep.subr.mxu0 0.0
        %1791 = vmatpush1.xpose.msra.mxu0 %v1764
        %1792 = vmatprep.subr.mxu0 0.0
        %1793 = vmatpush1.xpose.msra.mxu0 %v1762
        %1794 = vmatprep.subr.mxu0 0.0
        %1795 = vmatpush1.xpose.msra.mxu0 %v1760
        %1796 = vmatprep.subr.mxu0 0.0
        %1797 = vmatpush1.xpose.msra.mxu0 %v1758
        %1798 = vmatprep.subr.mxu0 0.0
        %1799 = vmatpush2.xpose.msra.mxu0 0.0
        %1800 = vmatprep.subr.mxu0 0.0
        %1801 = vmatpush2.xpose.msra.mxu0 0.0
        %1802 = vmatprep.subr.mxu0 0.0
        %1803 = vmatpush2.xpose.msra.mxu0 0.0
        %1804 = vmatprep.subr.mxu0 0.0
        %1805 = vmatpush2.xpose.msra.mxu0 0.0
        %1806 = vmatprep.subr.mxu0 0.0
        %1807 = vmatpush2.xpose.msra.mxu0 0.0
        %1808 = vmatprep.subr.mxu0 0.0
        %1809 = vmatpush2.xpose.msra.mxu0 0.0
        %1810 = vmatprep.subr.mxu0 0.0
        %1811 = vmatpush2.xpose.msra.mxu0 0.0
        %1812 = vmatprep.subr.mxu0 0.0
        %1813 = vmatpush2.xpose.msra.mxu0 0.0
        %1814 = vmatprep.subr.mxu0 0.0
        %1815 = vmatpush2.xpose.msra.mxu0 0.0
        %1816 = vmatprep.subr.mxu0 0.0
        %1817 = vmatpush2.xpose.msra.mxu0 0.0
        %1818 = vmatprep.subr.mxu0 0.0
        %1819 = vmatpush2.xpose.msra.mxu0 0.0
        %1820 = vmatprep.subr.mxu0 0.0
        %1821 = vmatpush2.xpose.msra.mxu0 0.0
        %1822 = vmatprep.subr.mxu0 0.0
        %1823 = vmatpush2.xpose.msra.mxu0 0.0
        %1824 = vmatprep.subr.mxu0 0.0
        %1825 = vmatpush2.xpose.msra.mxu0 0.0
        %1826 = vmatprep.subr.mxu0 0.0
        %1827 = vmatpush2.xpose.msra.mxu0 0.0
        %1828 = vmatprep.subr.mxu0 0.0
        %1829 = vmatpush2.xpose.msra.mxu0 0.0
        %1830 = vmatprep.mubr.f32.mxu0 0.0
        %1831 = vmatmul.mubr.f32.gmra.mxu0 %v1753
        %v1832 = vpop.f32.mrf.mxu0
        %v1833 = vadd.f32 %v1744, %v1832
        %v1834 = vpop.f32.mrf.mxu0
        %1835 = vmatprep.mubr.f32.mxu0 0.0
        %1836 = vmatmul.mubr.f32.gmra.mxu0 %v1756
        %v1837 = vpop.f32.mrf.mxu0
        %v1838 = vadd.f32 %v1749, %v1837
        %v1839 = vpop.f32.mrf.mxu0
        %1840 = vdwg.mxu0
        %1841 = vrot.lane.b32.xlu0 %v1045, 112
        %v1842 = vpop.permute.xlu0 %1841
        %1843 = vrot.lane.b32.xlu0 %v1050, 112
        %v1844 = vpop.permute.xlu0 %1843
        %1845 = vrot.lane.b32.xlu0 %v1143, 112
        %v1846 = vpop.permute.xlu0 %1845
        %1847 = vrot.lane.b32.xlu0 %v1148, 112
        %v1848 = vpop.permute.xlu0 %1847
        %v1849 = vsel %vm1253, %v1842, 0
        %v1851 = vsel %vm1253, %v1844, 0
        %v1853 = vsel %vm1253, %v1846, 0
        %v1855 = vsel %vm1253, %v1848, 0
        %1857 = vmatprep.subr.mxu0 0.0
        %1858 = vmatpush1.xpose.msra.mxu0 0.0
        %1859 = vmatprep.subr.mxu0 0.0
        %1860 = vmatpush1.xpose.msra.mxu0 0.0
        %1861 = vmatprep.subr.mxu0 0.0
        %1862 = vmatpush1.xpose.msra.mxu0 0.0
        %1863 = vmatprep.subr.mxu0 0.0
        %1864 = vmatpush1.xpose.msra.mxu0 0.0
        %1865 = vmatprep.subr.mxu0 0.0
        %1866 = vmatpush1.xpose.msra.mxu0 0.0
        %1867 = vmatprep.subr.mxu0 0.0
        %1868 = vmatpush1.xpose.msra.mxu0 0.0
        %1869 = vmatprep.subr.mxu0 0.0
        %1870 = vmatpush1.xpose.msra.mxu0 0.0
        %1871 = vmatprep.subr.mxu0 0.0
        %1872 = vmatpush1.xpose.msra.mxu0 0.0
        %1873 = vmatprep.subr.mxu0 0.0
        %1874 = vmatpush1.xpose.msra.mxu0 0.0
        %1875 = vmatprep.subr.mxu0 0.0
        %1876 = vmatpush1.xpose.msra.mxu0 0.0
        %1877 = vmatprep.subr.mxu0 0.0
        %1878 = vmatpush1.xpose.msra.mxu0 0.0
        %1879 = vmatprep.subr.mxu0 0.0
        %1880 = vmatpush1.xpose.msra.mxu0 0.0
        %1881 = vmatprep.subr.mxu0 0.0
        %1882 = vmatpush1.xpose.msra.mxu0 0.0
        %1883 = vmatprep.subr.mxu0 0.0
        %1884 = vmatpush1.xpose.msra.mxu0 0.0
        %1885 = vmatprep.subr.mxu0 0.0
        %1886 = vmatpush1.xpose.msra.mxu0 %v1855
        %1887 = vmatprep.subr.mxu0 0.0
        %1888 = vmatpush1.xpose.msra.mxu0 %v1853
        %1889 = vmatprep.subr.mxu0 0.0
        %1890 = vmatpush2.xpose.msra.mxu0 0.0
        %1891 = vmatprep.subr.mxu0 0.0
        %1892 = vmatpush2.xpose.msra.mxu0 0.0
        %1893 = vmatprep.subr.mxu0 0.0
        %1894 = vmatpush2.xpose.msra.mxu0 0.0
        %1895 = vmatprep.subr.mxu0 0.0
        %1896 = vmatpush2.xpose.msra.mxu0 0.0
        %1897 = vmatprep.subr.mxu0 0.0
        %1898 = vmatpush2.xpose.msra.mxu0 0.0
        %1899 = vmatprep.subr.mxu0 0.0
        %1900 = vmatpush2.xpose.msra.mxu0 0.0
        %1901 = vmatprep.subr.mxu0 0.0
        %1902 = vmatpush2.xpose.msra.mxu0 0.0
        %1903 = vmatprep.subr.mxu0 0.0
        %1904 = vmatpush2.xpose.msra.mxu0 0.0
        %1905 = vmatprep.subr.mxu0 0.0
        %1906 = vmatpush2.xpose.msra.mxu0 0.0
        %1907 = vmatprep.subr.mxu0 0.0
        %1908 = vmatpush2.xpose.msra.mxu0 0.0
        %1909 = vmatprep.subr.mxu0 0.0
        %1910 = vmatpush2.xpose.msra.mxu0 0.0
        %1911 = vmatprep.subr.mxu0 0.0
        %1912 = vmatpush2.xpose.msra.mxu0 0.0
        %1913 = vmatprep.subr.mxu0 0.0
        %1914 = vmatpush2.xpose.msra.mxu0 0.0
        %1915 = vmatprep.subr.mxu0 0.0
        %1916 = vmatpush2.xpose.msra.mxu0 0.0
        %1917 = vmatprep.subr.mxu0 0.0
        %1918 = vmatpush2.xpose.msra.mxu0 0.0
        %1919 = vmatprep.subr.mxu0 0.0
        %1920 = vmatpush2.xpose.msra.mxu0 0.0
        %1921 = vmatprep.mubr.f32.mxu0 0.0
        %1922 = vmatmul.mubr.f32.gmra.mxu0 %v1849
        %v1923 = vpop.f32.mrf.mxu0
        %v1924 = vadd.f32 0.0, %v1923
        %v1925 = vpop.f32.mrf.mxu0
        %1926 = vmatprep.mubr.f32.mxu0 0.0
        %1927 = vmatmul.mubr.f32.gmra.mxu0 %v1851
        %v1928 = vpop.f32.mrf.mxu0
        %v1929 = vadd.f32 0.0, %v1928
        %v1930 = vpop.f32.mrf.mxu0
        %1931 = vdwg.mxu0
        %v1932 = vmul.f32 %v1924, 0.35355338
        %v1933 = vmul.f32 %v1929, 0.35355338
        %v1934 = vsel %vm1343, %v1932, -inf
        %1935 = vmax.xlane.f32.xlu0 %v1934
        %v1936 = vpop.xlane.xlu0 %1935
        %v1937 = vsel %vm1343, %v1933, -inf
        %1938 = vmax.xlane.f32.xlu0 %v1937
        %v1939 = vpop.xlane.xlu0 %1938
        %v1940 = vsub.f32 %v1932, %v1936
        %v1941 = vsub.f32 %v1933, %v1939
        %v1942 = vmul.f32 %v1940, 1.442695
        %v1943 = vpow.pop %v1942
        %v1944 = vmul.f32 %v1941, 1.442695
        %v1945 = vpow.pop %v1944
        %v1946 = vsel %vm1343, %v1943, 0.0
        %1947 = vadd.xlane.f32.xlu0 %v1946
        %v1948 = vpop.xlane.xlu0 %1947
        %v1949 = vsel %vm1343, %v1945, 0.0
        %1950 = vadd.xlane.f32.xlu0 %v1949
        %v1951 = vpop.xlane.xlu0 %1950
        %v1952 = vrcp.pop %v1948
        %v1953 = vmul.f32 %v1943, %v1952
        %v1954 = vrcp.pop %v1951
        %v1955 = vmul.f32 %v1945, %v1954
        %1956 = vrot.lane.b32.xlu0 %v1241, 112
        %v1957 = vpop.permute.xlu0 %1956
        %1958 = vrot.lane.b32.xlu0 %v1246, 112
        %v1959 = vpop.permute.xlu0 %1958
        %v1963 = vsel %vm1343, %v1953, 0
        %v1966 = vsel %vm1343, %v1955, 0
        %1968 = vmatprep.subr.mxu0 0.0
        %1969 = vmatpush1.msra.mxu0 0.0
        %1970 = vmatprep.subr.mxu0 0.0
        %1971 = vmatpush1.msra.mxu0 0.0
        %1972 = vmatprep.subr.mxu0 0.0
        %1973 = vmatpush1.msra.mxu0 0.0
        %1974 = vmatprep.subr.mxu0 0.0
        %1975 = vmatpush1.msra.mxu0 0.0
        %1976 = vmatprep.subr.mxu0 0.0
        %1977 = vmatpush1.msra.mxu0 0.0
        %1978 = vmatprep.subr.mxu0 0.0
        %1979 = vmatpush1.msra.mxu0 0.0
        %1980 = vmatprep.subr.mxu0 0.0
        %1981 = vmatpush1.msra.mxu0 0.0
        %1982 = vmatprep.subr.mxu0 0.0
        %1983 = vmatpush1.msra.mxu0 0.0
        %1984 = vmatprep.subr.mxu0 0.0
        %1985 = vmatpush1.msra.mxu0 0.0
        %1986 = vmatprep.subr.mxu0 0.0
        %1987 = vmatpush1.msra.mxu0 0.0
        %1988 = vmatprep.subr.mxu0 0.0
        %1989 = vmatpush1.msra.mxu0 0.0
        %1990 = vmatprep.subr.mxu0 0.0
        %1991 = vmatpush1.msra.mxu0 0.0
        %1992 = vmatprep.subr.mxu0 0.0
        %1993 = vmatpush1.msra.mxu0 0.0
        %1994 = vmatprep.subr.mxu0 0.0
        %1995 = vmatpush1.msra.mxu0 0.0
        %1996 = vmatprep.subr.mxu0 0.0
        %1997 = vmatpush1.msra.mxu0 %v1959
        %1998 = vmatprep.subr.mxu0 0.0
        %1999 = vmatpush1.msra.mxu0 %v1957
        %2000 = vmatprep.subr.mxu0 0.0
        %2001 = vmatpush2.msra.mxu0 0.0
        %2002 = vmatprep.subr.mxu0 0.0
        %2003 = vmatpush2.msra.mxu0 0.0
        %2004 = vmatprep.subr.mxu0 0.0
        %2005 = vmatpush2.msra.mxu0 0.0
        %2006 = vmatprep.subr.mxu0 0.0
        %2007 = vmatpush2.msra.mxu0 0.0
        %2008 = vmatprep.subr.mxu0 0.0
        %2009 = vmatpush2.msra.mxu0 0.0
        %2010 = vmatprep.subr.mxu0 0.0
        %2011 = vmatpush2.msra.mxu0 0.0
        %2012 = vmatprep.subr.mxu0 0.0
        %2013 = vmatpush2.msra.mxu0 0.0
        %2014 = vmatprep.subr.mxu0 0.0
        %2015 = vmatpush2.msra.mxu0 0.0
        %2016 = vmatprep.subr.mxu0 0.0
        %2017 = vmatpush2.msra.mxu0 0.0
        %2018 = vmatprep.subr.mxu0 0.0
        %2019 = vmatpush2.msra.mxu0 0.0
        %2020 = vmatprep.subr.mxu0 0.0
        %2021 = vmatpush2.msra.mxu0 0.0
        %2022 = vmatprep.subr.mxu0 0.0
        %2023 = vmatpush2.msra.mxu0 0.0
        %2024 = vmatprep.subr.mxu0 0.0
        %2025 = vmatpush2.msra.mxu0 0.0
        %2026 = vmatprep.subr.mxu0 0.0
        %2027 = vmatpush2.msra.mxu0 0.0
        %2028 = vmatprep.subr.mxu0 0.0
        %2029 = vmatpush2.msra.mxu0 0.0
        %2030 = vmatprep.subr.mxu0 0.0
        %2031 = vmatpush2.msra.mxu0 0.0
        %2032 = vmatprep.mubr.f32.mxu0 0.0
        %2033 = vmatmul.mubr.f32.gmra.mxu0 %v1963
        %v2034 = vpop.f32.mrf.mxu0
        %v2035 = vadd.f32 0.0, %v2034
        %v2036 = vpop.f32.mrf.mxu0
        %2037 = vmatprep.mubr.f32.mxu0 0.0
        %2038 = vmatmul.mubr.f32.gmra.mxu0 %v1966
        %v2039 = vpop.f32.mrf.mxu0
        %v2040 = vadd.f32 0.0, %v2039
        %v2041 = vpop.f32.mrf.mxu0
        %2042 = vdwg.mxu0
        %2043 = vrot.lane.b32.xlu0 %v1249, 112
        %v2044 = vpop.permute.xlu0 %2043
        %2045 = vrot.lane.b32.xlu0 %v1250, 112
        %v2046 = vpop.permute.xlu0 %2045
        %2047 = vrot.lane.b32.xlu0 %v1251, 112
        %v2048 = vpop.permute.xlu0 %2047
        %2049 = vrot.lane.b32.xlu0 %v1252, 112
        %v2050 = vpop.permute.xlu0 %2049
        %v2052 = vsel %vm1253, %v2035, 0
        %v2055 = vsel %vm1253, %v2040, 0
        %v2057 = vsel %vm1253, %v2044, 0
        %v2059 = vsel %vm1253, %v2046, 0
        %v2061 = vsel %vm1253, %v2048, 0
        %v2063 = vsel %vm1253, %v2050, 0
        %2065 = vmatprep.subr.mxu0 0.0
        %2066 = vmatpush1.xpose.msra.mxu0 0.0
        %2067 = vmatprep.subr.mxu0 0.0
        %2068 = vmatpush1.xpose.msra.mxu0 0.0
        %2069 = vmatprep.subr.mxu0 0.0
        %2070 = vmatpush1.xpose.msra.mxu0 0.0
        %2071 = vmatprep.subr.mxu0 0.0
        %2072 = vmatpush1.xpose.msra.mxu0 0.0
        %2073 = vmatprep.subr.mxu0 0.0
        %2074 = vmatpush1.xpose.msra.mxu0 0.0
        %2075 = vmatprep.subr.mxu0 0.0
        %2076 = vmatpush1.xpose.msra.mxu0 0.0
        %2077 = vmatprep.subr.mxu0 0.0
        %2078 = vmatpush1.xpose.msra.mxu0 0.0
        %2079 = vmatprep.subr.mxu0 0.0
        %2080 = vmatpush1.xpose.msra.mxu0 0.0
        %2081 = vmatprep.subr.mxu0 0.0
        %2082 = vmatpush1.xpose.msra.mxu0 0.0
        %2083 = vmatprep.subr.mxu0 0.0
        %2084 = vmatpush1.xpose.msra.mxu0 0.0
        %2085 = vmatprep.subr.mxu0 0.0
        %2086 = vmatpush1.xpose.msra.mxu0 0.0
        %2087 = vmatprep.subr.mxu0 0.0
        %2088 = vmatpush1.xpose.msra.mxu0 0.0
        %2089 = vmatprep.subr.mxu0 0.0
        %2090 = vmatpush1.xpose.msra.mxu0 %v2063
        %2091 = vmatprep.subr.mxu0 0.0
        %2092 = vmatpush1.xpose.msra.mxu0 %v2061
        %2093 = vmatprep.subr.mxu0 0.0
        %2094 = vmatpush1.xpose.msra.mxu0 %v2059
        %2095 = vmatprep.subr.mxu0 0.0
        %2096 = vmatpush1.xpose.msra.mxu0 %v2057
        %2097 = vmatprep.subr.mxu0 0.0
        %2098 = vmatpush2.xpose.msra.mxu0 0.0
        %2099 = vmatprep.subr.mxu0 0.0
        %2100 = vmatpush2.xpose.msra.mxu0 0.0
        %2101 = vmatprep.subr.mxu0 0.0
        %2102 = vmatpush2.xpose.msra.mxu0 0.0
        %2103 = vmatprep.subr.mxu0 0.0
        %2104 = vmatpush2.xpose.msra.mxu0 0.0
        %2105 = vmatprep.subr.mxu0 0.0
        %2106 = vmatpush2.xpose.msra.mxu0 0.0
        %2107 = vmatprep.subr.mxu0 0.0
        %2108 = vmatpush2.xpose.msra.mxu0 0.0
        %2109 = vmatprep.subr.mxu0 0.0
        %2110 = vmatpush2.xpose.msra.mxu0 0.0
        %2111 = vmatprep.subr.mxu0 0.0
        %2112 = vmatpush2.xpose.msra.mxu0 0.0
        %2113 = vmatprep.subr.mxu0 0.0
        %2114 = vmatpush2.xpose.msra.mxu0 0.0
        %2115 = vmatprep.subr.mxu0 0.0
        %2116 = vmatpush2.xpose.msra.mxu0 0.0
        %2117 = vmatprep.subr.mxu0 0.0
        %2118 = vmatpush2.xpose.msra.mxu0 0.0
        %2119 = vmatprep.subr.mxu0 0.0
        %2120 = vmatpush2.xpose.msra.mxu0 0.0
        %2121 = vmatprep.subr.mxu0 0.0
        %2122 = vmatpush2.xpose.msra.mxu0 0.0
        %2123 = vmatprep.subr.mxu0 0.0
        %2124 = vmatpush2.xpose.msra.mxu0 0.0
        %2125 = vmatprep.subr.mxu0 0.0
        %2126 = vmatpush2.xpose.msra.mxu0 0.0
        %2127 = vmatprep.subr.mxu0 0.0
        %2128 = vmatpush2.xpose.msra.mxu0 0.0
        %2129 = vmatprep.mubr.f32.mxu0 0.0
        %2130 = vmatmul.mubr.f32.gmra.mxu0 %v2052
        %v2131 = vpop.f32.mrf.mxu0
        %v2132 = vadd.f32 0.0, %v2131
        %v2133 = vpop.f32.mrf.mxu0
        %2134 = vmatprep.mubr.f32.mxu0 0.0
        %2135 = vmatmul.mubr.f32.gmra.mxu0 %v2055
        %v2136 = vpop.f32.mrf.mxu0
        %v2137 = vadd.f32 0.0, %v2136
        %v2138 = vpop.f32.mrf.mxu0
        %2139 = vdwg.mxu0
        %v2140 = vadd.f32 %v1833, %v2132
        %v2141 = vadd.f32 %v1838, %v2137
        %2142 = vrot.lane.b32.xlu0 %v1045, 104
        %v2143 = vpop.permute.xlu0 %2142
        %2144 = vrot.lane.b32.xlu0 %v1050, 104
        %v2145 = vpop.permute.xlu0 %2144
        %2146 = vrot.lane.b32.xlu0 %v1143, 104
        %v2147 = vpop.permute.xlu0 %2146
        %2148 = vrot.lane.b32.xlu0 %v1148, 104
        %v2149 = vpop.permute.xlu0 %2148
        %v2150 = vsel %vm1253, %v2143, 0
        %v2152 = vsel %vm1253, %v2145, 0
        %v2154 = vsel %vm1253, %v2147, 0
        %v2156 = vsel %vm1253, %v2149, 0
        %2158 = vmatprep.subr.mxu0 0.0
        %2159 = vmatpush1.xpose.msra.mxu0 0.0
        %2160 = vmatprep.subr.mxu0 0.0
        %2161 = vmatpush1.xpose.msra.mxu0 0.0
        %2162 = vmatprep.subr.mxu0 0.0
        %2163 = vmatpush1.xpose.msra.mxu0 0.0
        %2164 = vmatprep.subr.mxu0 0.0
        %2165 = vmatpush1.xpose.msra.mxu0 0.0
        %2166 = vmatprep.subr.mxu0 0.0
        %2167 = vmatpush1.xpose.msra.mxu0 0.0
        %2168 = vmatprep.subr.mxu0 0.0
        %2169 = vmatpush1.xpose.msra.mxu0 0.0
        %2170 = vmatprep.subr.mxu0 0.0
        %2171 = vmatpush1.xpose.msra.mxu0 0.0
        %2172 = vmatprep.subr.mxu0 0.0
        %2173 = vmatpush1.xpose.msra.mxu0 0.0
        %2174 = vmatprep.subr.mxu0 0.0
        %2175 = vmatpush1.xpose.msra.mxu0 0.0
        %2176 = vmatprep.subr.mxu0 0.0
        %2177 = vmatpush1.xpose.msra.mxu0 0.0
        %2178 = vmatprep.subr.mxu0 0.0
        %2179 = vmatpush1.xpose.msra.mxu0 0.0
        %2180 = vmatprep.subr.mxu0 0.0
        %2181 = vmatpush1.xpose.msra.mxu0 0.0
        %2182 = vmatprep.subr.mxu0 0.0
        %2183 = vmatpush1.xpose.msra.mxu0 0.0
        %2184 = vmatprep.subr.mxu0 0.0
        %2185 = vmatpush1.xpose.msra.mxu0 0.0
        %2186 = vmatprep.subr.mxu0 0.0
        %2187 = vmatpush1.xpose.msra.mxu0 %v2156
        %2188 = vmatprep.subr.mxu0 0.0
        %2189 = vmatpush1.xpose.msra.mxu0 %v2154
        %2190 = vmatprep.subr.mxu0 0.0
        %2191 = vmatpush2.xpose.msra.mxu0 0.0
        %2192 = vmatprep.subr.mxu0 0.0
        %2193 = vmatpush2.xpose.msra.mxu0 0.0
        %2194 = vmatprep.subr.mxu0 0.0
        %2195 = vmatpush2.xpose.msra.mxu0 0.0
        %2196 = vmatprep.subr.mxu0 0.0
        %2197 = vmatpush2.xpose.msra.mxu0 0.0
        %2198 = vmatprep.subr.mxu0 0.0
        %2199 = vmatpush2.xpose.msra.mxu0 0.0
        %2200 = vmatprep.subr.mxu0 0.0
        %2201 = vmatpush2.xpose.msra.mxu0 0.0
        %2202 = vmatprep.subr.mxu0 0.0
        %2203 = vmatpush2.xpose.msra.mxu0 0.0
        %2204 = vmatprep.subr.mxu0 0.0
        %2205 = vmatpush2.xpose.msra.mxu0 0.0
        %2206 = vmatprep.subr.mxu0 0.0
        %2207 = vmatpush2.xpose.msra.mxu0 0.0
        %2208 = vmatprep.subr.mxu0 0.0
        %2209 = vmatpush2.xpose.msra.mxu0 0.0
        %2210 = vmatprep.subr.mxu0 0.0
        %2211 = vmatpush2.xpose.msra.mxu0 0.0
        %2212 = vmatprep.subr.mxu0 0.0
        %2213 = vmatpush2.xpose.msra.mxu0 0.0
        %2214 = vmatprep.subr.mxu0 0.0
        %2215 = vmatpush2.xpose.msra.mxu0 0.0
        %2216 = vmatprep.subr.mxu0 0.0
        %2217 = vmatpush2.xpose.msra.mxu0 0.0
        %2218 = vmatprep.subr.mxu0 0.0
        %2219 = vmatpush2.xpose.msra.mxu0 0.0
        %2220 = vmatprep.subr.mxu0 0.0
        %2221 = vmatpush2.xpose.msra.mxu0 0.0
        %2222 = vmatprep.mubr.f32.mxu0 0.0
        %2223 = vmatmul.mubr.f32.gmra.mxu0 %v2150
        %v2224 = vpop.f32.mrf.mxu0
        %v2225 = vadd.f32 0.0, %v2224
        %v2226 = vpop.f32.mrf.mxu0
        %2227 = vmatprep.mubr.f32.mxu0 0.0
        %2228 = vmatmul.mubr.f32.gmra.mxu0 %v2152
        %v2229 = vpop.f32.mrf.mxu0
        %v2230 = vadd.f32 0.0, %v2229
        %v2231 = vpop.f32.mrf.mxu0
        %2232 = vdwg.mxu0
        %v2233 = vmul.f32 %v2225, 0.35355338
        %v2234 = vmul.f32 %v2230, 0.35355338
        %v2235 = vsel %vm1343, %v2233, -inf
        %2236 = vmax.xlane.f32.xlu0 %v2235
        %v2237 = vpop.xlane.xlu0 %2236
        %v2238 = vsel %vm1343, %v2234, -inf
        %2239 = vmax.xlane.f32.xlu0 %v2238
        %v2240 = vpop.xlane.xlu0 %2239
        %v2241 = vsub.f32 %v2233, %v2237
        %v2242 = vsub.f32 %v2234, %v2240
        %v2243 = vmul.f32 %v2241, 1.442695
        %v2244 = vpow.pop %v2243
        %v2245 = vmul.f32 %v2242, 1.442695
        %v2246 = vpow.pop %v2245
        %v2247 = vsel %vm1343, %v2244, 0.0
        %2248 = vadd.xlane.f32.xlu0 %v2247
        %v2249 = vpop.xlane.xlu0 %2248
        %v2250 = vsel %vm1343, %v2246, 0.0
        %2251 = vadd.xlane.f32.xlu0 %v2250
        %v2252 = vpop.xlane.xlu0 %2251
        %v2253 = vrcp.pop %v2249
        %v2254 = vmul.f32 %v2244, %v2253
        %v2255 = vrcp.pop %v2252
        %v2256 = vmul.f32 %v2246, %v2255
        %2257 = vrot.lane.b32.xlu0 %v1241, 104
        %v2258 = vpop.permute.xlu0 %2257
        %2259 = vrot.lane.b32.xlu0 %v1246, 104
        %v2260 = vpop.permute.xlu0 %2259
        %v2264 = vsel %vm1343, %v2254, 0
        %v2267 = vsel %vm1343, %v2256, 0
        %2269 = vmatprep.subr.mxu0 0.0
        %2270 = vmatpush1.msra.mxu0 0.0
        %2271 = vmatprep.subr.mxu0 0.0
        %2272 = vmatpush1.msra.mxu0 0.0
        %2273 = vmatprep.subr.mxu0 0.0
        %2274 = vmatpush1.msra.mxu0 0.0
        %2275 = vmatprep.subr.mxu0 0.0
        %2276 = vmatpush1.msra.mxu0 0.0
        %2277 = vmatprep.subr.mxu0 0.0
        %2278 = vmatpush1.msra.mxu0 0.0
        %2279 = vmatprep.subr.mxu0 0.0
        %2280 = vmatpush1.msra.mxu0 0.0
        %2281 = vmatprep.subr.mxu0 0.0
        %2282 = vmatpush1.msra.mxu0 0.0
        %2283 = vmatprep.subr.mxu0 0.0
        %2284 = vmatpush1.msra.mxu0 0.0
        %2285 = vmatprep.subr.mxu0 0.0
        %2286 = vmatpush1.msra.mxu0 0.0
        %2287 = vmatprep.subr.mxu0 0.0
        %2288 = vmatpush1.msra.mxu0 0.0
        %2289 = vmatprep.subr.mxu0 0.0
        %2290 = vmatpush1.msra.mxu0 0.0
        %2291 = vmatprep.subr.mxu0 0.0
        %2292 = vmatpush1.msra.mxu0 0.0
        %2293 = vmatprep.subr.mxu0 0.0
        %2294 = vmatpush1.msra.mxu0 0.0
        %2295 = vmatprep.subr.mxu0 0.0
        %2296 = vmatpush1.msra.mxu0 0.0
        %2297 = vmatprep.subr.mxu0 0.0
        %2298 = vmatpush1.msra.mxu0 %v2260
        %2299 = vmatprep.subr.mxu0 0.0
        %2300 = vmatpush1.msra.mxu0 %v2258
        %2301 = vmatprep.subr.mxu0 0.0
        %2302 = vmatpush2.msra.mxu0 0.0
        %2303 = vmatprep.subr.mxu0 0.0
        %2304 = vmatpush2.msra.mxu0 0.0
        %2305 = vmatprep.subr.mxu0 0.0
        %2306 = vmatpush2.msra.mxu0 0.0
        %2307 = vmatprep.subr.mxu0 0.0
        %2308 = vmatpush2.msra.mxu0 0.0
        %2309 = vmatprep.subr.mxu0 0.0
        %2310 = vmatpush2.msra.mxu0 0.0
        %2311 = vmatprep.subr.mxu0 0.0
        %2312 = vmatpush2.msra.mxu0 0.0
        %2313 = vmatprep.subr.mxu0 0.0
        %2314 = vmatpush2.msra.mxu0 0.0
        %2315 = vmatprep.subr.mxu0 0.0
        %2316 = vmatpush2.msra.mxu0 0.0
        %2317 = vmatprep.subr.mxu0 0.0
        %2318 = vmatpush2.msra.mxu0 0.0
        %2319 = vmatprep.subr.mxu0 0.0
        %2320 = vmatpush2.msra.mxu0 0.0
        %2321 = vmatprep.subr.mxu0 0.0
        %2322 = vmatpush2.msra.mxu0 0.0
        %2323 = vmatprep.subr.mxu0 0.0
        %2324 = vmatpush2.msra.mxu0 0.0
        %2325 = vmatprep.subr.mxu0 0.0
        %2326 = vmatpush2.msra.mxu0 0.0
        %2327 = vmatprep.subr.mxu0 0.0
        %2328 = vmatpush2.msra.mxu0 0.0
        %2329 = vmatprep.subr.mxu0 0.0
        %2330 = vmatpush2.msra.mxu0 0.0
        %2331 = vmatprep.subr.mxu0 0.0
        %2332 = vmatpush2.msra.mxu0 0.0
        %2333 = vmatprep.mubr.f32.mxu0 0.0
        %2334 = vmatmul.mubr.f32.gmra.mxu0 %v2264
        %v2335 = vpop.f32.mrf.mxu0
        %v2336 = vadd.f32 0.0, %v2335
        %v2337 = vpop.f32.mrf.mxu0
        %2338 = vmatprep.mubr.f32.mxu0 0.0
        %2339 = vmatmul.mubr.f32.gmra.mxu0 %v2267
        %v2340 = vpop.f32.mrf.mxu0
        %v2341 = vadd.f32 0.0, %v2340
        %v2342 = vpop.f32.mrf.mxu0
        %2343 = vdwg.mxu0
        %2344 = vrot.lane.b32.xlu0 %v1249, 104
        %v2345 = vpop.permute.xlu0 %2344
        %2346 = vrot.lane.b32.xlu0 %v1250, 104
        %v2347 = vpop.permute.xlu0 %2346
        %2348 = vrot.lane.b32.xlu0 %v1251, 104
        %v2349 = vpop.permute.xlu0 %2348
        %2350 = vrot.lane.b32.xlu0 %v1252, 104
        %v2351 = vpop.permute.xlu0 %2350
        %v2353 = vsel %vm1253, %v2336, 0
        %v2356 = vsel %vm1253, %v2341, 0
        %v2358 = vsel %vm1253, %v2345, 0
        %v2360 = vsel %vm1253, %v2347, 0
        %v2362 = vsel %vm1253, %v2349, 0
        %v2364 = vsel %vm1253, %v2351, 0
        %2366 = vmatprep.subr.mxu0 0.0
        %2367 = vmatpush1.xpose.msra.mxu0 0.0
        %2368 = vmatprep.subr.mxu0 0.0
        %2369 = vmatpush1.xpose.msra.mxu0 0.0
        %2370 = vmatprep.subr.mxu0 0.0
        %2371 = vmatpush1.xpose.msra.mxu0 0.0
        %2372 = vmatprep.subr.mxu0 0.0
        %2373 = vmatpush1.xpose.msra.mxu0 0.0
        %2374 = vmatprep.subr.mxu0 0.0
        %2375 = vmatpush1.xpose.msra.mxu0 0.0
        %2376 = vmatprep.subr.mxu0 0.0
        %2377 = vmatpush1.xpose.msra.mxu0 0.0
        %2378 = vmatprep.subr.mxu0 0.0
        %2379 = vmatpush1.xpose.msra.mxu0 0.0
        %2380 = vmatprep.subr.mxu0 0.0
        %2381 = vmatpush1.xpose.msra.mxu0 0.0
        %2382 = vmatprep.subr.mxu0 0.0
        %2383 = vmatpush1.xpose.msra.mxu0 0.0
        %2384 = vmatprep.subr.mxu0 0.0
        %2385 = vmatpush1.xpose.msra.mxu0 0.0
        %2386 = vmatprep.subr.mxu0 0.0
        %2387 = vmatpush1.xpose.msra.mxu0 0.0
        %2388 = vmatprep.subr.mxu0 0.0
        %2389 = vmatpush1.xpose.msra.mxu0 0.0
        %2390 = vmatprep.subr.mxu0 0.0
        %2391 = vmatpush1.xpose.msra.mxu0 %v2364
        %2392 = vmatprep.subr.mxu0 0.0
        %2393 = vmatpush1.xpose.msra.mxu0 %v2362
        %2394 = vmatprep.subr.mxu0 0.0
        %2395 = vmatpush1.xpose.msra.mxu0 %v2360
        %2396 = vmatprep.subr.mxu0 0.0
        %2397 = vmatpush1.xpose.msra.mxu0 %v2358
        %2398 = vmatprep.subr.mxu0 0.0
        %2399 = vmatpush2.xpose.msra.mxu0 0.0
        %2400 = vmatprep.subr.mxu0 0.0
        %2401 = vmatpush2.xpose.msra.mxu0 0.0
        %2402 = vmatprep.subr.mxu0 0.0
        %2403 = vmatpush2.xpose.msra.mxu0 0.0
        %2404 = vmatprep.subr.mxu0 0.0
        %2405 = vmatpush2.xpose.msra.mxu0 0.0
        %2406 = vmatprep.subr.mxu0 0.0
        %2407 = vmatpush2.xpose.msra.mxu0 0.0
        %2408 = vmatprep.subr.mxu0 0.0
        %2409 = vmatpush2.xpose.msra.mxu0 0.0
        %2410 = vmatprep.subr.mxu0 0.0
        %2411 = vmatpush2.xpose.msra.mxu0 0.0
        %2412 = vmatprep.subr.mxu0 0.0
        %2413 = vmatpush2.xpose.msra.mxu0 0.0
        %2414 = vmatprep.subr.mxu0 0.0
        %2415 = vmatpush2.xpose.msra.mxu0 0.0
        %2416 = vmatprep.subr.mxu0 0.0
        %2417 = vmatpush2.xpose.msra.mxu0 0.0
        %2418 = vmatprep.subr.mxu0 0.0
        %2419 = vmatpush2.xpose.msra.mxu0 0.0
        %2420 = vmatprep.subr.mxu0 0.0
        %2421 = vmatpush2.xpose.msra.mxu0 0.0
        %2422 = vmatprep.subr.mxu0 0.0
        %2423 = vmatpush2.xpose.msra.mxu0 0.0
        %2424 = vmatprep.subr.mxu0 0.0
        %2425 = vmatpush2.xpose.msra.mxu0 0.0
        %2426 = vmatprep.subr.mxu0 0.0
        %2427 = vmatpush2.xpose.msra.mxu0 0.0
        %2428 = vmatprep.subr.mxu0 0.0
        %2429 = vmatpush2.xpose.msra.mxu0 0.0
        %2430 = vmatprep.mubr.f32.mxu0 0.0
        %2431 = vmatmul.mubr.f32.gmra.mxu0 %v2353
        %v2432 = vpop.f32.mrf.mxu0
        %v2433 = vadd.f32 0.0, %v2432
        %v2434 = vpop.f32.mrf.mxu0
        %2435 = vmatprep.mubr.f32.mxu0 0.0
        %2436 = vmatmul.mubr.f32.gmra.mxu0 %v2356
        %v2437 = vpop.f32.mrf.mxu0
        %v2438 = vadd.f32 0.0, %v2437
        %v2439 = vpop.f32.mrf.mxu0
        %2440 = vdwg.mxu0
        %v2441 = vadd.f32 %v2140, %v2433
        %v2442 = vadd.f32 %v2141, %v2438
        %v2443 = vadd.f32 %v901, %v2441
        %v2444 = vadd.f32 %v902, %v2442
        %v2445 = vld [vmem:[%s876] sm:$0x1]
        %v2447 = vlaneseq
        %v2448 = vshrl.u32 %v2447, 7
        %v2449 = vsub.s32 0, %v2448
        %v2450 = vrot.slane %v2445, %v2449
        %v2452 = vadd.f32 %v2443, %v2450
        %v2453 = vadd.f32 %v2444, %v2450
        %v2454 = vld [vmem:[%s879] sm:$0x1]
        %v2455 = vld [vmem:[%s882] sm:$0x1]
        %v2456 = vsel %vm905, %v2452, 0.0
        %2457 = vadd.xlane.f32.xlu0 %v2456
        %v2458 = vpop.xlane.xlu0 %2457
        %v2459 = vsel %vm905, %v2453, 0.0
        %2460 = vadd.xlane.f32.xlu0 %v2459
        %v2461 = vpop.xlane.xlu0 %2460
        %v2462 = vmul.f32 %v2458, %v912
        %v2463 = vmul.f32 %v2461, %v912
        %v2464 = vsub.f32 %v2452, %v2462
        %v2465 = vsub.f32 %v2453, %v2463
        %v2466 = vmul.f32 %v2464, %v2464
        %v2467 = vmul.f32 %v2465, %v2465
        %v2468 = vsel %vm905, %v2466, 0.0
        %2469 = vadd.xlane.f32.xlu0 %v2468
        %v2470 = vpop.xlane.xlu0 %2469
        %v2471 = vsel %vm905, %v2467, 0.0
        %2472 = vadd.xlane.f32.xlu0 %v2471
        %v2473 = vpop.xlane.xlu0 %2472
        %v2474 = vmul.f32 %v2470, %v912
        %v2475 = vmul.f32 %v2473, %v912
        %v2476 = vadd.f32 %v2474, 1e-12
        %v2477 = vadd.f32 %v2475, 1e-12
        %v2478 = vrsqrt.pop %v2476
        %v2479 = vrsqrt.pop %v2477
        %v2480 = vmul.f32 %v2464, %v2478
        %v2481 = vmul.f32 %v2465, %v2479
        %v2483 = vlaneseq
        %v2484 = vshrl.u32 %v2483, 7
        %v2485 = vsub.s32 0, %v2484
        %v2486 = vrot.slane %v2454, %v2485
        %v2488 = vmul.f32 %v2480, %v2486
        %v2489 = vmul.f32 %v2481, %v2486
        %v2491 = vlaneseq
        %v2492 = vshrl.u32 %v2491, 7
        %v2493 = vsub.s32 0, %v2492
        %v2494 = vrot.slane %v2455, %v2493
        %v2496 = vadd.f32 %v2488, %v2494
        %v2497 = vadd.f32 %v2489, %v2494
        %v2498 = vld [vmem:[%s887] sm:$0xff]
        %v2499 = vld [vmem:[%s887 + $0x8] sm:$0xff]
        %v2500 = vld [vmem:[%s887 + $0x10] sm:$0xff]
        %v2501 = vld [vmem:[%s887 + $0x18] sm:$0xff]
        %v2502 = vld [vmem:[%s887 + $0x20] sm:$0xff]
        %v2503 = vld [vmem:[%s887 + $0x28] sm:$0xff]
        %v2504 = vld [vmem:[%s887 + $0x30] sm:$0xff]
        %v2505 = vld [vmem:[%s887 + $0x38] sm:$0xff]
        %v2506 = vld [vmem:[%s887 + $0x40] sm:$0xff]
        %v2507 = vld [vmem:[%s887 + $0x48] sm:$0xff]
        %v2508 = vld [vmem:[%s887 + $0x50] sm:$0xff]
        %v2509 = vld [vmem:[%s887 + $0x58] sm:$0xff]
        %v2510 = vld [vmem:[%s887 + $0x60] sm:$0xff]
        %v2511 = vld [vmem:[%s887 + $0x68] sm:$0xff]
        %v2512 = vld [vmem:[%s887 + $0x70] sm:$0xff]
        %v2513 = vld [vmem:[%s887 + $0x78] sm:$0xff]
        %v2514 = vld [vmem:[%s890] sm:$0x1]
        %v2516 = vlaneseq
        %v2517 = vshrl.u32 %v2516, 7
        %v2518 = vsub.s32 0, %v2517
        %v2519 = vrot.slane %v2514, %v2518
        %v2522 = vsel %vm905, %v2496, 0
        %v2525 = vsel %vm905, %v2497, 0
        %v2528 = vsel %vm905, %v2498, 0
        %v2531 = vsel %vm905, %v2499, 0
        %v2534 = vsel %vm905, %v2500, 0
        %v2537 = vsel %vm905, %v2501, 0
        %v2540 = vsel %vm905, %v2502, 0
        %v2543 = vsel %vm905, %v2503, 0
        %v2546 = vsel %vm905, %v2504, 0
        %v2549 = vsel %vm905, %v2505, 0
        %v2552 = vsel %vm905, %v2506, 0
        %v2555 = vsel %vm905, %v2507, 0
        %v2558 = vsel %vm905, %v2508, 0
        %v2561 = vsel %vm905, %v2509, 0
        %v2564 = vsel %vm905, %v2510, 0
        %v2567 = vsel %vm905, %v2511, 0
        %v2570 = vsel %vm905, %v2512, 0
        %v2573 = vsel %vm905, %v2513, 0
        %2575 = vmatprep.subr.mxu0 0.0
        %2576 = vmatpush1.xpose.msra.mxu0 %v2573
        %2577 = vmatprep.subr.mxu0 0.0
        %2578 = vmatpush1.xpose.msra.mxu0 %v2570
        %2579 = vmatprep.subr.mxu0 0.0
        %2580 = vmatpush1.xpose.msra.mxu0 %v2567
        %2581 = vmatprep.subr.mxu0 0.0
        %2582 = vmatpush1.xpose.msra.mxu0 %v2564
        %2583 = vmatprep.subr.mxu0 0.0
        %2584 = vmatpush1.xpose.msra.mxu0 %v2561
        %2585 = vmatprep.subr.mxu0 0.0
        %2586 = vmatpush1.xpose.msra.mxu0 %v2558
        %2587 = vmatprep.subr.mxu0 0.0
        %2588 = vmatpush1.xpose.msra.mxu0 %v2555
        %2589 = vmatprep.subr.mxu0 0.0
        %2590 = vmatpush1.xpose.msra.mxu0 %v2552
        %2591 = vmatprep.subr.mxu0 0.0
        %2592 = vmatpush1.xpose.msra.mxu0 %v2549
        %2593 = vmatprep.subr.mxu0 0.0
        %2594 = vmatpush1.xpose.msra.mxu0 %v2546
        %2595 = vmatprep.subr.mxu0 0.0
        %2596 = vmatpush1.xpose.msra.mxu0 %v2543
        %2597 = vmatprep.subr.mxu0 0.0
        %2598 = vmatpush1.xpose.msra.mxu0 %v2540
        %2599 = vmatprep.subr.mxu0 0.0
        %2600 = vmatpush1.xpose.msra.mxu0 %v2537
        %2601 = vmatprep.subr.mxu0 0.0
        %2602 = vmatpush1.xpose.msra.mxu0 %v2534
        %2603 = vmatprep.subr.mxu0 0.0
        %2604 = vmatpush1.xpose.msra.mxu0 %v2531
        %2605 = vmatprep.subr.mxu0 0.0
        %2606 = vmatpush1.xpose.msra.mxu0 %v2528
        %2607 = vmatprep.subr.mxu0 0.0
        %2608 = vmatpush2.xpose.msra.mxu0 0.0
        %2609 = vmatprep.subr.mxu0 0.0
        %2610 = vmatpush2.xpose.msra.mxu0 0.0
        %2611 = vmatprep.subr.mxu0 0.0
        %2612 = vmatpush2.xpose.msra.mxu0 0.0
        %2613 = vmatprep.subr.mxu0 0.0
        %2614 = vmatpush2.xpose.msra.mxu0 0.0
        %2615 = vmatprep.subr.mxu0 0.0
        %2616 = vmatpush2.xpose.msra.mxu0 0.0
        %2617 = vmatprep.subr.mxu0 0.0
        %2618 = vmatpush2.xpose.msra.mxu0 0.0
        %2619 = vmatprep.subr.mxu0 0.0
        %2620 = vmatpush2.xpose.msra.mxu0 0.0
        %2621 = vmatprep.subr.mxu0 0.0
        %2622 = vmatpush2.xpose.msra.mxu0 0.0
        %2623 = vmatprep.subr.mxu0 0.0
        %2624 = vmatpush2.xpose.msra.mxu0 0.0
        %2625 = vmatprep.subr.mxu0 0.0
        %2626 = vmatpush2.xpose.msra.mxu0 0.0
        %2627 = vmatprep.subr.mxu0 0.0
        %2628 = vmatpush2.xpose.msra.mxu0 0.0
        %2629 = vmatprep.subr.mxu0 0.0
        %2630 = vmatpush2.xpose.msra.mxu0 0.0
        %2631 = vmatprep.subr.mxu0 0.0
        %2632 = vmatpush2.xpose.msra.mxu0 0.0
        %2633 = vmatprep.subr.mxu0 0.0
        %2634 = vmatpush2.xpose.msra.mxu0 0.0
        %2635 = vmatprep.subr.mxu0 0.0
        %2636 = vmatpush2.xpose.msra.mxu0 0.0
        %2637 = vmatprep.subr.mxu0 0.0
        %2638 = vmatpush2.xpose.msra.mxu0 0.0
        %2639 = vmatprep.mubr.f32.mxu0 0.0
        %2640 = vmatmul.mubr.f32.gmra.mxu0 %v2522
        %v2641 = vpop.f32.mrf.mxu0
        %v2642 = vadd.f32 %v2519, %v2641
        %v2643 = vpop.f32.mrf.mxu0
        %2644 = vmatprep.mubr.f32.mxu0 0.0
        %2645 = vmatmul.mubr.f32.gmra.mxu0 %v2525
        %v2646 = vpop.f32.mrf.mxu0
        %v2647 = vadd.f32 %v2519, %v2646
        %v2648 = vpop.f32.mrf.mxu0
        %2649 = vdwg.mxu0
        %v2650 = vmul.f32 %v2642, %v2642
        %v2651 = vmul.f32 %v2647, %v2647
        %v2652 = vmul.f32 %v2642, %v2650
        %v2653 = vmul.f32 %v2647, %v2651
        %v2654 = vmul.f32 %v2652, 0.044715
        %v2655 = vmul.f32 %v2653, 0.044715
        %v2656 = vadd.f32 %v2642, %v2654
        %v2657 = vadd.f32 %v2647, %v2655
        %v2658 = vmul.f32 %v2656, 0.7978846
        %v2659 = vmul.f32 %v2657, 0.7978846
        %v2660 = vtanh.pop %v2658
        %v2661 = vtanh.pop %v2659
        %v2662 = vadd.f32 %v2660, 1.0
        %v2663 = vadd.f32 %v2661, 1.0
        %v2664 = vmul.f32 %v2662, 0.5
        %v2665 = vmul.f32 %v2663, 0.5
        %v2666 = vmul.f32 %v2642, %v2664
        %v2667 = vmul.f32 %v2647, %v2665
        %v2668 = vld [vmem:[%s707] sm:$0xff]
        %v2669 = vld [vmem:[%s707 + $0x8] sm:$0xff]
        %v2670 = vld [vmem:[%s707 + $0x10] sm:$0xff]
        %v2671 = vld [vmem:[%s707 + $0x18] sm:$0xff]
        %v2672 = vld [vmem:[%s893] sm:$0x1]
        %v2674 = vlaneseq
        %v2675 = vshrl.u32 %v2674, 7
        %v2676 = vsub.s32 0, %v2675
        %v2677 = vrot.slane %v2672, %v2676
        %2679 = vmatprep.subr.mxu0 0.0
        %2680 = vmatpush1.xpose.msra.mxu0 0.0
        %2681 = vmatprep.subr.mxu0 0.0
        %2682 = vmatpush1.xpose.msra.mxu0 0.0
        %2683 = vmatprep.subr.mxu0 0.0
        %2684 = vmatpush1.xpose.msra.mxu0 0.0
        %2685 = vmatprep.subr.mxu0 0.0
        %2686 = vmatpush1.xpose.msra.mxu0 0.0
        %2687 = vmatprep.subr.mxu0 0.0
        %2688 = vmatpush1.xpose.msra.mxu0 0.0
        %2689 = vmatprep.subr.mxu0 0.0
        %2690 = vmatpush1.xpose.msra.mxu0 0.0
        %2691 = vmatprep.subr.mxu0 0.0
        %2692 = vmatpush1.xpose.msra.mxu0 0.0
        %2693 = vmatprep.subr.mxu0 0.0
        %2694 = vmatpush1.xpose.msra.mxu0 0.0
        %2695 = vmatprep.subr.mxu0 0.0
        %2696 = vmatpush1.xpose.msra.mxu0 0.0
        %2697 = vmatprep.subr.mxu0 0.0
        %2698 = vmatpush1.xpose.msra.mxu0 0.0
        %2699 = vmatprep.subr.mxu0 0.0
        %2700 = vmatpush1.xpose.msra.mxu0 0.0
        %2701 = vmatprep.subr.mxu0 0.0
        %2702 = vmatpush1.xpose.msra.mxu0 0.0
        %2703 = vmatprep.subr.mxu0 0.0
        %2704 = vmatpush1.xpose.msra.mxu0 %v2671
        %2705 = vmatprep.subr.mxu0 0.0
        %2706 = vmatpush1.xpose.msra.mxu0 %v2670
        %2707 = vmatprep.subr.mxu0 0.0
        %2708 = vmatpush1.xpose.msra.mxu0 %v2669
        %2709 = vmatprep.subr.mxu0 0.0
        %2710 = vmatpush1.xpose.msra.mxu0 %v2668
        %2711 = vmatprep.subr.mxu0 0.0
        %2712 = vmatpush2.xpose.msra.mxu0 0.0
        %2713 = vmatprep.subr.mxu0 0.0
        %2714 = vmatpush2.xpose.msra.mxu0 0.0
        %2715 = vmatprep.subr.mxu0 0.0
        %2716 = vmatpush2.xpose.msra.mxu0 0.0
        %2717 = vmatprep.subr.mxu0 0.0
        %2718 = vmatpush2.xpose.msra.mxu0 0.0
        %2719 = vmatprep.subr.mxu0 0.0
        %2720 = vmatpush2.xpose.msra.mxu0 0.0
        %2721 = vmatprep.subr.mxu0 0.0
        %2722 = vmatpush2.xpose.msra.mxu0 0.0
        %2723 = vmatprep.subr.mxu0 0.0
        %2724 = vmatpush2.xpose.msra.mxu0 0.0
        %2725 = vmatprep.subr.mxu0 0.0
        %2726 = vmatpush2.xpose.msra.mxu0 0.0
        %2727 = vmatprep.subr.mxu0 0.0
        %2728 = vmatpush2.xpose.msra.mxu0 0.0
        %2729 = vmatprep.subr.mxu0 0.0
        %2730 = vmatpush2.xpose.msra.mxu0 0.0
        %2731 = vmatprep.subr.mxu0 0.0
        %2732 = vmatpush2.xpose.msra.mxu0 0.0
        %2733 = vmatprep.subr.mxu0 0.0
        %2734 = vmatpush2.xpose.msra.mxu0 0.0
        %2735 = vmatprep.subr.mxu0 0.0
        %2736 = vmatpush2.xpose.msra.mxu0 0.0
        %2737 = vmatprep.subr.mxu0 0.0
        %2738 = vmatpush2.xpose.msra.mxu0 0.0
        %2739 = vmatprep.subr.mxu0 0.0
        %2740 = vmatpush2.xpose.msra.mxu0 0.0
        %2741 = vmatprep.subr.mxu0 0.0
        %2742 = vmatpush2.xpose.msra.mxu0 0.0
        %2743 = vmatprep.mubr.f32.mxu0 0.0
        %2744 = vmatmul.mubr.f32.gmra.mxu0 %v2666
        %v2745 = vpop.f32.mrf.mxu0
        %v2746 = vadd.f32 %v2677, %v2745
        %v2747 = vpop.f32.mrf.mxu0
        %2748 = vmatprep.mubr.f32.mxu0 0.0
        %2749 = vmatmul.mubr.f32.gmra.mxu0 %v2667
        %v2750 = vpop.f32.mrf.mxu0
        %v2751 = vpop.f32.mrf.mxu0
        %2752 = vdwg.mxu0
        %v2753 = vadd.f32 %v2452, %v2746
        %2754 = vst.msk [vmem:[%s826] sm:$0xff] %vm905, %v2753
        %s2755 = sand.u32 %s525, 1
        %s2756 = scalar_lea.sflag [#allocation4], %s2755
        %s2757 = sand.u32 %s525, 1
        %s2758 = smul.addr %s2757, 8
        %s2759 = scalar_lea.vmem [#allocation5], %s2758
        // Predicated region
        $region101: #{dpt_multiview_vit_encoder.1} parent=91 // pred_check
          %p2760 = pneg %p535
        $region102: #{dpt_multiview_vit_encoder.1} parent=91 // pred_check_branch
          %2762 = sbr.rel (%p2760) target = $region104
        $region103: #{dpt_multiview_vit_encoder.1} parent=91 // pred_region
          %s2764 = ssub.s32 128, 128
          %2765 = vsyncadd %s2756, %s2764
          %s2766 = smul.addr %s39, 128
          %s2767 = scalar_lea.hbm %s18, %s2766
          %s2769 = sshll.u32 %s2759, 4
          %s2770 = int_to_ptr.vmem [resolvable:$true] %s2769
          %2772 = dma.vmem_to_hbm [thread:$0]  %s2770, 128, %s2767, %s2756
        $region104: #{dpt_multiview_vit_encoder.1} parent=91 // pred_fallthru
          _
      $region92: #{dpt_multiview_vit_encoder.1} parent=5 // pred_fallthru
        _
      %p2773 = scmp.le.s32.totalorder 2, %s30
      // Predicated region
      $region105: #{dpt_multiview_vit_encoder.1} parent=5 // pred_check
        %p2774 = pneg %p2773
      $region106: #{dpt_multiview_vit_encoder.1} parent=5 // pred_check_branch
        %2776 = sbr.rel (%p2774) target = $region108
      $region107: #{dpt_multiview_vit_encoder.1} parent=5 // pred_region
        %s2777 = ssub.s32 %s30, 2
        // Predicated region
        $region109: #{dpt_multiview_vit_encoder.1} parent=107 // pred_check
          %p2778 = pneg %p541
        $region110: #{dpt_multiview_vit_encoder.1} parent=107 // pred_check_branch
          %2780 = sbr.rel (%p2778) target = $region112
        $region111: #{dpt_multiview_vit_encoder.1} parent=107 // pred_region
          %s2781 = sand.u32 %s526, 1
          %s2782 = scalar_lea.sflag [#allocation4], %s2781
          %s2783 = sand.u32 %s526, 1
          %s2784 = smul.addr %s2783, 8
          %s2785 = scalar_lea.vmem [#allocation5], %s2784
          %2786 = dma.done %s2782, 128
        $region112: #{dpt_multiview_vit_encoder.1} parent=107 // pred_fallthru
          _
      $region108: #{dpt_multiview_vit_encoder.1} parent=5 // pred_fallthru
        _
    $region6: #{dpt_multiview_vit_encoder.1} parent=1 // loop_footer
      %s34 = sadd.s32 1, %s30
    $region7: #{dpt_multiview_vit_encoder.1} parent=1 // loop_footer_branch
      %29 = sbr.rel target = $region3
    $region8: #{dpt_multiview_vit_encoder.1} parent=1 // loop_exit
      _
    %2787 = vsyncpa [#allocation3], 1
    %s2788 = scalar_lea.sflag [#allocation3], 1
    %2789 = vsyncpa %s2788, 1
    %2790 = vsyncpa [#allocation4], 1
    %s2791 = scalar_lea.sflag [#allocation4], 1
    %2792 = vsyncpa %s2791, 1

</llo_original>
